<compile_context>
chip_gen: v7x
topology: tpu7x:2x2x1
jax: 0.10.0
libtpu: 0.0.40
codegen_flags: <defaults>
</compile_context>

<pallas_src>
import jax
import jax.numpy as jnp
from jax.experimental import pallas as pl
from jax.experimental.pallas import tpu as pltpu


def _round_up(x, m):
    return (x + m - 1) // m * m


# ---------------------------------------------------------------------------
# Pallas kernels
# ---------------------------------------------------------------------------
def _conv_relu_pool_kernel(x_ref, w_ref, b_ref, o_ref):
    # x_ref: (4, TN, K)  bf16 im2col rows, leading axis = position in 2x2 pool window
    # w_ref: (K, Cout)   bf16 flattened conv weights (resident across grid)
    # b_ref: (1, Cout)   f32 bias (resident)
    # o_ref: (TN, Cout)  bf16 pooled output tile
    w = w_ref[...]
    acc = jnp.dot(x_ref[0], w, preferred_element_type=jnp.float32)
    for wpos in range(1, 4):  # static unroll over the remaining pool-window positions
        acc = jnp.maximum(
            acc, jnp.dot(x_ref[wpos], w, preferred_element_type=jnp.float32))
    # bias + relu hoisted out of the pool loop (valid: same bias, relu monotonic)
    o_ref[...] = jnp.maximum(acc + b_ref[...], 0.0).astype(o_ref.dtype)


def _mlp_kernel(x_ref, w1_ref, b1_ref, w2_ref, b2_ref, o_ref):
    # x_ref: (TB, 1568) bf16, w1: (1568, 128) bf16, w2: (128, 10) bf16, biases f32
    h = jnp.dot(x_ref[...], w1_ref[...], preferred_element_type=jnp.float32)
    h = jnp.maximum(h + b1_ref[...], 0.0).astype(w2_ref.dtype)   # relu(fc1), back to bf16
    o_ref[...] = jnp.dot(h, w2_ref[...], preferred_element_type=jnp.float32) + b2_ref[...]


# ---------------------------------------------------------------------------
# Wrappers (glue in plain JAX, hot path in Pallas)
# ---------------------------------------------------------------------------
def _im2col_pool_rows(x):
    """x: (B, H, W, C), H, W even -> (4, B*(H//2)*(W//2), 9*C), pool-grouped rows."""
    B, H, W, C = x.shape
    xp = jnp.pad(x, ((0, 0), (1, 1), (1, 1), (0, 0)))
    taps = [xp[:, dy:dy + H, dx:dx + W, :] for dy in range(3) for dx in range(3)]
    patches = jnp.stack(taps, axis=3).reshape(B, H, W, 9 * C)   # order (dy, dx, ci)
    K = 9 * C
    pr = patches.reshape(B, H // 2, 2, W // 2, 2, K).transpose(2, 4, 0, 1, 3, 5)
    return pr.reshape(4, B * (H // 2) * (W // 2), K)


def conv_relu_pool(rows, w_mat, b_mat, *, tn_cap=2048):
    # rows: (4, N, K) bf16; w_mat: (K, Cout) bf16; b_mat: (1, Cout) f32
    _, n, k = rows.shape
    cout = w_mat.shape[-1]
    rows = rows.astype(jnp.bfloat16)

    tn = min(tn_cap, _round_up(n, 16))          # multiple of 16 -> clean bf16 tiling
    n_pad = _round_up(n, tn)
    if n_pad != n:
        rows = jnp.pad(rows, ((0, 0), (0, n_pad - n), (0, 0)))

    out = pl.pallas_call(
        _conv_relu_pool_kernel,
        out_shape=jax.ShapeDtypeStruct((n_pad, cout), jnp.bfloat16),
        grid_spec=pltpu.PrefetchScalarGridSpec(
            num_scalar_prefetch=0,
            grid=(n_pad // tn,),
            in_specs=[
                pl.BlockSpec((4, tn, k), lambda i: (0, i, 0)),   # streamed rows tile
                pl.BlockSpec((k, cout), lambda i: (0, 0)),       # resident weights
                pl.BlockSpec((1, cout), lambda i: (0, 0)),       # resident bias
            ],
            out_specs=pl.BlockSpec((tn, cout), lambda i: (i, 0)),
        ),
        compiler_params=pltpu.CompilerParams(
            dimension_semantics=("parallel",),
            vmem_limit_bytes=32 * 1024 * 1024,
        ),
    )(rows, w_mat, b_mat)
    return out[:n]


def mlp_head(x, w1, b1, w2, b2, *, tb_cap=512):
    # x: (B, 1568) bf16; w1: (1568, 128) bf16; w2: (128, 10) bf16; biases f32
    b_dim, d = x.shape
    n_out = w2.shape[-1]
    x = x.astype(jnp.bfloat16)

    tb = min(tb_cap, _round_up(b_dim, 16))
    b_pad = _round_up(b_dim, tb)
    if b_pad != b_dim:
        x = jnp.pad(x, ((0, b_pad - b_dim), (0, 0)))

    out = pl.pallas_call(
        _mlp_kernel,
        out_shape=jax.ShapeDtypeStruct((b_pad, n_out), jnp.float32),
        grid_spec=pltpu.PrefetchScalarGridSpec(
            num_scalar_prefetch=0,
            grid=(b_pad // tb,),
            in_specs=[
                pl.BlockSpec((tb, d), lambda i: (i, 0)),          # streamed activations
                pl.BlockSpec(w1.shape, lambda i: (0, 0)),         # resident fc1 weights
                pl.BlockSpec(b1.shape, lambda i: (0, 0)),
                pl.BlockSpec(w2.shape, lambda i: (0, 0)),         # resident fc2 weights
                pl.BlockSpec(b2.shape, lambda i: (0, 0)),
            ],
            out_specs=pl.BlockSpec((tb, n_out), lambda i: (i, 0)),
        ),
        compiler_params=pltpu.CompilerParams(
            dimension_semantics=("parallel",),
            vmem_limit_bytes=32 * 1024 * 1024,
        ),
    )(x, w1, b1, w2, b2)
    return out[:b_dim]


def prepare_params(p):
    """One-time param prep: flatten conv weights, cast matmul operands to bf16,
    and fold PyTorch's (C,H,W) flatten order into fc1_w's row order (-> HWC)."""
    perm = jnp.arange(32 * 7 * 7).reshape(32, 7, 7).transpose(1, 2, 0).reshape(-1)
    return dict(
        conv1_w=p["conv1_w"].reshape(-1, 16).astype(jnp.bfloat16),   # (9, 16)
        conv1_b=p["conv1_b"].astype(jnp.float32).reshape(1, -1),
        conv2_w=p["conv2_w"].reshape(-1, 32).astype(jnp.bfloat16),   # (144, 32)
        conv2_b=p["conv2_b"].astype(jnp.float32).reshape(1, -1),
        fc1_w=p["fc1_w"][perm].astype(jnp.bfloat16),                 # CHW -> HWC rows
        fc1_b=p["fc1_b"].astype(jnp.float32).reshape(1, -1),
        fc2_w=p["fc2_w"].astype(jnp.bfloat16),
        fc2_b=p["fc2_b"].astype(jnp.float32).reshape(1, -1),
    )


def light_cnn_forward(x_nchw, pp):
    B = x_nchw.shape[0]
    x = jnp.transpose(x_nchw, (0, 2, 3, 1)).astype(jnp.bfloat16)     # NCHW -> NHWC

    rows1 = _im2col_pool_rows(x)                                      # (4, B*196, 9)
    h1 = conv_relu_pool(rows1, pp["conv1_w"], pp["conv1_b"]).reshape(B, 14, 14, 16)

    rows2 = _im2col_pool_rows(h1)                                     # (4, B*49, 144)
    h2 = conv_relu_pool(rows2, pp["conv2_w"], pp["conv2_b"]).reshape(B, 7, 7, 32)

    # fc1_w rows were pre-permuted to HWC order, so the NHWC activation flattens
    # directly (no per-step transpose / extra HBM round trip of h2).
    flat = h2.reshape(B, 32 * 7 * 7)
    return mlp_head(flat, pp["fc1_w"], pp["fc1_b"], pp["fc2_w"], pp["fc2_b"])


# ---------------------------------------------------------------------------
# Deterministic parameter init (shapes from LightCNN.__init__)
# ---------------------------------------------------------------------------
def init_params(key):
    ks = jax.random.split(key, 8)

    def w(k, shape, scale):
        return jax.random.normal(k, shape, jnp.float32) * scale

    return dict(
        conv1_w=w(ks[0], (3, 3, 1, 16), 0.1),      # Conv2d(1, 16, 3, padding=1)
        conv1_b=w(ks[1], (16,), 0.1),
        conv2_w=w(ks[2], (3, 3, 16, 32), 0.05),    # Conv2d(16, 32, 3, padding=1)
        conv2_b=w(ks[3], (32,), 0.05),
        fc1_w=w(ks[4], (32 * 7 * 7, 128), 0.02),   # Linear(1568, 128), rows in (C,H,W) order
        fc1_b=w(ks[5], (128,), 0.02),
        fc2_w=w(ks[6], (128, 10), 0.05),           # Linear(128, 10)
        fc2_b=w(ks[7], (10,), 0.05),
    )


# ---------------------------------------------------------------------------
# Pure-JAX reference for verification (PyTorch semantics, f32 HIGHEST)
# ---------------------------------------------------------------------------
def reference_forward(x_nchw, p):
    def conv(x, w, b):
        wt = jnp.transpose(w, (3, 2, 0, 1))  # (kh,kw,Cin,Cout) -> OIHW
        y = jax.lax.conv_general_dilated(
            x, wt, (1, 1), ((1, 1), (1, 1)),
            dimension_numbers=("NCHW", "OIHW", "NCHW"),
            precision=jax.lax.Precision.HIGHEST)
        return y + b.reshape(1, -1, 1, 1)

    def pool(x):
        return jax.lax.reduce_window(x, -jnp.inf, jax.lax.max,
                                     (1, 1, 2, 2), (1, 1, 2, 2), "VALID")

    h = pool(jax.nn.relu(conv(x_nchw, p["conv1_w"], p["conv1_b"])))
    h = pool(jax.nn.relu(conv(h, p["conv2_w"], p["conv2_b"])))
    h = h.reshape(x_nchw.shape[0], -1)                     # (C,H,W) flatten order
    h = jax.nn.relu(jnp.dot(h, p["fc1_w"], precision=jax.lax.Precision.HIGHEST) + p["fc1_b"])
    return jnp.dot(h, p["fc2_w"], precision=jax.lax.Precision.HIGHEST) + p["fc2_b"]


if __name__ == "__main__":
    key = jax.random.PRNGKey(0)
    k_x, k_p = jax.random.split(key)
    x = jax.random.normal(k_x, (2, 1, 28, 28), jnp.float32)   # NCHW like PyTorch
    params = init_params(k_p)
    pp = prepare_params(params)

    fwd = jax.jit(light_cnn_forward)
    out = jax.block_until_ready(fwd(x, pp))

    assert out.shape == (2, 10), out.shape
    ref = reference_forward(x, params)
    assert jnp.allclose(out, ref, rtol=1e-2, atol=1e-2), "Pallas output mismatch vs reference"

    print("KERNEL_OK")
</pallas_src>

<mosaic_0001>
module attributes {stable_mosaic.version = 11 : i64} {
  func.func @_conv_relu_pool_kernel(%arg0: i32, %arg1: memref<4x400x9xbf16, #tpu.memory_space<vmem>>, %arg2: memref<9x16xbf16, #tpu.memory_space<vmem>>, %arg3: memref<1x16xf32, #tpu.memory_space<vmem>>, %arg4: memref<400x16xbf16, #tpu.memory_space<vmem>>) attributes {dimension_semantics = [#tpu.dimension_semantics<parallel>], iteration_bounds = array<i64: 1>, scalar_prefetch = 0 : i64, scratch_operands = 0 : i64, tpu.core_type = #tpu.core_type<tc>, window_params = [{transform_indices = @transform_0, window_bounds = array<i64: 4, 400, 9>}, {pipeline_mode = #tpu.pipeline_mode<synchronous>, transform_indices = @transform_1, window_bounds = array<i64: 9, 16>}, {pipeline_mode = #tpu.pipeline_mode<synchronous>, transform_indices = @transform_2, window_bounds = array<i64: 1, 16>}, {transform_indices = @transform_3, window_bounds = array<i64: 400, 16>}]} {
    %c0 = arith.constant 0 : index
    %c0_0 = arith.constant 0 : index
    %0 = vector.load %arg2[%c0, %c0_0] : memref<9x16xbf16, #tpu.memory_space<vmem>>, vector<9x16xbf16>
    %c0_1 = arith.constant 0 : index
    %c0_2 = arith.constant 0 : index
    %c0_3 = arith.constant 0 : index
    %1 = vector.load %arg1[%c0_1, %c0_2, %c0_3] : memref<4x400x9xbf16, #tpu.memory_space<vmem>>, vector<1x400x9xbf16>
    %2 = vector.shape_cast %1 : vector<1x400x9xbf16> to vector<400x9xbf16>
    %cst = arith.constant dense<0.000000e+00> : vector<400x16xf32>
    %3 = tpu.matmul %2, %0, %cst {dimension_numbers = #tpu.dot_dimension_numbers<[1], [0], [0], [1], [0, 0, 1, 1], [], []>} : vector<400x9xbf16>, vector<9x16xbf16>, vector<400x16xf32> -> vector<400x16xf32>
    %c1 = arith.constant 1 : index
    %c0_4 = arith.constant 0 : index
    %c0_5 = arith.constant 0 : index
    %4 = vector.load %arg1[%c1, %c0_4, %c0_5] : memref<4x400x9xbf16, #tpu.memory_space<vmem>>, vector<1x400x9xbf16>
    %5 = vector.shape_cast %4 : vector<1x400x9xbf16> to vector<400x9xbf16>
    %cst_6 = arith.constant dense<0.000000e+00> : vector<400x16xf32>
    %6 = tpu.matmul %5, %0, %cst_6 {dimension_numbers = #tpu.dot_dimension_numbers<[1], [0], [0], [1], [0, 0, 1, 1], [], []>} : vector<400x9xbf16>, vector<9x16xbf16>, vector<400x16xf32> -> vector<400x16xf32>
    %7 = arith.maximumf %3, %6 : vector<400x16xf32>
    %c2 = arith.constant 2 : index
    %c0_7 = arith.constant 0 : index
    %c0_8 = arith.constant 0 : index
    %8 = vector.load %arg1[%c2, %c0_7, %c0_8] : memref<4x400x9xbf16, #tpu.memory_space<vmem>>, vector<1x400x9xbf16>
    %9 = vector.shape_cast %8 : vector<1x400x9xbf16> to vector<400x9xbf16>
    %cst_9 = arith.constant dense<0.000000e+00> : vector<400x16xf32>
    %10 = tpu.matmul %9, %0, %cst_9 {dimension_numbers = #tpu.dot_dimension_numbers<[1], [0], [0], [1], [0, 0, 1, 1], [], []>} : vector<400x9xbf16>, vector<9x16xbf16>, vector<400x16xf32> -> vector<400x16xf32>
    %11 = arith.maximumf %7, %10 : vector<400x16xf32>
    %c3 = arith.constant 3 : index
    %c0_10 = arith.constant 0 : index
    %c0_11 = arith.constant 0 : index
    %12 = vector.load %arg1[%c3, %c0_10, %c0_11] : memref<4x400x9xbf16, #tpu.memory_space<vmem>>, vector<1x400x9xbf16>
    %13 = vector.shape_cast %12 : vector<1x400x9xbf16> to vector<400x9xbf16>
    %cst_12 = arith.constant dense<0.000000e+00> : vector<400x16xf32>
    %14 = tpu.matmul %13, %0, %cst_12 {dimension_numbers = #tpu.dot_dimension_numbers<[1], [0], [0], [1], [0, 0, 1, 1], [], []>} : vector<400x9xbf16>, vector<9x16xbf16>, vector<400x16xf32> -> vector<400x16xf32>
    %15 = arith.maximumf %11, %14 : vector<400x16xf32>
    %c0_13 = arith.constant 0 : index
    %c0_14 = arith.constant 0 : index
    %16 = vector.load %arg3[%c0_13, %c0_14] : memref<1x16xf32, #tpu.memory_space<vmem>>, vector<1x16xf32>
    %17 = vector.broadcast %16 : vector<1x16xf32> to vector<400x16xf32>
    %18 = arith.addf %15, %17 : vector<400x16xf32>
    %cst_15 = arith.constant 0.000000e+00 : f32
    %19 = vector.broadcast %cst_15 : f32 to vector<400x16xf32>
    %20 = arith.maximumf %18, %19 : vector<400x16xf32>
    %21 = arith.truncf %20 : vector<400x16xf32> to vector<400x16xbf16>
    %c0_16 = arith.constant 0 : index
    %c0_17 = arith.constant 0 : index
    %22 = vector.load %arg4[%c0_16, %c0_17] : memref<400x16xbf16, #tpu.memory_space<vmem>>, vector<400x16xbf16>
    tpu.vector_store %arg4[%c0_16, %c0_17], %21 {strides = array<i32>} : memref<400x16xbf16, #tpu.memory_space<vmem>>, vector<400x16xbf16>,
    return
  }
  func.func @transform_0(%arg0: i32) -> (i32, i32, i32) {
    %c0_i32 = arith.constant 0 : i32
    %c0_i32_0 = arith.constant 0 : i32
    %c0_i32_1 = arith.constant 0 : i32
    return %c0_i32, %arg0, %c0_i32_0 : i32, i32, i32
  }
  func.func @transform_1(%arg0: i32) -> (i32, i32) {
    %c0_i32 = arith.constant 0 : i32
    %c0_i32_0 = arith.constant 0 : i32
    %c0_i32_1 = arith.constant 0 : i32
    return %c0_i32, %c0_i32_0 : i32, i32
  }
  func.func @transform_2(%arg0: i32) -> (i32, i32) {
    %c0_i32 = arith.constant 0 : i32
    %c0_i32_0 = arith.constant 0 : i32
    %c0_i32_1 = arith.constant 0 : i32
    return %c0_i32, %c0_i32_0 : i32, i32
  }
  func.func @transform_3(%arg0: i32) -> (i32, i32) {
    %c0_i32 = arith.constant 0 : i32
    %c0_i32_0 = arith.constant 0 : i32
    return %arg0, %c0_i32 : i32, i32
  }
}

module attributes {stable_mosaic.version = 11 : i64} {
  func.func @_conv_relu_pool_kernel(%arg0: i32, %arg1: memref<4x112x144xbf16, #tpu.memory_space<vmem>>, %arg2: memref<144x32xbf16, #tpu.memory_space<vmem>>, %arg3: memref<1x32xf32, #tpu.memory_space<vmem>>, %arg4: memref<112x32xbf16, #tpu.memory_space<vmem>>) attributes {dimension_semantics = [#tpu.dimension_semantics<parallel>], iteration_bounds = array<i64: 1>, scalar_prefetch = 0 : i64, scratch_operands = 0 : i64, tpu.core_type = #tpu.core_type<tc>, window_params = [{transform_indices = @transform_0, window_bounds = array<i64: 4, 112, 144>}, {pipeline_mode = #tpu.pipeline_mode<synchronous>, transform_indices = @transform_1, window_bounds = array<i64: 144, 32>}, {pipeline_mode = #tpu.pipeline_mode<synchronous>, transform_indices = @transform_2, window_bounds = array<i64: 1, 32>}, {transform_indices = @transform_3, window_bounds = array<i64: 112, 32>}]} {
    %c0 = arith.constant 0 : index
    %c0_0 = arith.constant 0 : index
    %0 = vector.load %arg2[%c0, %c0_0] : memref<144x32xbf16, #tpu.memory_space<vmem>>, vector<144x32xbf16>
    %c0_1 = arith.constant 0 : index
    %c0_2 = arith.constant 0 : index
    %c0_3 = arith.constant 0 : index
    %1 = vector.load %arg1[%c0_1, %c0_2, %c0_3] : memref<4x112x144xbf16, #tpu.memory_space<vmem>>, vector<1x112x144xbf16>
    %2 = vector.shape_cast %1 : vector<1x112x144xbf16> to vector<112x144xbf16>
    %cst = arith.constant dense<0.000000e+00> : vector<112x32xf32>
    %3 = tpu.matmul %2, %0, %cst {dimension_numbers = #tpu.dot_dimension_numbers<[1], [0], [0], [1], [0, 0, 1, 1], [], []>} : vector<112x144xbf16>, vector<144x32xbf16>, vector<112x32xf32> -> vector<112x32xf32>
    %c1 = arith.constant 1 : index
    %c0_4 = arith.constant 0 : index
    %c0_5 = arith.constant 0 : index
    %4 = vector.load %arg1[%c1, %c0_4, %c0_5] : memref<4x112x144xbf16, #tpu.memory_space<vmem>>, vector<1x112x144xbf16>
    %5 = vector.shape_cast %4 : vector<1x112x144xbf16> to vector<112x144xbf16>
    %cst_6 = arith.constant dense<0.000000e+00> : vector<112x32xf32>
    %6 = tpu.matmul %5, %0, %cst_6 {dimension_numbers = #tpu.dot_dimension_numbers<[1], [0], [0], [1], [0, 0, 1, 1], [], []>} : vector<112x144xbf16>, vector<144x32xbf16>, vector<112x32xf32> -> vector<112x32xf32>
    %7 = arith.maximumf %3, %6 : vector<112x32xf32>
    %c2 = arith.constant 2 : index
    %c0_7 = arith.constant 0 : index
    %c0_8 = arith.constant 0 : index
    %8 = vector.load %arg1[%c2, %c0_7, %c0_8] : memref<4x112x144xbf16, #tpu.memory_space<vmem>>, vector<1x112x144xbf16>
    %9 = vector.shape_cast %8 : vector<1x112x144xbf16> to vector<112x144xbf16>
    %cst_9 = arith.constant dense<0.000000e+00> : vector<112x32xf32>
    %10 = tpu.matmul %9, %0, %cst_9 {dimension_numbers = #tpu.dot_dimension_numbers<[1], [0], [0], [1], [0, 0, 1, 1], [], []>} : vector<112x144xbf16>, vector<144x32xbf16>, vector<112x32xf32> -> vector<112x32xf32>
    %11 = arith.maximumf %7, %10 : vector<112x32xf32>
    %c3 = arith.constant 3 : index
    %c0_10 = arith.constant 0 : index
    %c0_11 = arith.constant 0 : index
    %12 = vector.load %arg1[%c3, %c0_10, %c0_11] : memref<4x112x144xbf16, #tpu.memory_space<vmem>>, vector<1x112x144xbf16>
    %13 = vector.shape_cast %12 : vector<1x112x144xbf16> to vector<112x144xbf16>
    %cst_12 = arith.constant dense<0.000000e+00> : vector<112x32xf32>
    %14 = tpu.matmul %13, %0, %cst_12 {dimension_numbers = #tpu.dot_dimension_numbers<[1], [0], [0], [1], [0, 0, 1, 1], [], []>} : vector<112x144xbf16>, vector<144x32xbf16>, vector<112x32xf32> -> vector<112x32xf32>
    %15 = arith.maximumf %11, %14 : vector<112x32xf32>
    %c0_13 = arith.constant 0 : index
    %c0_14 = arith.constant 0 : index
    %16 = vector.load %arg3[%c0_13, %c0_14] : memref<1x32xf32, #tpu.memory_space<vmem>>, vector<1x32xf32>
    %17 = vector.broadcast %16 : vector<1x32xf32> to vector<112x32xf32>
    %18 = arith.addf %15, %17 : vector<112x32xf32>
    %cst_15 = arith.constant 0.000000e+00 : f32
    %19 = vector.broadcast %cst_15 : f32 to vector<112x32xf32>
    %20 = arith.maximumf %18, %19 : vector<112x32xf32>
    %21 = arith.truncf %20 : vector<112x32xf32> to vector<112x32xbf16>
    %c0_16 = arith.constant 0 : index
    %c0_17 = arith.constant 0 : index
    %22 = vector.load %arg4[%c0_16, %c0_17] : memref<112x32xbf16, #tpu.memory_space<vmem>>, vector<112x32xbf16>
    tpu.vector_store %arg4[%c0_16, %c0_17], %21 {strides = array<i32>} : memref<112x32xbf16, #tpu.memory_space<vmem>>, vector<112x32xbf16>,
    return
  }
  func.func @transform_0(%arg0: i32) -> (i32, i32, i32) {
    %c0_i32 = arith.constant 0 : i32
    %c0_i32_0 = arith.constant 0 : i32
    %c0_i32_1 = arith.constant 0 : i32
    return %c0_i32, %arg0, %c0_i32_0 : i32, i32, i32
  }
  func.func @transform_1(%arg0: i32) -> (i32, i32) {
    %c0_i32 = arith.constant 0 : i32
    %c0_i32_0 = arith.constant 0 : i32
    %c0_i32_1 = arith.constant 0 : i32
    return %c0_i32, %c0_i32_0 : i32, i32
  }
  func.func @transform_2(%arg0: i32) -> (i32, i32) {
    %c0_i32 = arith.constant 0 : i32
    %c0_i32_0 = arith.constant 0 : i32
    %c0_i32_1 = arith.constant 0 : i32
    return %c0_i32, %c0_i32_0 : i32, i32
  }
  func.func @transform_3(%arg0: i32) -> (i32, i32) {
    %c0_i32 = arith.constant 0 : i32
    %c0_i32_0 = arith.constant 0 : i32
    return %arg0, %c0_i32 : i32, i32
  }
}

module attributes {stable_mosaic.version = 11 : i64} {
  func.func @_mlp_kernel(%arg0: i32, %arg1: memref<16x1568xbf16, #tpu.memory_space<vmem>>, %arg2: memref<1568x128xbf16, #tpu.memory_space<vmem>>, %arg3: memref<1x128xf32, #tpu.memory_space<vmem>>, %arg4: memref<128x10xbf16, #tpu.memory_space<vmem>>, %arg5: memref<1x10xf32, #tpu.memory_space<vmem>>, %arg6: memref<16x10xf32, #tpu.memory_space<vmem>>) attributes {dimension_semantics = [#tpu.dimension_semantics<parallel>], iteration_bounds = array<i64: 1>, scalar_prefetch = 0 : i64, scratch_operands = 0 : i64, tpu.core_type = #tpu.core_type<tc>, window_params = [{transform_indices = @transform_0, window_bounds = array<i64: 16, 1568>}, {pipeline_mode = #tpu.pipeline_mode<synchronous>, transform_indices = @transform_1, window_bounds = array<i64: 1568, 128>}, {pipeline_mode = #tpu.pipeline_mode<synchronous>, transform_indices = @transform_2, window_bounds = array<i64: 1, 128>}, {pipeline_mode = #tpu.pipeline_mode<synchronous>, transform_indices = @transform_3, window_bounds = array<i64: 128, 10>}, {pipeline_mode = #tpu.pipeline_mode<synchronous>, transform_indices = @transform_4, window_bounds = array<i64: 1, 10>}, {transform_indices = @transform_5, window_bounds = array<i64: 16, 10>}]} {
    %c0 = arith.constant 0 : index
    %c0_0 = arith.constant 0 : index
    %0 = vector.load %arg1[%c0, %c0_0] : memref<16x1568xbf16, #tpu.memory_space<vmem>>, vector<16x1568xbf16>
    %c0_1 = arith.constant 0 : index
    %c0_2 = arith.constant 0 : index
    %1 = vector.load %arg2[%c0_1, %c0_2] : memref<1568x128xbf16, #tpu.memory_space<vmem>>, vector<1568x128xbf16>
    %cst = arith.constant dense<0.000000e+00> : vector<16x128xf32>
    %2 = tpu.matmul %0, %1, %cst {dimension_numbers = #tpu.dot_dimension_numbers<[1], [0], [0], [1], [0, 0, 1, 1], [], []>} : vector<16x1568xbf16>, vector<1568x128xbf16>, vector<16x128xf32> -> vector<16x128xf32>
    %c0_3 = arith.constant 0 : index
    %c0_4 = arith.constant 0 : index
    %3 = vector.load %arg3[%c0_3, %c0_4] : memref<1x128xf32, #tpu.memory_space<vmem>>, vector<1x128xf32>
    %4 = vector.broadcast %3 : vector<1x128xf32> to vector<16x128xf32>
    %5 = arith.addf %2, %4 : vector<16x128xf32>
    %cst_5 = arith.constant 0.000000e+00 : f32
    %6 = vector.broadcast %cst_5 : f32 to vector<16x128xf32>
    %7 = arith.maximumf %5, %6 : vector<16x128xf32>
    %8 = arith.truncf %7 : vector<16x128xf32> to vector<16x128xbf16>
    %c0_6 = arith.constant 0 : index
    %c0_7 = arith.constant 0 : index
    %9 = vector.load %arg4[%c0_6, %c0_7] : memref<128x10xbf16, #tpu.memory_space<vmem>>, vector<128x10xbf16>
    %cst_8 = arith.constant dense<0.000000e+00> : vector<16x10xf32>
    %10 = tpu.matmul %8, %9, %cst_8 {dimension_numbers = #tpu.dot_dimension_numbers<[1], [0], [0], [1], [0, 0, 1, 1], [], []>} : vector<16x128xbf16>, vector<128x10xbf16>, vector<16x10xf32> -> vector<16x10xf32>
    %c0_9 = arith.constant 0 : index
    %c0_10 = arith.constant 0 : index
    %11 = vector.load %arg5[%c0_9, %c0_10] : memref<1x10xf32, #tpu.memory_space<vmem>>, vector<1x10xf32>
    %12 = vector.broadcast %11 : vector<1x10xf32> to vector<16x10xf32>
    %13 = arith.addf %10, %12 : vector<16x10xf32>
    %c0_11 = arith.constant 0 : index
    %c0_12 = arith.constant 0 : index
    %14 = vector.load %arg6[%c0_11, %c0_12] : memref<16x10xf32, #tpu.memory_space<vmem>>, vector<16x10xf32>
    tpu.vector_store %arg6[%c0_11, %c0_12], %13 {strides = array<i32>} : memref<16x10xf32, #tpu.memory_space<vmem>>, vector<16x10xf32>,
    return
  }
  func.func @transform_0(%arg0: i32) -> (i32, i32) {
    %c0_i32 = arith.constant 0 : i32
    %c0_i32_0 = arith.constant 0 : i32
    return %arg0, %c0_i32 : i32, i32
  }
  func.func @transform_1(%arg0: i32) -> (i32, i32) {
    %c0_i32 = arith.constant 0 : i32
    %c0_i32_0 = arith.constant 0 : i32
    %c0_i32_1 = arith.constant 0 : i32
    return %c0_i32, %c0_i32_0 : i32, i32
  }
  func.func @transform_2(%arg0: i32) -> (i32, i32) {
    %c0_i32 = arith.constant 0 : i32
    %c0_i32_0 = arith.constant 0 : i32
    %c0_i32_1 = arith.constant 0 : i32
    return %c0_i32, %c0_i32_0 : i32, i32
  }
  func.func @transform_3(%arg0: i32) -> (i32, i32) {
    %c0_i32 = arith.constant 0 : i32
    %c0_i32_0 = arith.constant 0 : i32
    %c0_i32_1 = arith.constant 0 : i32
    return %c0_i32, %c0_i32_0 : i32, i32
  }
  func.func @transform_4(%arg0: i32) -> (i32, i32) {
    %c0_i32 = arith.constant 0 : i32
    %c0_i32_0 = arith.constant 0 : i32
    %c0_i32_1 = arith.constant 0 : i32
    return %c0_i32, %c0_i32_0 : i32, i32
  }
  func.func @transform_5(%arg0: i32) -> (i32, i32) {
    %c0_i32 = arith.constant 0 : i32
    %c0_i32_0 = arith.constant 0 : i32
    return %arg0, %c0_i32 : i32, i32
  }
}

</mosaic_0001>

<llo_original>
// kernel: light_cnn_forward.3
$region0: #{light_cnn_forward.3}
  #allocation0 [shape = 'u32[]', space=smem, size = 0x4, offset = 0x4, fixed_abs, tag = 'smem constant byte address 0x4 - core index']
  #allocation1 [shape = 'u32[144,128]{1,0:T(1,128)}', space=vmem, size = 0x12000, scoped, tag = 'internal scratch']
  %s0 = inlined_call_operand.vmem [shape: bf16[4,400,9], index: 0, kind: input, shape index: {}]
  %s1 = inlined_call_operand.vmem [shape: bf16[9,16], index: 1, kind: input, shape index: {}]
  %s2 = inlined_call_operand.vmem [shape: f32[1,16], index: 2, kind: input, shape index: {}]
  %s3 = inlined_call_operand.vmem [shape: bf16[400,16], index: 3, kind: output, shape index: {}]
  %s4 = sld [smem:[#allocation0]]
  $region22: #{light_cnn_forward.3} parent=0
    _
  %s6 = ssub.s32 1, %s4
  %s7 = scalar_select 0, %s6, %s4
  // Predicated region
  $region2: #{light_cnn_forward.3} parent=0 // pred_check
    _
  $region3: #{light_cnn_forward.3} parent=0 // pred_check_branch
    %9 = sbr.rel (0) target = $region5
  $region4: #{light_cnn_forward.3} parent=0 // pred_region
    _
  $region5: #{light_cnn_forward.3} parent=0 // pred_fallthru
    _
  // Predicated region
  $region6: #{light_cnn_forward.3} parent=0 // pred_check
    _
  $region7: #{light_cnn_forward.3} parent=0 // pred_check_branch
    %11 = sbr.rel (0) target = $region9
  $region8: #{light_cnn_forward.3} parent=0 // pred_region
    _
  $region9: #{light_cnn_forward.3} parent=0 // pred_fallthru
    _
  // Predicated region
  $region10: #{light_cnn_forward.3} parent=0 // pred_check
    _
  $region11: #{light_cnn_forward.3} parent=0 // pred_check_branch
    %13 = sbr.rel (0) target = $region13
  $region12: #{light_cnn_forward.3} parent=0 // pred_region
    _
  $region13: #{light_cnn_forward.3} parent=0 // pred_fallthru
    _
  %v15 = vld [vmem:[%s1] sm:$0xf]
  %v16 = vld [vmem:[%s1 + $0x4] sm:$0x1]
  %v17 = vld [vmem:[%s0] sm:$0xf]
  %v18 = vld [vmem:[%s0 + $0x4] sm:$0xf]
  %v19 = vld [vmem:[%s0 + $0x8] sm:$0xf]
  %v20 = vld [vmem:[%s0 + $0xc] sm:$0xf]
  %v21 = vld [vmem:[%s0 + $0x10] sm:$0xf]
  %v22 = vld [vmem:[%s0 + $0x14] sm:$0xf]
  %v23 = vld [vmem:[%s0 + $0x18] sm:$0xf]
  %v24 = vld [vmem:[%s0 + $0x1c] sm:$0xf]
  %v25 = vld [vmem:[%s0 + $0x20] sm:$0xf]
  %v26 = vld [vmem:[%s0 + $0x24] sm:$0xf]
  %v27 = vld [vmem:[%s0 + $0x28] sm:$0xf]
  %v28 = vld [vmem:[%s0 + $0x2c] sm:$0xf]
  %v29 = vld [vmem:[%s0 + $0x30] sm:$0xf]
  %v30 = vld [vmem:[%s0 + $0x34] sm:$0xf]
  %v31 = vld [vmem:[%s0 + $0x38] sm:$0xf]
  %v32 = vld [vmem:[%s0 + $0x3c] sm:$0xf]
  %v33 = vld [vmem:[%s0 + $0x40] sm:$0xf]
  %v34 = vld [vmem:[%s0 + $0x44] sm:$0xf]
  %v35 = vld [vmem:[%s0 + $0x48] sm:$0xf]
  %v36 = vld [vmem:[%s0 + $0x4c] sm:$0xf]
  %v37 = vld [vmem:[%s0 + $0x50] sm:$0xf]
  %v38 = vld [vmem:[%s0 + $0x54] sm:$0xf]
  %v39 = vld [vmem:[%s0 + $0x58] sm:$0xf]
  %v40 = vld [vmem:[%s0 + $0x5c] sm:$0xf]
  %v41 = vld [vmem:[%s0 + $0x60] sm:$0xf]
  %v42 = vld [vmem:[%s0 + $0x64] sm:$0xf]
  %v43 = vld [vmem:[%s0 + $0x68] sm:$0xf]
  %v44 = vld [vmem:[%s0 + $0x6c] sm:$0xf]
  %v45 = vld [vmem:[%s0 + $0x70] sm:$0xf]
  %v46 = vld [vmem:[%s0 + $0x74] sm:$0xf]
  %v47 = vld [vmem:[%s0 + $0x78] sm:$0xf]
  %v48 = vld [vmem:[%s0 + $0x7c] sm:$0xf]
  %v49 = vld [vmem:[%s0 + $0x80] sm:$0xf]
  %v50 = vld [vmem:[%s0 + $0x84] sm:$0xf]
  %v51 = vld [vmem:[%s0 + $0x88] sm:$0xf]
  %v52 = vld [vmem:[%s0 + $0x8c] sm:$0xf]
  %v53 = vld [vmem:[%s0 + $0x90] sm:$0xf]
  %v54 = vld [vmem:[%s0 + $0x94] sm:$0xf]
  %v55 = vld [vmem:[%s0 + $0x98] sm:$0xf]
  %v56 = vld [vmem:[%s0 + $0x9c] sm:$0xf]
  %v57 = vld [vmem:[%s0 + $0xa0] sm:$0xf]
  %v58 = vld [vmem:[%s0 + $0xa4] sm:$0xf]
  %v59 = vld [vmem:[%s0 + $0xa8] sm:$0xf]
  %v60 = vld [vmem:[%s0 + $0xac] sm:$0xf]
  %v61 = vld [vmem:[%s0 + $0xb0] sm:$0xf]
  %v62 = vld [vmem:[%s0 + $0xb4] sm:$0xf]
  %v63 = vld [vmem:[%s0 + $0xb8] sm:$0xf]
  %v64 = vld [vmem:[%s0 + $0xbc] sm:$0xf]
  %v65 = vld [vmem:[%s0 + $0xc0] sm:$0xf]
  %v66 = vld [vmem:[%s0 + $0xc4] sm:$0xf]
  %v117 = vunpack.c.l.b16 %v17
  %v118 = vunpack.c.l.b16 %v18
  %v119 = vunpack.c.l.b16 %v19
  %v120 = vunpack.c.l.b16 %v20
  %v121 = vunpack.c.l.b16 %v21
  %v122 = vunpack.c.l.b16 %v22
  %v123 = vunpack.c.l.b16 %v23
  %v124 = vunpack.c.l.b16 %v24
  %v125 = vunpack.c.l.b16 %v25
  %v126 = vunpack.c.l.b16 %v26
  %v127 = vunpack.c.l.b16 %v27
  %v128 = vunpack.c.l.b16 %v28
  %v129 = vunpack.c.l.b16 %v29
  %v130 = vunpack.c.l.b16 %v30
  %v131 = vunpack.c.l.b16 %v31
  %v132 = vunpack.c.l.b16 %v32
  %v133 = vunpack.c.l.b16 %v33
  %v134 = vunpack.c.l.b16 %v34
  %v135 = vunpack.c.l.b16 %v35
  %v136 = vunpack.c.l.b16 %v36
  %v137 = vunpack.c.l.b16 %v37
  %v138 = vunpack.c.l.b16 %v38
  %v139 = vunpack.c.l.b16 %v39
  %v140 = vunpack.c.l.b16 %v40
  %v141 = vunpack.c.l.b16 %v41
  %v142 = vunpack.c.l.b16 %v42
  %v143 = vunpack.c.l.b16 %v43
  %v144 = vunpack.c.l.b16 %v44
  %v145 = vunpack.c.l.b16 %v45
  %v146 = vunpack.c.l.b16 %v46
  %v147 = vunpack.c.l.b16 %v47
  %v148 = vunpack.c.l.b16 %v48
  %v149 = vunpack.c.l.b16 %v49
  %v150 = vunpack.c.l.b16 %v50
  %v151 = vunpack.c.l.b16 %v51
  %v152 = vunpack.c.l.b16 %v52
  %v153 = vunpack.c.l.b16 %v53
  %v154 = vunpack.c.l.b16 %v54
  %v155 = vunpack.c.l.b16 %v55
  %v156 = vunpack.c.l.b16 %v56
  %v157 = vunpack.c.l.b16 %v57
  %v158 = vunpack.c.l.b16 %v58
  %v159 = vunpack.c.l.b16 %v59
  %v160 = vunpack.c.l.b16 %v60
  %v161 = vunpack.c.l.b16 %v61
  %v162 = vunpack.c.l.b16 %v62
  %v163 = vunpack.c.l.b16 %v63
  %v164 = vunpack.c.l.b16 %v64
  %v165 = vunpack.c.l.b16 %v65
  %v166 = vunpack.c.l.b16 %v66
  %v167 = vpack.c.b16 %v118, %v117
  %v168 = vpack.c.b16 %v120, %v119
  %v169 = vpack.c.b16 %v122, %v121
  %v170 = vpack.c.b16 %v124, %v123
  %v171 = vpack.c.b16 %v126, %v125
  %v172 = vpack.c.b16 %v128, %v127
  %v173 = vpack.c.b16 %v130, %v129
  %v174 = vpack.c.b16 %v132, %v131
  %v175 = vpack.c.b16 %v134, %v133
  %v176 = vpack.c.b16 %v136, %v135
  %v177 = vpack.c.b16 %v138, %v137
  %v178 = vpack.c.b16 %v140, %v139
  %v179 = vpack.c.b16 %v142, %v141
  %v180 = vpack.c.b16 %v144, %v143
  %v181 = vpack.c.b16 %v146, %v145
  %v182 = vpack.c.b16 %v148, %v147
  %v183 = vpack.c.b16 %v150, %v149
  %v184 = vpack.c.b16 %v152, %v151
  %v185 = vpack.c.b16 %v154, %v153
  %v186 = vpack.c.b16 %v156, %v155
  %v187 = vpack.c.b16 %v158, %v157
  %v188 = vpack.c.b16 %v160, %v159
  %v189 = vpack.c.b16 %v162, %v161
  %v190 = vpack.c.b16 %v164, %v163
  %v191 = vpack.c.b16 %v166, %v165
  %v194 = vunpack.c.l.b16 %v15
  %v195 = vunpack.c.l.b16 %v16
  %v196 = vpack.c.b16 %v195, %v194
  %vm197 = vcmask 72704
  %v199 = vsel %vm197, %v167, 0
  %v202 = vsel %vm197, %v168, 0
  %v205 = vsel %vm197, %v169, 0
  %v208 = vsel %vm197, %v170, 0
  %v211 = vsel %vm197, %v171, 0
  %v214 = vsel %vm197, %v172, 0
  %v217 = vsel %vm197, %v173, 0
  %v220 = vsel %vm197, %v174, 0
  %v223 = vsel %vm197, %v175, 0
  %v226 = vsel %vm197, %v176, 0
  %v229 = vsel %vm197, %v177, 0
  %v232 = vsel %vm197, %v178, 0
  %v235 = vsel %vm197, %v179, 0
  %v238 = vsel %vm197, %v180, 0
  %v241 = vsel %vm197, %v181, 0
  %v244 = vsel %vm197, %v182, 0
  %v247 = vsel %vm197, %v183, 0
  %v250 = vsel %vm197, %v184, 0
  %v253 = vsel %vm197, %v185, 0
  %v256 = vsel %vm197, %v186, 0
  %v259 = vsel %vm197, %v187, 0
  %v262 = vsel %vm197, %v188, 0
  %v265 = vsel %vm197, %v189, 0
  %v268 = vsel %vm197, %v190, 0
  %v271 = vsel %vm197, %v191, 0
  %vm273 = vcmask 1043456
  %vm274 = vcmask 1044480
  %v275 = vsel %vm273, 4294967295, 65535
  %v276 = vsel %vm274, %v275, 0
  %v278 = vand.u32 %v196, %v276
  %280 = vmatprep.subr.bf16.mxu0 0
  %281 = vmatpush1.bf16.msra.mxu0 %v278
  %282 = vmatprep.subr.bf16.mxu0 0
  %283 = vmatpush1.bf16.msra.mxu0 0
  %284 = vmatprep.subr.bf16.mxu0 0
  %285 = vmatpush1.bf16.msra.mxu0 0
  %286 = vmatprep.subr.bf16.mxu0 0
  %287 = vmatpush1.bf16.msra.mxu0 0
  %288 = vmatprep.subr.bf16.mxu0 0
  %289 = vmatpush1.bf16.msra.mxu0 0
  %290 = vmatprep.subr.bf16.mxu0 0
  %291 = vmatpush1.bf16.msra.mxu0 0
  %292 = vmatprep.subr.bf16.mxu0 0
  %293 = vmatpush1.bf16.msra.mxu0 0
  %294 = vmatprep.subr.bf16.mxu0 0
  %295 = vmatpush1.bf16.msra.mxu0 0
  %296 = vmatprep.subr.bf16.mxu0 0
  %297 = vmatpush1.bf16.msra.mxu0 0
  %298 = vmatprep.subr.bf16.mxu0 0
  %299 = vmatpush1.bf16.msra.mxu0 0
  %300 = vmatprep.subr.bf16.mxu0 0
  %301 = vmatpush1.bf16.msra.mxu0 0
  %302 = vmatprep.subr.bf16.mxu0 0
  %303 = vmatpush1.bf16.msra.mxu0 0
  %304 = vmatprep.subr.bf16.mxu0 0
  %305 = vmatpush1.bf16.msra.mxu0 0
  %306 = vmatprep.subr.bf16.mxu0 0
  %307 = vmatpush1.bf16.msra.mxu0 0
  %308 = vmatprep.subr.bf16.mxu0 0
  %309 = vmatpush1.bf16.msra.mxu0 0
  %310 = vmatprep.subr.bf16.mxu0 0
  %311 = vmatpush1.bf16.msra.mxu0 0
  %312 = vmatprep.mubr.bf16.mxu0 0
  %313 = vmatmul.mubr.bf16.gmra.mrb[0].mxu0 %v199
  %v314 = vpop.f32.mrb[0].mxu0
  %v315 = vadd.f32 0.0, %v314
  %v316 = vpop.f32.mrb[0].mxu0
  %v317 = vpop.f32.mrb[0].mxu0
  %v318 = vadd.f32 0.0, %v317
  %v319 = vpop.f32.mrb[0].mxu0
  %320 = vmatprep.mubr.bf16.mxu0 0
  %321 = vmatmul.mubr.bf16.gmra.mrb[0].mxu0 %v202
  %v322 = vpop.f32.mrb[0].mxu0
  %v323 = vadd.f32 0.0, %v322
  %v324 = vpop.f32.mrb[0].mxu0
  %v325 = vpop.f32.mrb[0].mxu0
  %v326 = vadd.f32 0.0, %v325
  %v327 = vpop.f32.mrb[0].mxu0
  %328 = vmatprep.mubr.bf16.mxu0 0
  %329 = vmatmul.mubr.bf16.gmra.mrb[0].mxu0 %v205
  %v330 = vpop.f32.mrb[0].mxu0
  %v331 = vadd.f32 0.0, %v330
  %v332 = vpop.f32.mrb[0].mxu0
  %v333 = vpop.f32.mrb[0].mxu0
  %v334 = vadd.f32 0.0, %v333
  %v335 = vpop.f32.mrb[0].mxu0
  %336 = vmatprep.mubr.bf16.mxu0 0
  %337 = vmatmul.mubr.bf16.gmra.mrb[0].mxu0 %v208
  %v338 = vpop.f32.mrb[0].mxu0
  %v339 = vadd.f32 0.0, %v338
  %v340 = vpop.f32.mrb[0].mxu0
  %v341 = vpop.f32.mrb[0].mxu0
  %v342 = vadd.f32 0.0, %v341
  %v343 = vpop.f32.mrb[0].mxu0
  %344 = vmatprep.mubr.bf16.mxu0 0
  %345 = vmatmul.mubr.bf16.gmra.mrb[0].mxu0 %v211
  %v346 = vpop.f32.mrb[0].mxu0
  %v347 = vadd.f32 0.0, %v346
  %v348 = vpop.f32.mrb[0].mxu0
  %v349 = vpop.f32.mrb[0].mxu0
  %v350 = vadd.f32 0.0, %v349
  %v351 = vpop.f32.mrb[0].mxu0
  %352 = vmatprep.mubr.bf16.mxu0 0
  %353 = vmatmul.mubr.bf16.gmra.mrb[0].mxu0 %v214
  %v354 = vpop.f32.mrb[0].mxu0
  %v355 = vadd.f32 0.0, %v354
  %v356 = vpop.f32.mrb[0].mxu0
  %v357 = vpop.f32.mrb[0].mxu0
  %v358 = vadd.f32 0.0, %v357
  %v359 = vpop.f32.mrb[0].mxu0
  %360 = vmatprep.mubr.bf16.mxu0 0
  %361 = vmatmul.mubr.bf16.gmra.mrb[0].mxu0 %v217
  %v362 = vpop.f32.mrb[0].mxu0
  %v363 = vadd.f32 0.0, %v362
  %v364 = vpop.f32.mrb[0].mxu0
  %v365 = vpop.f32.mrb[0].mxu0
  %v366 = vadd.f32 0.0, %v365
  %v367 = vpop.f32.mrb[0].mxu0
  %368 = vmatprep.mubr.bf16.mxu0 0
  %369 = vmatmul.mubr.bf16.gmra.mrb[0].mxu0 %v220
  %v370 = vpop.f32.mrb[0].mxu0
  %v371 = vadd.f32 0.0, %v370
  %v372 = vpop.f32.mrb[0].mxu0
  %v373 = vpop.f32.mrb[0].mxu0
  %v374 = vadd.f32 0.0, %v373
  %v375 = vpop.f32.mrb[0].mxu0
  %376 = vmatprep.mubr.bf16.mxu0 0
  %377 = vmatmul.mubr.bf16.gmra.mrb[0].mxu0 %v223
  %v378 = vpop.f32.mrb[0].mxu0
  %v379 = vadd.f32 0.0, %v378
  %v380 = vpop.f32.mrb[0].mxu0
  %v381 = vpop.f32.mrb[0].mxu0
  %v382 = vadd.f32 0.0, %v381
  %v383 = vpop.f32.mrb[0].mxu0
  %384 = vmatprep.mubr.bf16.mxu0 0
  %385 = vmatmul.mubr.bf16.gmra.mrb[0].mxu0 %v226
  %v386 = vpop.f32.mrb[0].mxu0
  %v387 = vadd.f32 0.0, %v386
  %v388 = vpop.f32.mrb[0].mxu0
  %v389 = vpop.f32.mrb[0].mxu0
  %v390 = vadd.f32 0.0, %v389
  %v391 = vpop.f32.mrb[0].mxu0
  %392 = vmatprep.mubr.bf16.mxu0 0
  %393 = vmatmul.mubr.bf16.gmra.mrb[0].mxu0 %v229
  %v394 = vpop.f32.mrb[0].mxu0
  %v395 = vadd.f32 0.0, %v394
  %v396 = vpop.f32.mrb[0].mxu0
  %v397 = vpop.f32.mrb[0].mxu0
  %v398 = vadd.f32 0.0, %v397
  %v399 = vpop.f32.mrb[0].mxu0
  %400 = vmatprep.mubr.bf16.mxu0 0
  %401 = vmatmul.mubr.bf16.gmra.mrb[0].mxu0 %v232
  %v402 = vpop.f32.mrb[0].mxu0
  %v403 = vadd.f32 0.0, %v402
  %v404 = vpop.f32.mrb[0].mxu0
  %v405 = vpop.f32.mrb[0].mxu0
  %v406 = vadd.f32 0.0, %v405
  %v407 = vpop.f32.mrb[0].mxu0
  %408 = vmatprep.mubr.bf16.mxu0 0
  %409 = vmatmul.mubr.bf16.gmra.mrb[0].mxu0 %v235
  %v410 = vpop.f32.mrb[0].mxu0
  %v411 = vadd.f32 0.0, %v410
  %v412 = vpop.f32.mrb[0].mxu0
  %v413 = vpop.f32.mrb[0].mxu0
  %v414 = vadd.f32 0.0, %v413
  %v415 = vpop.f32.mrb[0].mxu0
  %416 = vmatprep.mubr.bf16.mxu0 0
  %417 = vmatmul.mubr.bf16.gmra.mrb[0].mxu0 %v238
  %v418 = vpop.f32.mrb[0].mxu0
  %v419 = vadd.f32 0.0, %v418
  %v420 = vpop.f32.mrb[0].mxu0
  %v421 = vpop.f32.mrb[0].mxu0
  %v422 = vadd.f32 0.0, %v421
  %v423 = vpop.f32.mrb[0].mxu0
  %424 = vmatprep.mubr.bf16.mxu0 0
  %425 = vmatmul.mubr.bf16.gmra.mrb[0].mxu0 %v241
  %v426 = vpop.f32.mrb[0].mxu0
  %v427 = vadd.f32 0.0, %v426
  %v428 = vpop.f32.mrb[0].mxu0
  %v429 = vpop.f32.mrb[0].mxu0
  %v430 = vadd.f32 0.0, %v429
  %v431 = vpop.f32.mrb[0].mxu0
  %432 = vmatprep.mubr.bf16.mxu0 0
  %433 = vmatmul.mubr.bf16.gmra.mrb[0].mxu0 %v244
  %v434 = vpop.f32.mrb[0].mxu0
  %v435 = vadd.f32 0.0, %v434
  %v436 = vpop.f32.mrb[0].mxu0
  %v437 = vpop.f32.mrb[0].mxu0
  %v438 = vadd.f32 0.0, %v437
  %v439 = vpop.f32.mrb[0].mxu0
  %440 = vmatprep.mubr.bf16.mxu0 0
  %441 = vmatmul.mubr.bf16.gmra.mrb[0].mxu0 %v247
  %v442 = vpop.f32.mrb[0].mxu0
  %v443 = vadd.f32 0.0, %v442
  %v444 = vpop.f32.mrb[0].mxu0
  %v445 = vpop.f32.mrb[0].mxu0
  %v446 = vadd.f32 0.0, %v445
  %v447 = vpop.f32.mrb[0].mxu0
  %448 = vmatprep.mubr.bf16.mxu0 0
  %449 = vmatmul.mubr.bf16.gmra.mrb[0].mxu0 %v250
  %v450 = vpop.f32.mrb[0].mxu0
  %v451 = vadd.f32 0.0, %v450
  %v452 = vpop.f32.mrb[0].mxu0
  %v453 = vpop.f32.mrb[0].mxu0
  %v454 = vadd.f32 0.0, %v453
  %v455 = vpop.f32.mrb[0].mxu0
  %456 = vmatprep.mubr.bf16.mxu0 0
  %457 = vmatmul.mubr.bf16.gmra.mrb[0].mxu0 %v253
  %v458 = vpop.f32.mrb[0].mxu0
  %v459 = vadd.f32 0.0, %v458
  %v460 = vpop.f32.mrb[0].mxu0
  %v461 = vpop.f32.mrb[0].mxu0
  %v462 = vadd.f32 0.0, %v461
  %v463 = vpop.f32.mrb[0].mxu0
  %464 = vmatprep.mubr.bf16.mxu0 0
  %465 = vmatmul.mubr.bf16.gmra.mrb[0].mxu0 %v256
  %v466 = vpop.f32.mrb[0].mxu0
  %v467 = vadd.f32 0.0, %v466
  %v468 = vpop.f32.mrb[0].mxu0
  %v469 = vpop.f32.mrb[0].mxu0
  %v470 = vadd.f32 0.0, %v469
  %v471 = vpop.f32.mrb[0].mxu0
  %472 = vmatprep.mubr.bf16.mxu0 0
  %473 = vmatmul.mubr.bf16.gmra.mrb[0].mxu0 %v259
  %v474 = vpop.f32.mrb[0].mxu0
  %v475 = vadd.f32 0.0, %v474
  %v476 = vpop.f32.mrb[0].mxu0
  %v477 = vpop.f32.mrb[0].mxu0
  %v478 = vadd.f32 0.0, %v477
  %v479 = vpop.f32.mrb[0].mxu0
  %480 = vmatprep.mubr.bf16.mxu0 0
  %481 = vmatmul.mubr.bf16.gmra.mrb[0].mxu0 %v262
  %v482 = vpop.f32.mrb[0].mxu0
  %v483 = vadd.f32 0.0, %v482
  %v484 = vpop.f32.mrb[0].mxu0
  %v485 = vpop.f32.mrb[0].mxu0
  %v486 = vadd.f32 0.0, %v485
  %v487 = vpop.f32.mrb[0].mxu0
  %488 = vmatprep.mubr.bf16.mxu0 0
  %489 = vmatmul.mubr.bf16.gmra.mrb[0].mxu0 %v265
  %v490 = vpop.f32.mrb[0].mxu0
  %v491 = vadd.f32 0.0, %v490
  %v492 = vpop.f32.mrb[0].mxu0
  %v493 = vpop.f32.mrb[0].mxu0
  %v494 = vadd.f32 0.0, %v493
  %v495 = vpop.f32.mrb[0].mxu0
  %496 = vmatprep.mubr.bf16.mxu0 0
  %497 = vmatmul.mubr.bf16.gmra.mrb[0].mxu0 %v268
  %v498 = vpop.f32.mrb[0].mxu0
  %v499 = vadd.f32 0.0, %v498
  %v500 = vpop.f32.mrb[0].mxu0
  %v501 = vpop.f32.mrb[0].mxu0
  %v502 = vadd.f32 0.0, %v501
  %v503 = vpop.f32.mrb[0].mxu0
  %504 = vmatprep.mubr.bf16.mxu0 0
  %505 = vmatmul.mubr.bf16.gmra.mrb[0].mxu0 %v271
  %v506 = vpop.f32.mrb[0].mxu0
  %v507 = vadd.f32 0.0, %v506
  %v508 = vpop.f32.mrb[0].mxu0
  %v509 = vpop.f32.mrb[0].mxu0
  %v510 = vadd.f32 0.0, %v509
  %v511 = vpop.f32.mrb[0].mxu0
  %512 = vdwg.mxu0
  %s513 = scalar_lea.vmem %s0, 200
  %v514 = vld [vmem:[%s513] sm:$0xf]
  %v515 = vld [vmem:[%s513 + $0x4] sm:$0xf]
  %v516 = vld [vmem:[%s513 + $0x8] sm:$0xf]
  %v517 = vld [vmem:[%s513 + $0xc] sm:$0xf]
  %v518 = vld [vmem:[%s513 + $0x10] sm:$0xf]
  %v519 = vld [vmem:[%s513 + $0x14] sm:$0xf]
  %v520 = vld [vmem:[%s513 + $0x18] sm:$0xf]
  %v521 = vld [vmem:[%s513 + $0x1c] sm:$0xf]
  %v522 = vld [vmem:[%s513 + $0x20] sm:$0xf]
  %v523 = vld [vmem:[%s513 + $0x24] sm:$0xf]
  %v524 = vld [vmem:[%s513 + $0x28] sm:$0xf]
  %v525 = vld [vmem:[%s513 + $0x2c] sm:$0xf]
  %v526 = vld [vmem:[%s513 + $0x30] sm:$0xf]
  %v527 = vld [vmem:[%s513 + $0x34] sm:$0xf]
  %v528 = vld [vmem:[%s513 + $0x38] sm:$0xf]
  %v529 = vld [vmem:[%s513 + $0x3c] sm:$0xf]
  %v530 = vld [vmem:[%s513 + $0x40] sm:$0xf]
  %v531 = vld [vmem:[%s513 + $0x44] sm:$0xf]
  %v532 = vld [vmem:[%s513 + $0x48] sm:$0xf]
  %v533 = vld [vmem:[%s513 + $0x4c] sm:$0xf]
  %v534 = vld [vmem:[%s513 + $0x50] sm:$0xf]
  %v535 = vld [vmem:[%s513 + $0x54] sm:$0xf]
  %v536 = vld [vmem:[%s513 + $0x58] sm:$0xf]
  %v537 = vld [vmem:[%s513 + $0x5c] sm:$0xf]
  %v538 = vld [vmem:[%s513 + $0x60] sm:$0xf]
  %v539 = vld [vmem:[%s513 + $0x64] sm:$0xf]
  %v540 = vld [vmem:[%s513 + $0x68] sm:$0xf]
  %v541 = vld [vmem:[%s513 + $0x6c] sm:$0xf]
  %v542 = vld [vmem:[%s513 + $0x70] sm:$0xf]
  %v543 = vld [vmem:[%s513 + $0x74] sm:$0xf]
  %v544 = vld [vmem:[%s513 + $0x78] sm:$0xf]
  %v545 = vld [vmem:[%s513 + $0x7c] sm:$0xf]
  %v546 = vld [vmem:[%s513 + $0x80] sm:$0xf]
  %v547 = vld [vmem:[%s513 + $0x84] sm:$0xf]
  %v548 = vld [vmem:[%s513 + $0x88] sm:$0xf]
  %v549 = vld [vmem:[%s513 + $0x8c] sm:$0xf]
  %v550 = vld [vmem:[%s513 + $0x90] sm:$0xf]
  %v551 = vld [vmem:[%s513 + $0x94] sm:$0xf]
  %v552 = vld [vmem:[%s513 + $0x98] sm:$0xf]
  %v553 = vld [vmem:[%s513 + $0x9c] sm:$0xf]
  %v554 = vld [vmem:[%s513 + $0xa0] sm:$0xf]
  %v555 = vld [vmem:[%s513 + $0xa4] sm:$0xf]
  %v556 = vld [vmem:[%s513 + $0xa8] sm:$0xf]
  %v557 = vld [vmem:[%s513 + $0xac] sm:$0xf]
  %v558 = vld [vmem:[%s513 + $0xb0] sm:$0xf]
  %v559 = vld [vmem:[%s513 + $0xb4] sm:$0xf]
  %v560 = vld [vmem:[%s513 + $0xb8] sm:$0xf]
  %v561 = vld [vmem:[%s513 + $0xbc] sm:$0xf]
  %v562 = vld [vmem:[%s513 + $0xc0] sm:$0xf]
  %v563 = vld [vmem:[%s513 + $0xc4] sm:$0xf]
  %v614 = vunpack.c.l.b16 %v514
  %v615 = vunpack.c.l.b16 %v515
  %v616 = vunpack.c.l.b16 %v516
  %v617 = vunpack.c.l.b16 %v517
  %v618 = vunpack.c.l.b16 %v518
  %v619 = vunpack.c.l.b16 %v519
  %v620 = vunpack.c.l.b16 %v520
  %v621 = vunpack.c.l.b16 %v521
  %v622 = vunpack.c.l.b16 %v522
  %v623 = vunpack.c.l.b16 %v523
  %v624 = vunpack.c.l.b16 %v524
  %v625 = vunpack.c.l.b16 %v525
  %v626 = vunpack.c.l.b16 %v526
  %v627 = vunpack.c.l.b16 %v527
  %v628 = vunpack.c.l.b16 %v528
  %v629 = vunpack.c.l.b16 %v529
  %v630 = vunpack.c.l.b16 %v530
  %v631 = vunpack.c.l.b16 %v531
  %v632 = vunpack.c.l.b16 %v532
  %v633 = vunpack.c.l.b16 %v533
  %v634 = vunpack.c.l.b16 %v534
  %v635 = vunpack.c.l.b16 %v535
  %v636 = vunpack.c.l.b16 %v536
  %v637 = vunpack.c.l.b16 %v537
  %v638 = vunpack.c.l.b16 %v538
  %v639 = vunpack.c.l.b16 %v539
  %v640 = vunpack.c.l.b16 %v540
  %v641 = vunpack.c.l.b16 %v541
  %v642 = vunpack.c.l.b16 %v542
  %v643 = vunpack.c.l.b16 %v543
  %v644 = vunpack.c.l.b16 %v544
  %v645 = vunpack.c.l.b16 %v545
  %v646 = vunpack.c.l.b16 %v546
  %v647 = vunpack.c.l.b16 %v547
  %v648 = vunpack.c.l.b16 %v548
  %v649 = vunpack.c.l.b16 %v549
  %v650 = vunpack.c.l.b16 %v550
  %v651 = vunpack.c.l.b16 %v551
  %v652 = vunpack.c.l.b16 %v552
  %v653 = vunpack.c.l.b16 %v553
  %v654 = vunpack.c.l.b16 %v554
  %v655 = vunpack.c.l.b16 %v555
  %v656 = vunpack.c.l.b16 %v556
  %v657 = vunpack.c.l.b16 %v557
  %v658 = vunpack.c.l.b16 %v558
  %v659 = vunpack.c.l.b16 %v559
  %v660 = vunpack.c.l.b16 %v560
  %v661 = vunpack.c.l.b16 %v561
  %v662 = vunpack.c.l.b16 %v562
  %v663 = vunpack.c.l.b16 %v563
  %v664 = vpack.c.b16 %v615, %v614
  %v665 = vpack.c.b16 %v617, %v616
  %v666 = vpack.c.b16 %v619, %v618
  %v667 = vpack.c.b16 %v621, %v620
  %v668 = vpack.c.b16 %v623, %v622
  %v669 = vpack.c.b16 %v625, %v624
  %v670 = vpack.c.b16 %v627, %v626
  %v671 = vpack.c.b16 %v629, %v628
  %v672 = vpack.c.b16 %v631, %v630
  %v673 = vpack.c.b16 %v633, %v632
  %v674 = vpack.c.b16 %v635, %v634
  %v675 = vpack.c.b16 %v637, %v636
  %v676 = vpack.c.b16 %v639, %v638
  %v677 = vpack.c.b16 %v641, %v640
  %v678 = vpack.c.b16 %v643, %v642
  %v679 = vpack.c.b16 %v645, %v644
  %v680 = vpack.c.b16 %v647, %v646
  %v681 = vpack.c.b16 %v649, %v648
  %v682 = vpack.c.b16 %v651, %v650
  %v683 = vpack.c.b16 %v653, %v652
  %v684 = vpack.c.b16 %v655, %v654
  %v685 = vpack.c.b16 %v657, %v656
  %v686 = vpack.c.b16 %v659, %v658
  %v687 = vpack.c.b16 %v661, %v660
  %v688 = vpack.c.b16 %v663, %v662
  %v690 = vsel %vm197, %v664, 0
  %v693 = vsel %vm197, %v665, 0
  %v696 = vsel %vm197, %v666, 0
  %v699 = vsel %vm197, %v667, 0
  %v702 = vsel %vm197, %v668, 0
  %v705 = vsel %vm197, %v669, 0
  %v708 = vsel %vm197, %v670, 0
  %v711 = vsel %vm197, %v671, 0
  %v714 = vsel %vm197, %v672, 0
  %v717 = vsel %vm197, %v673, 0
  %v720 = vsel %vm197, %v674, 0
  %v723 = vsel %vm197, %v675, 0
  %v726 = vsel %vm197, %v676, 0
  %v729 = vsel %vm197, %v677, 0
  %v732 = vsel %vm197, %v678, 0
  %v735 = vsel %vm197, %v679, 0
  %v738 = vsel %vm197, %v680, 0
  %v741 = vsel %vm197, %v681, 0
  %v744 = vsel %vm197, %v682, 0
  %v747 = vsel %vm197, %v683, 0
  %v750 = vsel %vm197, %v684, 0
  %v753 = vsel %vm197, %v685, 0
  %v756 = vsel %vm197, %v686, 0
  %v759 = vsel %vm197, %v687, 0
  %v762 = vsel %vm197, %v688, 0
  %764 = vmatprep.subr.bf16.mxu0 0
  %765 = vmatpush1.bf16.msra.mxu0 %v278
  %766 = vmatprep.subr.bf16.mxu0 0
  %767 = vmatpush1.bf16.msra.mxu0 0
  %768 = vmatprep.subr.bf16.mxu0 0
  %769 = vmatpush1.bf16.msra.mxu0 0
  %770 = vmatprep.subr.bf16.mxu0 0
  %771 = vmatpush1.bf16.msra.mxu0 0
  %772 = vmatprep.subr.bf16.mxu0 0
  %773 = vmatpush1.bf16.msra.mxu0 0
  %774 = vmatprep.subr.bf16.mxu0 0
  %775 = vmatpush1.bf16.msra.mxu0 0
  %776 = vmatprep.subr.bf16.mxu0 0
  %777 = vmatpush1.bf16.msra.mxu0 0
  %778 = vmatprep.subr.bf16.mxu0 0
  %779 = vmatpush1.bf16.msra.mxu0 0
  %780 = vmatprep.subr.bf16.mxu0 0
  %781 = vmatpush1.bf16.msra.mxu0 0
  %782 = vmatprep.subr.bf16.mxu0 0
  %783 = vmatpush1.bf16.msra.mxu0 0
  %784 = vmatprep.subr.bf16.mxu0 0
  %785 = vmatpush1.bf16.msra.mxu0 0
  %786 = vmatprep.subr.bf16.mxu0 0
  %787 = vmatpush1.bf16.msra.mxu0 0
  %788 = vmatprep.subr.bf16.mxu0 0
  %789 = vmatpush1.bf16.msra.mxu0 0
  %790 = vmatprep.subr.bf16.mxu0 0
  %791 = vmatpush1.bf16.msra.mxu0 0
  %792 = vmatprep.subr.bf16.mxu0 0
  %793 = vmatpush1.bf16.msra.mxu0 0
  %794 = vmatprep.subr.bf16.mxu0 0
  %795 = vmatpush1.bf16.msra.mxu0 0
  %796 = vmatprep.mubr.bf16.mxu0 0
  %797 = vmatmul.mubr.bf16.gmra.mrb[0].mxu0 %v690
  %v798 = vpop.f32.mrb[0].mxu0
  %v799 = vadd.f32 0.0, %v798
  %v800 = vpop.f32.mrb[0].mxu0
  %v801 = vpop.f32.mrb[0].mxu0
  %v802 = vadd.f32 0.0, %v801
  %v803 = vpop.f32.mrb[0].mxu0
  %804 = vmatprep.mubr.bf16.mxu0 0
  %805 = vmatmul.mubr.bf16.gmra.mrb[0].mxu0 %v693
  %v806 = vpop.f32.mrb[0].mxu0
  %v807 = vadd.f32 0.0, %v806
  %v808 = vpop.f32.mrb[0].mxu0
  %v809 = vpop.f32.mrb[0].mxu0
  %v810 = vadd.f32 0.0, %v809
  %v811 = vpop.f32.mrb[0].mxu0
  %812 = vmatprep.mubr.bf16.mxu0 0
  %813 = vmatmul.mubr.bf16.gmra.mrb[0].mxu0 %v696
  %v814 = vpop.f32.mrb[0].mxu0
  %v815 = vadd.f32 0.0, %v814
  %v816 = vpop.f32.mrb[0].mxu0
  %v817 = vpop.f32.mrb[0].mxu0
  %v818 = vadd.f32 0.0, %v817
  %v819 = vpop.f32.mrb[0].mxu0
  %820 = vmatprep.mubr.bf16.mxu0 0
  %821 = vmatmul.mubr.bf16.gmra.mrb[0].mxu0 %v699
  %v822 = vpop.f32.mrb[0].mxu0
  %v823 = vadd.f32 0.0, %v822
  %v824 = vpop.f32.mrb[0].mxu0
  %v825 = vpop.f32.mrb[0].mxu0
  %v826 = vadd.f32 0.0, %v825
  %v827 = vpop.f32.mrb[0].mxu0
  %828 = vmatprep.mubr.bf16.mxu0 0
  %829 = vmatmul.mubr.bf16.gmra.mrb[0].mxu0 %v702
  %v830 = vpop.f32.mrb[0].mxu0
  %v831 = vadd.f32 0.0, %v830
  %v832 = vpop.f32.mrb[0].mxu0
  %v833 = vpop.f32.mrb[0].mxu0
  %v834 = vadd.f32 0.0, %v833
  %v835 = vpop.f32.mrb[0].mxu0
  %836 = vmatprep.mubr.bf16.mxu0 0
  %837 = vmatmul.mubr.bf16.gmra.mrb[0].mxu0 %v705
  %v838 = vpop.f32.mrb[0].mxu0
  %v839 = vadd.f32 0.0, %v838
  %v840 = vpop.f32.mrb[0].mxu0
  %v841 = vpop.f32.mrb[0].mxu0
  %v842 = vadd.f32 0.0, %v841
  %v843 = vpop.f32.mrb[0].mxu0
  %844 = vmatprep.mubr.bf16.mxu0 0
  %845 = vmatmul.mubr.bf16.gmra.mrb[0].mxu0 %v708
  %v846 = vpop.f32.mrb[0].mxu0
  %v847 = vadd.f32 0.0, %v846
  %v848 = vpop.f32.mrb[0].mxu0
  %v849 = vpop.f32.mrb[0].mxu0
  %v850 = vadd.f32 0.0, %v849
  %v851 = vpop.f32.mrb[0].mxu0
  %852 = vmatprep.mubr.bf16.mxu0 0
  %853 = vmatmul.mubr.bf16.gmra.mrb[0].mxu0 %v711
  %v854 = vpop.f32.mrb[0].mxu0
  %v855 = vadd.f32 0.0, %v854
  %v856 = vpop.f32.mrb[0].mxu0
  %v857 = vpop.f32.mrb[0].mxu0
  %v858 = vadd.f32 0.0, %v857
  %v859 = vpop.f32.mrb[0].mxu0
  %860 = vmatprep.mubr.bf16.mxu0 0
  %861 = vmatmul.mubr.bf16.gmra.mrb[0].mxu0 %v714
  %v862 = vpop.f32.mrb[0].mxu0
  %v863 = vadd.f32 0.0, %v862
  %v864 = vpop.f32.mrb[0].mxu0
  %v865 = vpop.f32.mrb[0].mxu0
  %v866 = vadd.f32 0.0, %v865
  %v867 = vpop.f32.mrb[0].mxu0
  %868 = vmatprep.mubr.bf16.mxu0 0
  %869 = vmatmul.mubr.bf16.gmra.mrb[0].mxu0 %v717
  %v870 = vpop.f32.mrb[0].mxu0
  %v871 = vadd.f32 0.0, %v870
  %v872 = vpop.f32.mrb[0].mxu0
  %v873 = vpop.f32.mrb[0].mxu0
  %v874 = vadd.f32 0.0, %v873
  %v875 = vpop.f32.mrb[0].mxu0
  %876 = vmatprep.mubr.bf16.mxu0 0
  %877 = vmatmul.mubr.bf16.gmra.mrb[0].mxu0 %v720
  %v878 = vpop.f32.mrb[0].mxu0
  %v879 = vadd.f32 0.0, %v878
  %v880 = vpop.f32.mrb[0].mxu0
  %v881 = vpop.f32.mrb[0].mxu0
  %v882 = vadd.f32 0.0, %v881
  %v883 = vpop.f32.mrb[0].mxu0
  %884 = vmatprep.mubr.bf16.mxu0 0
  %885 = vmatmul.mubr.bf16.gmra.mrb[0].mxu0 %v723
  %v886 = vpop.f32.mrb[0].mxu0
  %v887 = vadd.f32 0.0, %v886
  %v888 = vpop.f32.mrb[0].mxu0
  %v889 = vpop.f32.mrb[0].mxu0
  %v890 = vadd.f32 0.0, %v889
  %v891 = vpop.f32.mrb[0].mxu0
  %892 = vmatprep.mubr.bf16.mxu0 0
  %893 = vmatmul.mubr.bf16.gmra.mrb[0].mxu0 %v726
  %v894 = vpop.f32.mrb[0].mxu0
  %v895 = vadd.f32 0.0, %v894
  %v896 = vpop.f32.mrb[0].mxu0
  %v897 = vpop.f32.mrb[0].mxu0
  %v898 = vadd.f32 0.0, %v897
  %v899 = vpop.f32.mrb[0].mxu0
  %900 = vmatprep.mubr.bf16.mxu0 0
  %901 = vmatmul.mubr.bf16.gmra.mrb[0].mxu0 %v729
  %v902 = vpop.f32.mrb[0].mxu0
  %v903 = vadd.f32 0.0, %v902
  %v904 = vpop.f32.mrb[0].mxu0
  %v905 = vpop.f32.mrb[0].mxu0
  %v906 = vadd.f32 0.0, %v905
  %v907 = vpop.f32.mrb[0].mxu0
  %908 = vmatprep.mubr.bf16.mxu0 0
  %909 = vmatmul.mubr.bf16.gmra.mrb[0].mxu0 %v732
  %v910 = vpop.f32.mrb[0].mxu0
  %v911 = vadd.f32 0.0, %v910
  %v912 = vpop.f32.mrb[0].mxu0
  %v913 = vpop.f32.mrb[0].mxu0
  %v914 = vadd.f32 0.0, %v913
  %v915 = vpop.f32.mrb[0].mxu0
  %916 = vmatprep.mubr.bf16.mxu0 0
  %917 = vmatmul.mubr.bf16.gmra.mrb[0].mxu0 %v735
  %v918 = vpop.f32.mrb[0].mxu0
  %v919 = vadd.f32 0.0, %v918
  %v920 = vpop.f32.mrb[0].mxu0
  %v921 = vpop.f32.mrb[0].mxu0
  %v922 = vadd.f32 0.0, %v921
  %v923 = vpop.f32.mrb[0].mxu0
  %924 = vmatprep.mubr.bf16.mxu0 0
  %925 = vmatmul.mubr.bf16.gmra.mrb[0].mxu0 %v738
  %v926 = vpop.f32.mrb[0].mxu0
  %v927 = vadd.f32 0.0, %v926
  %v928 = vpop.f32.mrb[0].mxu0
  %v929 = vpop.f32.mrb[0].mxu0
  %v930 = vadd.f32 0.0, %v929
  %v931 = vpop.f32.mrb[0].mxu0
  %932 = vmatprep.mubr.bf16.mxu0 0
  %933 = vmatmul.mubr.bf16.gmra.mrb[0].mxu0 %v741
  %v934 = vpop.f32.mrb[0].mxu0
  %v935 = vadd.f32 0.0, %v934
  %v936 = vpop.f32.mrb[0].mxu0
  %v937 = vpop.f32.mrb[0].mxu0
  %v938 = vadd.f32 0.0, %v937
  %v939 = vpop.f32.mrb[0].mxu0
  %940 = vmatprep.mubr.bf16.mxu0 0
  %941 = vmatmul.mubr.bf16.gmra.mrb[0].mxu0 %v744
  %v942 = vpop.f32.mrb[0].mxu0
  %v943 = vadd.f32 0.0, %v942
  %v944 = vpop.f32.mrb[0].mxu0
  %v945 = vpop.f32.mrb[0].mxu0
  %v946 = vadd.f32 0.0, %v945
  %v947 = vpop.f32.mrb[0].mxu0
  %948 = vmatprep.mubr.bf16.mxu0 0
  %949 = vmatmul.mubr.bf16.gmra.mrb[0].mxu0 %v747
  %v950 = vpop.f32.mrb[0].mxu0
  %v951 = vadd.f32 0.0, %v950
  %v952 = vpop.f32.mrb[0].mxu0
  %v953 = vpop.f32.mrb[0].mxu0
  %v954 = vadd.f32 0.0, %v953
  %v955 = vpop.f32.mrb[0].mxu0
  %956 = vmatprep.mubr.bf16.mxu0 0
  %957 = vmatmul.mubr.bf16.gmra.mrb[0].mxu0 %v750
  %v958 = vpop.f32.mrb[0].mxu0
  %v959 = vadd.f32 0.0, %v958
  %v960 = vpop.f32.mrb[0].mxu0
  %v961 = vpop.f32.mrb[0].mxu0
  %v962 = vadd.f32 0.0, %v961
  %v963 = vpop.f32.mrb[0].mxu0
  %964 = vmatprep.mubr.bf16.mxu0 0
  %965 = vmatmul.mubr.bf16.gmra.mrb[0].mxu0 %v753
  %v966 = vpop.f32.mrb[0].mxu0
  %v967 = vadd.f32 0.0, %v966
  %v968 = vpop.f32.mrb[0].mxu0
  %v969 = vpop.f32.mrb[0].mxu0
  %v970 = vadd.f32 0.0, %v969
  %v971 = vpop.f32.mrb[0].mxu0
  %972 = vmatprep.mubr.bf16.mxu0 0
  %973 = vmatmul.mubr.bf16.gmra.mrb[0].mxu0 %v756
  %v974 = vpop.f32.mrb[0].mxu0
  %v975 = vadd.f32 0.0, %v974
  %v976 = vpop.f32.mrb[0].mxu0
  %v977 = vpop.f32.mrb[0].mxu0
  %v978 = vadd.f32 0.0, %v977
  %v979 = vpop.f32.mrb[0].mxu0
  %980 = vmatprep.mubr.bf16.mxu0 0
  %981 = vmatmul.mubr.bf16.gmra.mrb[0].mxu0 %v759
  %v982 = vpop.f32.mrb[0].mxu0
  %v983 = vadd.f32 0.0, %v982
  %v984 = vpop.f32.mrb[0].mxu0
  %v985 = vpop.f32.mrb[0].mxu0
  %v986 = vadd.f32 0.0, %v985
  %v987 = vpop.f32.mrb[0].mxu0
  %988 = vmatprep.mubr.bf16.mxu0 0
  %989 = vmatmul.mubr.bf16.gmra.mrb[0].mxu0 %v762
  %v990 = vpop.f32.mrb[0].mxu0
  %v991 = vadd.f32 0.0, %v990
  %v992 = vpop.f32.mrb[0].mxu0
  %v993 = vpop.f32.mrb[0].mxu0
  %v994 = vadd.f32 0.0, %v993
  %v995 = vpop.f32.mrb[0].mxu0
  %996 = vdwg.mxu0
  %v997 = vmax.f32 %v315, %v799
  %v998 = vmax.f32 %v318, %v802
  %v999 = vmax.f32 %v323, %v807
  %v1000 = vmax.f32 %v326, %v810
  %v1001 = vmax.f32 %v331, %v815
  %v1002 = vmax.f32 %v334, %v818
  %v1003 = vmax.f32 %v339, %v823
  %v1004 = vmax.f32 %v342, %v826
  %v1005 = vmax.f32 %v347, %v831
  %v1006 = vmax.f32 %v350, %v834
  %v1007 = vmax.f32 %v355, %v839
  %v1008 = vmax.f32 %v358, %v842
  %v1009 = vmax.f32 %v363, %v847
  %v1010 = vmax.f32 %v366, %v850
  %v1011 = vmax.f32 %v371, %v855
  %v1012 = vmax.f32 %v374, %v858
  %v1013 = vmax.f32 %v379, %v863
  %v1014 = vmax.f32 %v382, %v866
  %v1015 = vmax.f32 %v387, %v871
  %v1016 = vmax.f32 %v390, %v874
  %v1017 = vmax.f32 %v395, %v879
  %v1018 = vmax.f32 %v398, %v882
  %v1019 = vmax.f32 %v403, %v887
  %v1020 = vmax.f32 %v406, %v890
  %v1021 = vmax.f32 %v411, %v895
  %v1022 = vmax.f32 %v414, %v898
  %v1023 = vmax.f32 %v419, %v903
  %v1024 = vmax.f32 %v422, %v906
  %v1025 = vmax.f32 %v427, %v911
  %v1026 = vmax.f32 %v430, %v914
  %v1027 = vmax.f32 %v435, %v919
  %v1028 = vmax.f32 %v438, %v922
  %v1029 = vmax.f32 %v443, %v927
  %v1030 = vmax.f32 %v446, %v930
  %v1031 = vmax.f32 %v451, %v935
  %v1032 = vmax.f32 %v454, %v938
  %v1033 = vmax.f32 %v459, %v943
  %v1034 = vmax.f32 %v462, %v946
  %v1035 = vmax.f32 %v467, %v951
  %v1036 = vmax.f32 %v470, %v954
  %v1037 = vmax.f32 %v475, %v959
  %v1038 = vmax.f32 %v478, %v962
  %v1039 = vmax.f32 %v483, %v967
  %v1040 = vmax.f32 %v486, %v970
  %v1041 = vmax.f32 %v491, %v975
  %v1042 = vmax.f32 %v494, %v978
  %v1043 = vmax.f32 %v499, %v983
  %v1044 = vmax.f32 %v502, %v986
  %v1045 = vmax.f32 %v507, %v991
  %v1046 = vmax.f32 %v510, %v994
  %s1047 = scalar_lea.vmem %s0, 400
  %v1048 = vld [vmem:[%s1047] sm:$0xf]
  %v1049 = vld [vmem:[%s1047 + $0x4] sm:$0xf]
  %v1050 = vld [vmem:[%s1047 + $0x8] sm:$0xf]
  %v1051 = vld [vmem:[%s1047 + $0xc] sm:$0xf]
  %v1052 = vld [vmem:[%s1047 + $0x10] sm:$0xf]
  %v1053 = vld [vmem:[%s1047 + $0x14] sm:$0xf]
  %v1054 = vld [vmem:[%s1047 + $0x18] sm:$0xf]
  %v1055 = vld [vmem:[%s1047 + $0x1c] sm:$0xf]
  %v1056 = vld [vmem:[%s1047 + $0x20] sm:$0xf]
  %v1057 = vld [vmem:[%s1047 + $0x24] sm:$0xf]
  %v1058 = vld [vmem:[%s1047 + $0x28] sm:$0xf]
  %v1059 = vld [vmem:[%s1047 + $0x2c] sm:$0xf]
  %v1060 = vld [vmem:[%s1047 + $0x30] sm:$0xf]
  %v1061 = vld [vmem:[%s1047 + $0x34] sm:$0xf]
  %v1062 = vld [vmem:[%s1047 + $0x38] sm:$0xf]
  %v1063 = vld [vmem:[%s1047 + $0x3c] sm:$0xf]
  %v1064 = vld [vmem:[%s1047 + $0x40] sm:$0xf]
  %v1065 = vld [vmem:[%s1047 + $0x44] sm:$0xf]
  %v1066 = vld [vmem:[%s1047 + $0x48] sm:$0xf]
  %v1067 = vld [vmem:[%s1047 + $0x4c] sm:$0xf]
  %v1068 = vld [vmem:[%s1047 + $0x50] sm:$0xf]
  %v1069 = vld [vmem:[%s1047 + $0x54] sm:$0xf]
  %v1070 = vld [vmem:[%s1047 + $0x58] sm:$0xf]
  %v1071 = vld [vmem:[%s1047 + $0x5c] sm:$0xf]
  %v1072 = vld [vmem:[%s1047 + $0x60] sm:$0xf]
  %v1073 = vld [vmem:[%s1047 + $0x64] sm:$0xf]
  %v1074 = vld [vmem:[%s1047 + $0x68] sm:$0xf]
  %v1075 = vld [vmem:[%s1047 + $0x6c] sm:$0xf]
  %v1076 = vld [vmem:[%s1047 + $0x70] sm:$0xf]
  %v1077 = vld [vmem:[%s1047 + $0x74] sm:$0xf]
  %v1078 = vld [vmem:[%s1047 + $0x78] sm:$0xf]
  %v1079 = vld [vmem:[%s1047 + $0x7c] sm:$0xf]
  %v1080 = vld [vmem:[%s1047 + $0x80] sm:$0xf]
  %v1081 = vld [vmem:[%s1047 + $0x84] sm:$0xf]
  %v1082 = vld [vmem:[%s1047 + $0x88] sm:$0xf]
  %v1083 = vld [vmem:[%s1047 + $0x8c] sm:$0xf]
  %v1084 = vld [vmem:[%s1047 + $0x90] sm:$0xf]
  %v1085 = vld [vmem:[%s1047 + $0x94] sm:$0xf]
  %v1086 = vld [vmem:[%s1047 + $0x98] sm:$0xf]
  %v1087 = vld [vmem:[%s1047 + $0x9c] sm:$0xf]
  %v1088 = vld [vmem:[%s1047 + $0xa0] sm:$0xf]
  %v1089 = vld [vmem:[%s1047 + $0xa4] sm:$0xf]
  %v1090 = vld [vmem:[%s1047 + $0xa8] sm:$0xf]
  %v1091 = vld [vmem:[%s1047 + $0xac] sm:$0xf]
  %v1092 = vld [vmem:[%s1047 + $0xb0] sm:$0xf]
  %v1093 = vld [vmem:[%s1047 + $0xb4] sm:$0xf]
  %v1094 = vld [vmem:[%s1047 + $0xb8] sm:$0xf]
  %v1095 = vld [vmem:[%s1047 + $0xbc] sm:$0xf]
  %v1096 = vld [vmem:[%s1047 + $0xc0] sm:$0xf]
  %v1097 = vld [vmem:[%s1047 + $0xc4] sm:$0xf]
  %v1148 = vunpack.c.l.b16 %v1048
  %v1149 = vunpack.c.l.b16 %v1049
  %v1150 = vunpack.c.l.b16 %v1050
  %v1151 = vunpack.c.l.b16 %v1051
  %v1152 = vunpack.c.l.b16 %v1052
  %v1153 = vunpack.c.l.b16 %v1053
  %v1154 = vunpack.c.l.b16 %v1054
  %v1155 = vunpack.c.l.b16 %v1055
  %v1156 = vunpack.c.l.b16 %v1056
  %v1157 = vunpack.c.l.b16 %v1057
  %v1158 = vunpack.c.l.b16 %v1058
  %v1159 = vunpack.c.l.b16 %v1059
  %v1160 = vunpack.c.l.b16 %v1060
  %v1161 = vunpack.c.l.b16 %v1061
  %v1162 = vunpack.c.l.b16 %v1062
  %v1163 = vunpack.c.l.b16 %v1063
  %v1164 = vunpack.c.l.b16 %v1064
  %v1165 = vunpack.c.l.b16 %v1065
  %v1166 = vunpack.c.l.b16 %v1066
  %v1167 = vunpack.c.l.b16 %v1067
  %v1168 = vunpack.c.l.b16 %v1068
  %v1169 = vunpack.c.l.b16 %v1069
  %v1170 = vunpack.c.l.b16 %v1070
  %v1171 = vunpack.c.l.b16 %v1071
  %v1172 = vunpack.c.l.b16 %v1072
  %v1173 = vunpack.c.l.b16 %v1073
  %v1174 = vunpack.c.l.b16 %v1074
  %v1175 = vunpack.c.l.b16 %v1075
  %v1176 = vunpack.c.l.b16 %v1076
  %v1177 = vunpack.c.l.b16 %v1077
  %v1178 = vunpack.c.l.b16 %v1078
  %v1179 = vunpack.c.l.b16 %v1079
  %v1180 = vunpack.c.l.b16 %v1080
  %v1181 = vunpack.c.l.b16 %v1081
  %v1182 = vunpack.c.l.b16 %v1082
  %v1183 = vunpack.c.l.b16 %v1083
  %v1184 = vunpack.c.l.b16 %v1084
  %v1185 = vunpack.c.l.b16 %v1085
  %v1186 = vunpack.c.l.b16 %v1086
  %v1187 = vunpack.c.l.b16 %v1087
  %v1188 = vunpack.c.l.b16 %v1088
  %v1189 = vunpack.c.l.b16 %v1089
  %v1190 = vunpack.c.l.b16 %v1090
  %v1191 = vunpack.c.l.b16 %v1091
  %v1192 = vunpack.c.l.b16 %v1092
  %v1193 = vunpack.c.l.b16 %v1093
  %v1194 = vunpack.c.l.b16 %v1094
  %v1195 = vunpack.c.l.b16 %v1095
  %v1196 = vunpack.c.l.b16 %v1096
  %v1197 = vunpack.c.l.b16 %v1097
  %v1198 = vpack.c.b16 %v1149, %v1148
  %v1199 = vpack.c.b16 %v1151, %v1150
  %v1200 = vpack.c.b16 %v1153, %v1152
  %v1201 = vpack.c.b16 %v1155, %v1154
  %v1202 = vpack.c.b16 %v1157, %v1156
  %v1203 = vpack.c.b16 %v1159, %v1158
  %v1204 = vpack.c.b16 %v1161, %v1160
  %v1205 = vpack.c.b16 %v1163, %v1162
  %v1206 = vpack.c.b16 %v1165, %v1164
  %v1207 = vpack.c.b16 %v1167, %v1166
  %v1208 = vpack.c.b16 %v1169, %v1168
  %v1209 = vpack.c.b16 %v1171, %v1170
  %v1210 = vpack.c.b16 %v1173, %v1172
  %v1211 = vpack.c.b16 %v1175, %v1174
  %v1212 = vpack.c.b16 %v1177, %v1176
  %v1213 = vpack.c.b16 %v1179, %v1178
  %v1214 = vpack.c.b16 %v1181, %v1180
  %v1215 = vpack.c.b16 %v1183, %v1182
  %v1216 = vpack.c.b16 %v1185, %v1184
  %v1217 = vpack.c.b16 %v1187, %v1186
  %v1218 = vpack.c.b16 %v1189, %v1188
  %v1219 = vpack.c.b16 %v1191, %v1190
  %v1220 = vpack.c.b16 %v1193, %v1192
  %v1221 = vpack.c.b16 %v1195, %v1194
  %v1222 = vpack.c.b16 %v1197, %v1196
  %v1224 = vsel %vm197, %v1198, 0
  %v1227 = vsel %vm197, %v1199, 0
  %v1230 = vsel %vm197, %v1200, 0
  %v1233 = vsel %vm197, %v1201, 0
  %v1236 = vsel %vm197, %v1202, 0
  %v1239 = vsel %vm197, %v1203, 0
  %v1242 = vsel %vm197, %v1204, 0
  %v1245 = vsel %vm197, %v1205, 0
  %v1248 = vsel %vm197, %v1206, 0
  %v1251 = vsel %vm197, %v1207, 0
  %v1254 = vsel %vm197, %v1208, 0
  %v1257 = vsel %vm197, %v1209, 0
  %v1260 = vsel %vm197, %v1210, 0
  %v1263 = vsel %vm197, %v1211, 0
  %v1266 = vsel %vm197, %v1212, 0
  %v1269 = vsel %vm197, %v1213, 0
  %v1272 = vsel %vm197, %v1214, 0
  %v1275 = vsel %vm197, %v1215, 0
  %v1278 = vsel %vm197, %v1216, 0
  %v1281 = vsel %vm197, %v1217, 0
  %v1284 = vsel %vm197, %v1218, 0
  %v1287 = vsel %vm197, %v1219, 0
  %v1290 = vsel %vm197, %v1220, 0
  %v1293 = vsel %vm197, %v1221, 0
  %v1296 = vsel %vm197, %v1222, 0
  %1298 = vmatprep.subr.bf16.mxu0 0
  %1299 = vmatpush1.bf16.msra.mxu0 %v278
  %1300 = vmatprep.subr.bf16.mxu0 0
  %1301 = vmatpush1.bf16.msra.mxu0 0
  %1302 = vmatprep.subr.bf16.mxu0 0
  %1303 = vmatpush1.bf16.msra.mxu0 0
  %1304 = vmatprep.subr.bf16.mxu0 0
  %1305 = vmatpush1.bf16.msra.mxu0 0
  %1306 = vmatprep.subr.bf16.mxu0 0
  %1307 = vmatpush1.bf16.msra.mxu0 0
  %1308 = vmatprep.subr.bf16.mxu0 0
  %1309 = vmatpush1.bf16.msra.mxu0 0
  %1310 = vmatprep.subr.bf16.mxu0 0
  %1311 = vmatpush1.bf16.msra.mxu0 0
  %1312 = vmatprep.subr.bf16.mxu0 0
  %1313 = vmatpush1.bf16.msra.mxu0 0
  %1314 = vmatprep.subr.bf16.mxu0 0
  %1315 = vmatpush1.bf16.msra.mxu0 0
  %1316 = vmatprep.subr.bf16.mxu0 0
  %1317 = vmatpush1.bf16.msra.mxu0 0
  %1318 = vmatprep.subr.bf16.mxu0 0
  %1319 = vmatpush1.bf16.msra.mxu0 0
  %1320 = vmatprep.subr.bf16.mxu0 0
  %1321 = vmatpush1.bf16.msra.mxu0 0
  %1322 = vmatprep.subr.bf16.mxu0 0
  %1323 = vmatpush1.bf16.msra.mxu0 0
  %1324 = vmatprep.subr.bf16.mxu0 0
  %1325 = vmatpush1.bf16.msra.mxu0 0
  %1326 = vmatprep.subr.bf16.mxu0 0
  %1327 = vmatpush1.bf16.msra.mxu0 0
  %1328 = vmatprep.subr.bf16.mxu0 0
  %1329 = vmatpush1.bf16.msra.mxu0 0
  %1330 = vmatprep.mubr.bf16.mxu0 0
  %1331 = vmatmul.mubr.bf16.gmra.mrb[0].mxu0 %v1224
  %v1332 = vpop.f32.mrb[0].mxu0
  %v1333 = vadd.f32 0.0, %v1332
  %v1334 = vpop.f32.mrb[0].mxu0
  %v1335 = vpop.f32.mrb[0].mxu0
  %v1336 = vadd.f32 0.0, %v1335
  %v1337 = vpop.f32.mrb[0].mxu0
  %1338 = vmatprep.mubr.bf16.mxu0 0
  %1339 = vmatmul.mubr.bf16.gmra.mrb[0].mxu0 %v1227
  %v1340 = vpop.f32.mrb[0].mxu0
  %v1341 = vadd.f32 0.0, %v1340
  %v1342 = vpop.f32.mrb[0].mxu0
  %v1343 = vpop.f32.mrb[0].mxu0
  %v1344 = vadd.f32 0.0, %v1343
  %v1345 = vpop.f32.mrb[0].mxu0
  %1346 = vmatprep.mubr.bf16.mxu0 0
  %1347 = vmatmul.mubr.bf16.gmra.mrb[0].mxu0 %v1230
  %v1348 = vpop.f32.mrb[0].mxu0
  %v1349 = vadd.f32 0.0, %v1348
  %v1350 = vpop.f32.mrb[0].mxu0
  %v1351 = vpop.f32.mrb[0].mxu0
  %v1352 = vadd.f32 0.0, %v1351
  %v1353 = vpop.f32.mrb[0].mxu0
  %1354 = vmatprep.mubr.bf16.mxu0 0
  %1355 = vmatmul.mubr.bf16.gmra.mrb[0].mxu0 %v1233
  %v1356 = vpop.f32.mrb[0].mxu0
  %v1357 = vadd.f32 0.0, %v1356
  %v1358 = vpop.f32.mrb[0].mxu0
  %v1359 = vpop.f32.mrb[0].mxu0
  %v1360 = vadd.f32 0.0, %v1359
  %v1361 = vpop.f32.mrb[0].mxu0
  %1362 = vmatprep.mubr.bf16.mxu0 0
  %1363 = vmatmul.mubr.bf16.gmra.mrb[0].mxu0 %v1236
  %v1364 = vpop.f32.mrb[0].mxu0
  %v1365 = vadd.f32 0.0, %v1364
  %v1366 = vpop.f32.mrb[0].mxu0
  %v1367 = vpop.f32.mrb[0].mxu0
  %v1368 = vadd.f32 0.0, %v1367
  %v1369 = vpop.f32.mrb[0].mxu0
  %1370 = vmatprep.mubr.bf16.mxu0 0
  %1371 = vmatmul.mubr.bf16.gmra.mrb[0].mxu0 %v1239
  %v1372 = vpop.f32.mrb[0].mxu0
  %v1373 = vadd.f32 0.0, %v1372
  %v1374 = vpop.f32.mrb[0].mxu0
  %v1375 = vpop.f32.mrb[0].mxu0
  %v1376 = vadd.f32 0.0, %v1375
  %v1377 = vpop.f32.mrb[0].mxu0
  %1378 = vmatprep.mubr.bf16.mxu0 0
  %1379 = vmatmul.mubr.bf16.gmra.mrb[0].mxu0 %v1242
  %v1380 = vpop.f32.mrb[0].mxu0
  %v1381 = vadd.f32 0.0, %v1380
  %v1382 = vpop.f32.mrb[0].mxu0
  %v1383 = vpop.f32.mrb[0].mxu0
  %v1384 = vadd.f32 0.0, %v1383
  %v1385 = vpop.f32.mrb[0].mxu0
  %1386 = vmatprep.mubr.bf16.mxu0 0
  %1387 = vmatmul.mubr.bf16.gmra.mrb[0].mxu0 %v1245
  %v1388 = vpop.f32.mrb[0].mxu0
  %v1389 = vadd.f32 0.0, %v1388
  %v1390 = vpop.f32.mrb[0].mxu0
  %v1391 = vpop.f32.mrb[0].mxu0
  %v1392 = vadd.f32 0.0, %v1391
  %v1393 = vpop.f32.mrb[0].mxu0
  %1394 = vmatprep.mubr.bf16.mxu0 0
  %1395 = vmatmul.mubr.bf16.gmra.mrb[0].mxu0 %v1248
  %v1396 = vpop.f32.mrb[0].mxu0
  %v1397 = vadd.f32 0.0, %v1396
  %v1398 = vpop.f32.mrb[0].mxu0
  %v1399 = vpop.f32.mrb[0].mxu0
  %v1400 = vadd.f32 0.0, %v1399
  %v1401 = vpop.f32.mrb[0].mxu0
  %1402 = vmatprep.mubr.bf16.mxu0 0
  %1403 = vmatmul.mubr.bf16.gmra.mrb[0].mxu0 %v1251
  %v1404 = vpop.f32.mrb[0].mxu0
  %v1405 = vadd.f32 0.0, %v1404
  %v1406 = vpop.f32.mrb[0].mxu0
  %v1407 = vpop.f32.mrb[0].mxu0
  %v1408 = vadd.f32 0.0, %v1407
  %v1409 = vpop.f32.mrb[0].mxu0
  %1410 = vmatprep.mubr.bf16.mxu0 0
  %1411 = vmatmul.mubr.bf16.gmra.mrb[0].mxu0 %v1254
  %v1412 = vpop.f32.mrb[0].mxu0
  %v1413 = vadd.f32 0.0, %v1412
  %v1414 = vpop.f32.mrb[0].mxu0
  %v1415 = vpop.f32.mrb[0].mxu0
  %v1416 = vadd.f32 0.0, %v1415
  %v1417 = vpop.f32.mrb[0].mxu0
  %1418 = vmatprep.mubr.bf16.mxu0 0
  %1419 = vmatmul.mubr.bf16.gmra.mrb[0].mxu0 %v1257
  %v1420 = vpop.f32.mrb[0].mxu0
  %v1421 = vadd.f32 0.0, %v1420
  %v1422 = vpop.f32.mrb[0].mxu0
  %v1423 = vpop.f32.mrb[0].mxu0
  %v1424 = vadd.f32 0.0, %v1423
  %v1425 = vpop.f32.mrb[0].mxu0
  %1426 = vmatprep.mubr.bf16.mxu0 0
  %1427 = vmatmul.mubr.bf16.gmra.mrb[0].mxu0 %v1260
  %v1428 = vpop.f32.mrb[0].mxu0
  %v1429 = vadd.f32 0.0, %v1428
  %v1430 = vpop.f32.mrb[0].mxu0
  %v1431 = vpop.f32.mrb[0].mxu0
  %v1432 = vadd.f32 0.0, %v1431
  %v1433 = vpop.f32.mrb[0].mxu0
  %1434 = vmatprep.mubr.bf16.mxu0 0
  %1435 = vmatmul.mubr.bf16.gmra.mrb[0].mxu0 %v1263
  %v1436 = vpop.f32.mrb[0].mxu0
  %v1437 = vadd.f32 0.0, %v1436
  %v1438 = vpop.f32.mrb[0].mxu0
  %v1439 = vpop.f32.mrb[0].mxu0
  %v1440 = vadd.f32 0.0, %v1439
  %v1441 = vpop.f32.mrb[0].mxu0
  %1442 = vmatprep.mubr.bf16.mxu0 0
  %1443 = vmatmul.mubr.bf16.gmra.mrb[0].mxu0 %v1266
  %v1444 = vpop.f32.mrb[0].mxu0
  %v1445 = vadd.f32 0.0, %v1444
  %v1446 = vpop.f32.mrb[0].mxu0
  %v1447 = vpop.f32.mrb[0].mxu0
  %v1448 = vadd.f32 0.0, %v1447
  %v1449 = vpop.f32.mrb[0].mxu0
  %1450 = vmatprep.mubr.bf16.mxu0 0
  %1451 = vmatmul.mubr.bf16.gmra.mrb[0].mxu0 %v1269
  %v1452 = vpop.f32.mrb[0].mxu0
  %v1453 = vadd.f32 0.0, %v1452
  %v1454 = vpop.f32.mrb[0].mxu0
  %v1455 = vpop.f32.mrb[0].mxu0
  %v1456 = vadd.f32 0.0, %v1455
  %v1457 = vpop.f32.mrb[0].mxu0
  %1458 = vmatprep.mubr.bf16.mxu0 0
  %1459 = vmatmul.mubr.bf16.gmra.mrb[0].mxu0 %v1272
  %v1460 = vpop.f32.mrb[0].mxu0
  %v1461 = vadd.f32 0.0, %v1460
  %v1462 = vpop.f32.mrb[0].mxu0
  %v1463 = vpop.f32.mrb[0].mxu0
  %v1464 = vadd.f32 0.0, %v1463
  %v1465 = vpop.f32.mrb[0].mxu0
  %1466 = vmatprep.mubr.bf16.mxu0 0
  %1467 = vmatmul.mubr.bf16.gmra.mrb[0].mxu0 %v1275
  %v1468 = vpop.f32.mrb[0].mxu0
  %v1469 = vadd.f32 0.0, %v1468
  %v1470 = vpop.f32.mrb[0].mxu0
  %v1471 = vpop.f32.mrb[0].mxu0
  %v1472 = vadd.f32 0.0, %v1471
  %v1473 = vpop.f32.mrb[0].mxu0
  %1474 = vmatprep.mubr.bf16.mxu0 0
  %1475 = vmatmul.mubr.bf16.gmra.mrb[0].mxu0 %v1278
  %v1476 = vpop.f32.mrb[0].mxu0
  %v1477 = vadd.f32 0.0, %v1476
  %v1478 = vpop.f32.mrb[0].mxu0
  %v1479 = vpop.f32.mrb[0].mxu0
  %v1480 = vadd.f32 0.0, %v1479
  %v1481 = vpop.f32.mrb[0].mxu0
  %1482 = vmatprep.mubr.bf16.mxu0 0
  %1483 = vmatmul.mubr.bf16.gmra.mrb[0].mxu0 %v1281
  %v1484 = vpop.f32.mrb[0].mxu0
  %v1485 = vadd.f32 0.0, %v1484
  %v1486 = vpop.f32.mrb[0].mxu0
  %v1487 = vpop.f32.mrb[0].mxu0
  %v1488 = vadd.f32 0.0, %v1487
  %v1489 = vpop.f32.mrb[0].mxu0
  %1490 = vmatprep.mubr.bf16.mxu0 0
  %1491 = vmatmul.mubr.bf16.gmra.mrb[0].mxu0 %v1284
  %v1492 = vpop.f32.mrb[0].mxu0
  %v1493 = vadd.f32 0.0, %v1492
  %v1494 = vpop.f32.mrb[0].mxu0
  %v1495 = vpop.f32.mrb[0].mxu0
  %v1496 = vadd.f32 0.0, %v1495
  %v1497 = vpop.f32.mrb[0].mxu0
  %1498 = vmatprep.mubr.bf16.mxu0 0
  %1499 = vmatmul.mubr.bf16.gmra.mrb[0].mxu0 %v1287
  %v1500 = vpop.f32.mrb[0].mxu0
  %v1501 = vadd.f32 0.0, %v1500
  %v1502 = vpop.f32.mrb[0].mxu0
  %v1503 = vpop.f32.mrb[0].mxu0
  %v1504 = vadd.f32 0.0, %v1503
  %v1505 = vpop.f32.mrb[0].mxu0
  %1506 = vmatprep.mubr.bf16.mxu0 0
  %1507 = vmatmul.mubr.bf16.gmra.mrb[0].mxu0 %v1290
  %v1508 = vpop.f32.mrb[0].mxu0
  %v1509 = vadd.f32 0.0, %v1508
  %v1510 = vpop.f32.mrb[0].mxu0
  %v1511 = vpop.f32.mrb[0].mxu0
  %v1512 = vadd.f32 0.0, %v1511
  %v1513 = vpop.f32.mrb[0].mxu0
  %1514 = vmatprep.mubr.bf16.mxu0 0
  %1515 = vmatmul.mubr.bf16.gmra.mrb[0].mxu0 %v1293
  %v1516 = vpop.f32.mrb[0].mxu0
  %v1517 = vadd.f32 0.0, %v1516
  %v1518 = vpop.f32.mrb[0].mxu0
  %v1519 = vpop.f32.mrb[0].mxu0
  %v1520 = vadd.f32 0.0, %v1519
  %v1521 = vpop.f32.mrb[0].mxu0
  %1522 = vmatprep.mubr.bf16.mxu0 0
  %1523 = vmatmul.mubr.bf16.gmra.mrb[0].mxu0 %v1296
  %v1524 = vpop.f32.mrb[0].mxu0
  %v1525 = vadd.f32 0.0, %v1524
  %v1526 = vpop.f32.mrb[0].mxu0
  %v1527 = vpop.f32.mrb[0].mxu0
  %v1528 = vadd.f32 0.0, %v1527
  %v1529 = vpop.f32.mrb[0].mxu0
  %1530 = vdwg.mxu0
  %v1531 = vmax.f32 %v997, %v1333
  %v1532 = vmax.f32 %v998, %v1336
  %v1533 = vmax.f32 %v999, %v1341
  %v1534 = vmax.f32 %v1000, %v1344
  %v1535 = vmax.f32 %v1001, %v1349
  %v1536 = vmax.f32 %v1002, %v1352
  %v1537 = vmax.f32 %v1003, %v1357
  %v1538 = vmax.f32 %v1004, %v1360
  %v1539 = vmax.f32 %v1005, %v1365
  %v1540 = vmax.f32 %v1006, %v1368
  %v1541 = vmax.f32 %v1007, %v1373
  %v1542 = vmax.f32 %v1008, %v1376
  %v1543 = vmax.f32 %v1009, %v1381
  %v1544 = vmax.f32 %v1010, %v1384
  %v1545 = vmax.f32 %v1011, %v1389
  %v1546 = vmax.f32 %v1012, %v1392
  %v1547 = vmax.f32 %v1013, %v1397
  %v1548 = vmax.f32 %v1014, %v1400
  %v1549 = vmax.f32 %v1015, %v1405
  %v1550 = vmax.f32 %v1016, %v1408
  %v1551 = vmax.f32 %v1017, %v1413
  %v1552 = vmax.f32 %v1018, %v1416
  %v1553 = vmax.f32 %v1019, %v1421
  %v1554 = vmax.f32 %v1020, %v1424
  %v1555 = vmax.f32 %v1021, %v1429
  %v1556 = vmax.f32 %v1022, %v1432
  %v1557 = vmax.f32 %v1023, %v1437
  %v1558 = vmax.f32 %v1024, %v1440
  %v1559 = vmax.f32 %v1025, %v1445
  %v1560 = vmax.f32 %v1026, %v1448
  %v1561 = vmax.f32 %v1027, %v1453
  %v1562 = vmax.f32 %v1028, %v1456
  %v1563 = vmax.f32 %v1029, %v1461
  %v1564 = vmax.f32 %v1030, %v1464
  %v1565 = vmax.f32 %v1031, %v1469
  %v1566 = vmax.f32 %v1032, %v1472
  %v1567 = vmax.f32 %v1033, %v1477
  %v1568 = vmax.f32 %v1034, %v1480
  %v1569 = vmax.f32 %v1035, %v1485
  %v1570 = vmax.f32 %v1036, %v1488
  %v1571 = vmax.f32 %v1037, %v1493
  %v1572 = vmax.f32 %v1038, %v1496
  %v1573 = vmax.f32 %v1039, %v1501
  %v1574 = vmax.f32 %v1040, %v1504
  %v1575 = vmax.f32 %v1041, %v1509
  %v1576 = vmax.f32 %v1042, %v1512
  %v1577 = vmax.f32 %v1043, %v1517
  %v1578 = vmax.f32 %v1044, %v1520
  %v1579 = vmax.f32 %v1045, %v1525
  %v1580 = vmax.f32 %v1046, %v1528
  %s1581 = scalar_lea.vmem %s0, 600
  %v1582 = vld [vmem:[%s1581] sm:$0xf]
  %v1583 = vld [vmem:[%s1581 + $0x4] sm:$0xf]
  %v1584 = vld [vmem:[%s1581 + $0x8] sm:$0xf]
  %v1585 = vld [vmem:[%s1581 + $0xc] sm:$0xf]
  %v1586 = vld [vmem:[%s1581 + $0x10] sm:$0xf]
  %v1587 = vld [vmem:[%s1581 + $0x14] sm:$0xf]
  %v1588 = vld [vmem:[%s1581 + $0x18] sm:$0xf]
  %v1589 = vld [vmem:[%s1581 + $0x1c] sm:$0xf]
  %v1590 = vld [vmem:[%s1581 + $0x20] sm:$0xf]
  %v1591 = vld [vmem:[%s1581 + $0x24] sm:$0xf]
  %v1592 = vld [vmem:[%s1581 + $0x28] sm:$0xf]
  %v1593 = vld [vmem:[%s1581 + $0x2c] sm:$0xf]
  %v1594 = vld [vmem:[%s1581 + $0x30] sm:$0xf]
  %v1595 = vld [vmem:[%s1581 + $0x34] sm:$0xf]
  %v1596 = vld [vmem:[%s1581 + $0x38] sm:$0xf]
  %v1597 = vld [vmem:[%s1581 + $0x3c] sm:$0xf]
  %v1598 = vld [vmem:[%s1581 + $0x40] sm:$0xf]
  %v1599 = vld [vmem:[%s1581 + $0x44] sm:$0xf]
  %v1600 = vld [vmem:[%s1581 + $0x48] sm:$0xf]
  %v1601 = vld [vmem:[%s1581 + $0x4c] sm:$0xf]
  %v1602 = vld [vmem:[%s1581 + $0x50] sm:$0xf]
  %v1603 = vld [vmem:[%s1581 + $0x54] sm:$0xf]
  %v1604 = vld [vmem:[%s1581 + $0x58] sm:$0xf]
  %v1605 = vld [vmem:[%s1581 + $0x5c] sm:$0xf]
  %v1606 = vld [vmem:[%s1581 + $0x60] sm:$0xf]
  %v1607 = vld [vmem:[%s1581 + $0x64] sm:$0xf]
  %v1608 = vld [vmem:[%s1581 + $0x68] sm:$0xf]
  %v1609 = vld [vmem:[%s1581 + $0x6c] sm:$0xf]
  %v1610 = vld [vmem:[%s1581 + $0x70] sm:$0xf]
  %v1611 = vld [vmem:[%s1581 + $0x74] sm:$0xf]
  %v1612 = vld [vmem:[%s1581 + $0x78] sm:$0xf]
  %v1613 = vld [vmem:[%s1581 + $0x7c] sm:$0xf]
  %v1614 = vld [vmem:[%s1581 + $0x80] sm:$0xf]
  %v1615 = vld [vmem:[%s1581 + $0x84] sm:$0xf]
  %v1616 = vld [vmem:[%s1581 + $0x88] sm:$0xf]
  %v1617 = vld [vmem:[%s1581 + $0x8c] sm:$0xf]
  %v1618 = vld [vmem:[%s1581 + $0x90] sm:$0xf]
  %v1619 = vld [vmem:[%s1581 + $0x94] sm:$0xf]
  %v1620 = vld [vmem:[%s1581 + $0x98] sm:$0xf]
  %v1621 = vld [vmem:[%s1581 + $0x9c] sm:$0xf]
  %v1622 = vld [vmem:[%s1581 + $0xa0] sm:$0xf]
  %v1623 = vld [vmem:[%s1581 + $0xa4] sm:$0xf]
  %v1624 = vld [vmem:[%s1581 + $0xa8] sm:$0xf]
  %v1625 = vld [vmem:[%s1581 + $0xac] sm:$0xf]
  %v1626 = vld [vmem:[%s1581 + $0xb0] sm:$0xf]
  %v1627 = vld [vmem:[%s1581 + $0xb4] sm:$0xf]
  %v1628 = vld [vmem:[%s1581 + $0xb8] sm:$0xf]
  %v1629 = vld [vmem:[%s1581 + $0xbc] sm:$0xf]
  %v1630 = vld [vmem:[%s1581 + $0xc0] sm:$0xf]
  %v1631 = vld [vmem:[%s1581 + $0xc4] sm:$0xf]
  %v1682 = vunpack.c.l.b16 %v1582
  %v1683 = vunpack.c.l.b16 %v1583
  %v1684 = vunpack.c.l.b16 %v1584
  %v1685 = vunpack.c.l.b16 %v1585
  %v1686 = vunpack.c.l.b16 %v1586
  %v1687 = vunpack.c.l.b16 %v1587
  %v1688 = vunpack.c.l.b16 %v1588
  %v1689 = vunpack.c.l.b16 %v1589
  %v1690 = vunpack.c.l.b16 %v1590
  %v1691 = vunpack.c.l.b16 %v1591
  %v1692 = vunpack.c.l.b16 %v1592
  %v1693 = vunpack.c.l.b16 %v1593
  %v1694 = vunpack.c.l.b16 %v1594
  %v1695 = vunpack.c.l.b16 %v1595
  %v1696 = vunpack.c.l.b16 %v1596
  %v1697 = vunpack.c.l.b16 %v1597
  %v1698 = vunpack.c.l.b16 %v1598
  %v1699 = vunpack.c.l.b16 %v1599
  %v1700 = vunpack.c.l.b16 %v1600
  %v1701 = vunpack.c.l.b16 %v1601
  %v1702 = vunpack.c.l.b16 %v1602
  %v1703 = vunpack.c.l.b16 %v1603
  %v1704 = vunpack.c.l.b16 %v1604
  %v1705 = vunpack.c.l.b16 %v1605
  %v1706 = vunpack.c.l.b16 %v1606
  %v1707 = vunpack.c.l.b16 %v1607
  %v1708 = vunpack.c.l.b16 %v1608
  %v1709 = vunpack.c.l.b16 %v1609
  %v1710 = vunpack.c.l.b16 %v1610
  %v1711 = vunpack.c.l.b16 %v1611
  %v1712 = vunpack.c.l.b16 %v1612
  %v1713 = vunpack.c.l.b16 %v1613
  %v1714 = vunpack.c.l.b16 %v1614
  %v1715 = vunpack.c.l.b16 %v1615
  %v1716 = vunpack.c.l.b16 %v1616
  %v1717 = vunpack.c.l.b16 %v1617
  %v1718 = vunpack.c.l.b16 %v1618
  %v1719 = vunpack.c.l.b16 %v1619
  %v1720 = vunpack.c.l.b16 %v1620
  %v1721 = vunpack.c.l.b16 %v1621
  %v1722 = vunpack.c.l.b16 %v1622
  %v1723 = vunpack.c.l.b16 %v1623
  %v1724 = vunpack.c.l.b16 %v1624
  %v1725 = vunpack.c.l.b16 %v1625
  %v1726 = vunpack.c.l.b16 %v1626
  %v1727 = vunpack.c.l.b16 %v1627
  %v1728 = vunpack.c.l.b16 %v1628
  %v1729 = vunpack.c.l.b16 %v1629
  %v1730 = vunpack.c.l.b16 %v1630
  %v1731 = vunpack.c.l.b16 %v1631
  %v1732 = vpack.c.b16 %v1683, %v1682
  %v1733 = vpack.c.b16 %v1685, %v1684
  %v1734 = vpack.c.b16 %v1687, %v1686
  %v1735 = vpack.c.b16 %v1689, %v1688
  %v1736 = vpack.c.b16 %v1691, %v1690
  %v1737 = vpack.c.b16 %v1693, %v1692
  %v1738 = vpack.c.b16 %v1695, %v1694
  %v1739 = vpack.c.b16 %v1697, %v1696
  %v1740 = vpack.c.b16 %v1699, %v1698
  %v1741 = vpack.c.b16 %v1701, %v1700
  %v1742 = vpack.c.b16 %v1703, %v1702
  %v1743 = vpack.c.b16 %v1705, %v1704
  %v1744 = vpack.c.b16 %v1707, %v1706
  %v1745 = vpack.c.b16 %v1709, %v1708
  %v1746 = vpack.c.b16 %v1711, %v1710
  %v1747 = vpack.c.b16 %v1713, %v1712
  %v1748 = vpack.c.b16 %v1715, %v1714
  %v1749 = vpack.c.b16 %v1717, %v1716
  %v1750 = vpack.c.b16 %v1719, %v1718
  %v1751 = vpack.c.b16 %v1721, %v1720
  %v1752 = vpack.c.b16 %v1723, %v1722
  %v1753 = vpack.c.b16 %v1725, %v1724
  %v1754 = vpack.c.b16 %v1727, %v1726
  %v1755 = vpack.c.b16 %v1729, %v1728
  %v1756 = vpack.c.b16 %v1731, %v1730
  %v1758 = vsel %vm197, %v1732, 0
  %v1761 = vsel %vm197, %v1733, 0
  %v1764 = vsel %vm197, %v1734, 0
  %v1767 = vsel %vm197, %v1735, 0
  %v1770 = vsel %vm197, %v1736, 0
  %v1773 = vsel %vm197, %v1737, 0
  %v1776 = vsel %vm197, %v1738, 0
  %v1779 = vsel %vm197, %v1739, 0
  %v1782 = vsel %vm197, %v1740, 0
  %v1785 = vsel %vm197, %v1741, 0
  %v1788 = vsel %vm197, %v1742, 0
  %v1791 = vsel %vm197, %v1743, 0
  %v1794 = vsel %vm197, %v1744, 0
  %v1797 = vsel %vm197, %v1745, 0
  %v1800 = vsel %vm197, %v1746, 0
  %v1803 = vsel %vm197, %v1747, 0
  %v1806 = vsel %vm197, %v1748, 0
  %v1809 = vsel %vm197, %v1749, 0
  %v1812 = vsel %vm197, %v1750, 0
  %v1815 = vsel %vm197, %v1751, 0
  %v1818 = vsel %vm197, %v1752, 0
  %v1821 = vsel %vm197, %v1753, 0
  %v1824 = vsel %vm197, %v1754, 0
  %v1827 = vsel %vm197, %v1755, 0
  %v1830 = vsel %vm197, %v1756, 0
  %1832 = vmatprep.subr.bf16.mxu0 0
  %1833 = vmatpush1.bf16.msra.mxu0 %v278
  %1834 = vmatprep.subr.bf16.mxu0 0
  %1835 = vmatpush1.bf16.msra.mxu0 0
  %1836 = vmatprep.subr.bf16.mxu0 0
  %1837 = vmatpush1.bf16.msra.mxu0 0
  %1838 = vmatprep.subr.bf16.mxu0 0
  %1839 = vmatpush1.bf16.msra.mxu0 0
  %1840 = vmatprep.subr.bf16.mxu0 0
  %1841 = vmatpush1.bf16.msra.mxu0 0
  %1842 = vmatprep.subr.bf16.mxu0 0
  %1843 = vmatpush1.bf16.msra.mxu0 0
  %1844 = vmatprep.subr.bf16.mxu0 0
  %1845 = vmatpush1.bf16.msra.mxu0 0
  %1846 = vmatprep.subr.bf16.mxu0 0
  %1847 = vmatpush1.bf16.msra.mxu0 0
  %1848 = vmatprep.subr.bf16.mxu0 0
  %1849 = vmatpush1.bf16.msra.mxu0 0
  %1850 = vmatprep.subr.bf16.mxu0 0
  %1851 = vmatpush1.bf16.msra.mxu0 0
  %1852 = vmatprep.subr.bf16.mxu0 0
  %1853 = vmatpush1.bf16.msra.mxu0 0
  %1854 = vmatprep.subr.bf16.mxu0 0
  %1855 = vmatpush1.bf16.msra.mxu0 0
  %1856 = vmatprep.subr.bf16.mxu0 0
  %1857 = vmatpush1.bf16.msra.mxu0 0
  %1858 = vmatprep.subr.bf16.mxu0 0
  %1859 = vmatpush1.bf16.msra.mxu0 0
  %1860 = vmatprep.subr.bf16.mxu0 0
  %1861 = vmatpush1.bf16.msra.mxu0 0
  %1862 = vmatprep.subr.bf16.mxu0 0
  %1863 = vmatpush1.bf16.msra.mxu0 0
  %1864 = vmatprep.mubr.bf16.mxu0 0
  %1865 = vmatmul.mubr.bf16.gmra.mrb[0].mxu0 %v1758
  %v1866 = vpop.f32.mrb[0].mxu0
  %v1867 = vadd.f32 0.0, %v1866
  %v1868 = vpop.f32.mrb[0].mxu0
  %v1869 = vpop.f32.mrb[0].mxu0
  %v1870 = vadd.f32 0.0, %v1869
  %v1871 = vpop.f32.mrb[0].mxu0
  %1872 = vmatprep.mubr.bf16.mxu0 0
  %1873 = vmatmul.mubr.bf16.gmra.mrb[0].mxu0 %v1761
  %v1874 = vpop.f32.mrb[0].mxu0
  %v1875 = vadd.f32 0.0, %v1874
  %v1876 = vpop.f32.mrb[0].mxu0
  %v1877 = vpop.f32.mrb[0].mxu0
  %v1878 = vadd.f32 0.0, %v1877
  %v1879 = vpop.f32.mrb[0].mxu0
  %1880 = vmatprep.mubr.bf16.mxu0 0
  %1881 = vmatmul.mubr.bf16.gmra.mrb[0].mxu0 %v1764
  %v1882 = vpop.f32.mrb[0].mxu0
  %v1883 = vadd.f32 0.0, %v1882
  %v1884 = vpop.f32.mrb[0].mxu0
  %v1885 = vpop.f32.mrb[0].mxu0
  %v1886 = vadd.f32 0.0, %v1885
  %v1887 = vpop.f32.mrb[0].mxu0
  %1888 = vmatprep.mubr.bf16.mxu0 0
  %1889 = vmatmul.mubr.bf16.gmra.mrb[0].mxu0 %v1767
  %v1890 = vpop.f32.mrb[0].mxu0
  %v1891 = vadd.f32 0.0, %v1890
  %v1892 = vpop.f32.mrb[0].mxu0
  %v1893 = vpop.f32.mrb[0].mxu0
  %v1894 = vadd.f32 0.0, %v1893
  %v1895 = vpop.f32.mrb[0].mxu0
  %1896 = vmatprep.mubr.bf16.mxu0 0
  %1897 = vmatmul.mubr.bf16.gmra.mrb[0].mxu0 %v1770
  %v1898 = vpop.f32.mrb[0].mxu0
  %v1899 = vadd.f32 0.0, %v1898
  %v1900 = vpop.f32.mrb[0].mxu0
  %v1901 = vpop.f32.mrb[0].mxu0
  %v1902 = vadd.f32 0.0, %v1901
  %v1903 = vpop.f32.mrb[0].mxu0
  %1904 = vmatprep.mubr.bf16.mxu0 0
  %1905 = vmatmul.mubr.bf16.gmra.mrb[0].mxu0 %v1773
  %v1906 = vpop.f32.mrb[0].mxu0
  %v1907 = vadd.f32 0.0, %v1906
  %v1908 = vpop.f32.mrb[0].mxu0
  %v1909 = vpop.f32.mrb[0].mxu0
  %v1910 = vadd.f32 0.0, %v1909
  %v1911 = vpop.f32.mrb[0].mxu0
  %1912 = vmatprep.mubr.bf16.mxu0 0
  %1913 = vmatmul.mubr.bf16.gmra.mrb[0].mxu0 %v1776
  %v1914 = vpop.f32.mrb[0].mxu0
  %v1915 = vadd.f32 0.0, %v1914
  %v1916 = vpop.f32.mrb[0].mxu0
  %v1917 = vpop.f32.mrb[0].mxu0
  %v1918 = vadd.f32 0.0, %v1917
  %v1919 = vpop.f32.mrb[0].mxu0
  %1920 = vmatprep.mubr.bf16.mxu0 0
  %1921 = vmatmul.mubr.bf16.gmra.mrb[0].mxu0 %v1779
  %v1922 = vpop.f32.mrb[0].mxu0
  %v1923 = vadd.f32 0.0, %v1922
  %v1924 = vpop.f32.mrb[0].mxu0
  %v1925 = vpop.f32.mrb[0].mxu0
  %v1926 = vadd.f32 0.0, %v1925
  %v1927 = vpop.f32.mrb[0].mxu0
  %1928 = vmatprep.mubr.bf16.mxu0 0
  %1929 = vmatmul.mubr.bf16.gmra.mrb[0].mxu0 %v1782
  %v1930 = vpop.f32.mrb[0].mxu0
  %v1931 = vadd.f32 0.0, %v1930
  %v1932 = vpop.f32.mrb[0].mxu0
  %v1933 = vpop.f32.mrb[0].mxu0
  %v1934 = vadd.f32 0.0, %v1933
  %v1935 = vpop.f32.mrb[0].mxu0
  %1936 = vmatprep.mubr.bf16.mxu0 0
  %1937 = vmatmul.mubr.bf16.gmra.mrb[0].mxu0 %v1785
  %v1938 = vpop.f32.mrb[0].mxu0
  %v1939 = vadd.f32 0.0, %v1938
  %v1940 = vpop.f32.mrb[0].mxu0
  %v1941 = vpop.f32.mrb[0].mxu0
  %v1942 = vadd.f32 0.0, %v1941
  %v1943 = vpop.f32.mrb[0].mxu0
  %1944 = vmatprep.mubr.bf16.mxu0 0
  %1945 = vmatmul.mubr.bf16.gmra.mrb[0].mxu0 %v1788
  %v1946 = vpop.f32.mrb[0].mxu0
  %v1947 = vadd.f32 0.0, %v1946
  %v1948 = vpop.f32.mrb[0].mxu0
  %v1949 = vpop.f32.mrb[0].mxu0
  %v1950 = vadd.f32 0.0, %v1949
  %v1951 = vpop.f32.mrb[0].mxu0
  %1952 = vmatprep.mubr.bf16.mxu0 0
  %1953 = vmatmul.mubr.bf16.gmra.mrb[0].mxu0 %v1791
  %v1954 = vpop.f32.mrb[0].mxu0
  %v1955 = vadd.f32 0.0, %v1954
  %v1956 = vpop.f32.mrb[0].mxu0
  %v1957 = vpop.f32.mrb[0].mxu0
  %v1958 = vadd.f32 0.0, %v1957
  %v1959 = vpop.f32.mrb[0].mxu0
  %1960 = vmatprep.mubr.bf16.mxu0 0
  %1961 = vmatmul.mubr.bf16.gmra.mrb[0].mxu0 %v1794
  %v1962 = vpop.f32.mrb[0].mxu0
  %v1963 = vadd.f32 0.0, %v1962
  %v1964 = vpop.f32.mrb[0].mxu0
  %v1965 = vpop.f32.mrb[0].mxu0
  %v1966 = vadd.f32 0.0, %v1965
  %v1967 = vpop.f32.mrb[0].mxu0
  %1968 = vmatprep.mubr.bf16.mxu0 0
  %1969 = vmatmul.mubr.bf16.gmra.mrb[0].mxu0 %v1797
  %v1970 = vpop.f32.mrb[0].mxu0
  %v1971 = vadd.f32 0.0, %v1970
  %v1972 = vpop.f32.mrb[0].mxu0
  %v1973 = vpop.f32.mrb[0].mxu0
  %v1974 = vadd.f32 0.0, %v1973
  %v1975 = vpop.f32.mrb[0].mxu0
  %1976 = vmatprep.mubr.bf16.mxu0 0
  %1977 = vmatmul.mubr.bf16.gmra.mrb[0].mxu0 %v1800
  %v1978 = vpop.f32.mrb[0].mxu0
  %v1979 = vadd.f32 0.0, %v1978
  %v1980 = vpop.f32.mrb[0].mxu0
  %v1981 = vpop.f32.mrb[0].mxu0
  %v1982 = vadd.f32 0.0, %v1981
  %v1983 = vpop.f32.mrb[0].mxu0
  %1984 = vmatprep.mubr.bf16.mxu0 0
  %1985 = vmatmul.mubr.bf16.gmra.mrb[0].mxu0 %v1803
  %v1986 = vpop.f32.mrb[0].mxu0
  %v1987 = vadd.f32 0.0, %v1986
  %v1988 = vpop.f32.mrb[0].mxu0
  %v1989 = vpop.f32.mrb[0].mxu0
  %v1990 = vadd.f32 0.0, %v1989
  %v1991 = vpop.f32.mrb[0].mxu0
  %1992 = vmatprep.mubr.bf16.mxu0 0
  %1993 = vmatmul.mubr.bf16.gmra.mrb[0].mxu0 %v1806
  %v1994 = vpop.f32.mrb[0].mxu0
  %v1995 = vadd.f32 0.0, %v1994
  %v1996 = vpop.f32.mrb[0].mxu0
  %v1997 = vpop.f32.mrb[0].mxu0
  %v1998 = vadd.f32 0.0, %v1997
  %v1999 = vpop.f32.mrb[0].mxu0
  %2000 = vmatprep.mubr.bf16.mxu0 0
  %2001 = vmatmul.mubr.bf16.gmra.mrb[0].mxu0 %v1809
  %v2002 = vpop.f32.mrb[0].mxu0
  %v2003 = vadd.f32 0.0, %v2002
  %v2004 = vpop.f32.mrb[0].mxu0
  %v2005 = vpop.f32.mrb[0].mxu0
  %v2006 = vadd.f32 0.0, %v2005
  %v2007 = vpop.f32.mrb[0].mxu0
  %2008 = vmatprep.mubr.bf16.mxu0 0
  %2009 = vmatmul.mubr.bf16.gmra.mrb[0].mxu0 %v1812
  %v2010 = vpop.f32.mrb[0].mxu0
  %v2011 = vadd.f32 0.0, %v2010
  %v2012 = vpop.f32.mrb[0].mxu0
  %v2013 = vpop.f32.mrb[0].mxu0
  %v2014 = vadd.f32 0.0, %v2013
  %v2015 = vpop.f32.mrb[0].mxu0
  %2016 = vmatprep.mubr.bf16.mxu0 0
  %2017 = vmatmul.mubr.bf16.gmra.mrb[0].mxu0 %v1815
  %v2018 = vpop.f32.mrb[0].mxu0
  %v2019 = vadd.f32 0.0, %v2018
  %v2020 = vpop.f32.mrb[0].mxu0
  %v2021 = vpop.f32.mrb[0].mxu0
  %v2022 = vadd.f32 0.0, %v2021
  %v2023 = vpop.f32.mrb[0].mxu0
  %2024 = vmatprep.mubr.bf16.mxu0 0
  %2025 = vmatmul.mubr.bf16.gmra.mrb[0].mxu0 %v1818
  %v2026 = vpop.f32.mrb[0].mxu0
  %v2027 = vadd.f32 0.0, %v2026
  %v2028 = vpop.f32.mrb[0].mxu0
  %v2029 = vpop.f32.mrb[0].mxu0
  %v2030 = vadd.f32 0.0, %v2029
  %v2031 = vpop.f32.mrb[0].mxu0
  %2032 = vmatprep.mubr.bf16.mxu0 0
  %2033 = vmatmul.mubr.bf16.gmra.mrb[0].mxu0 %v1821
  %v2034 = vpop.f32.mrb[0].mxu0
  %v2035 = vadd.f32 0.0, %v2034
  %v2036 = vpop.f32.mrb[0].mxu0
  %v2037 = vpop.f32.mrb[0].mxu0
  %v2038 = vadd.f32 0.0, %v2037
  %v2039 = vpop.f32.mrb[0].mxu0
  %2040 = vmatprep.mubr.bf16.mxu0 0
  %2041 = vmatmul.mubr.bf16.gmra.mrb[0].mxu0 %v1824
  %v2042 = vpop.f32.mrb[0].mxu0
  %v2043 = vadd.f32 0.0, %v2042
  %v2044 = vpop.f32.mrb[0].mxu0
  %v2045 = vpop.f32.mrb[0].mxu0
  %v2046 = vadd.f32 0.0, %v2045
  %v2047 = vpop.f32.mrb[0].mxu0
  %2048 = vmatprep.mubr.bf16.mxu0 0
  %2049 = vmatmul.mubr.bf16.gmra.mrb[0].mxu0 %v1827
  %v2050 = vpop.f32.mrb[0].mxu0
  %v2051 = vadd.f32 0.0, %v2050
  %v2052 = vpop.f32.mrb[0].mxu0
  %v2053 = vpop.f32.mrb[0].mxu0
  %v2054 = vadd.f32 0.0, %v2053
  %v2055 = vpop.f32.mrb[0].mxu0
  %2056 = vmatprep.mubr.bf16.mxu0 0
  %2057 = vmatmul.mubr.bf16.gmra.mrb[0].mxu0 %v1830
  %v2058 = vpop.f32.mrb[0].mxu0
  %v2059 = vadd.f32 0.0, %v2058
  %v2060 = vpop.f32.mrb[0].mxu0
  %v2061 = vpop.f32.mrb[0].mxu0
  %v2062 = vadd.f32 0.0, %v2061
  %v2063 = vpop.f32.mrb[0].mxu0
  %2064 = vdwg.mxu0
  %v2065 = vmax.f32 %v1531, %v1867
  %v2066 = vmax.f32 %v1532, %v1870
  %v2067 = vmax.f32 %v1533, %v1875
  %v2068 = vmax.f32 %v1534, %v1878
  %v2069 = vmax.f32 %v1535, %v1883
  %v2070 = vmax.f32 %v1536, %v1886
  %v2071 = vmax.f32 %v1537, %v1891
  %v2072 = vmax.f32 %v1538, %v1894
  %v2073 = vmax.f32 %v1539, %v1899
  %v2074 = vmax.f32 %v1540, %v1902
  %v2075 = vmax.f32 %v1541, %v1907
  %v2076 = vmax.f32 %v1542, %v1910
  %v2077 = vmax.f32 %v1543, %v1915
  %v2078 = vmax.f32 %v1544, %v1918
  %v2079 = vmax.f32 %v1545, %v1923
  %v2080 = vmax.f32 %v1546, %v1926
  %v2081 = vmax.f32 %v1547, %v1931
  %v2082 = vmax.f32 %v1548, %v1934
  %v2083 = vmax.f32 %v1549, %v1939
  %v2084 = vmax.f32 %v1550, %v1942
  %v2085 = vmax.f32 %v1551, %v1947
  %v2086 = vmax.f32 %v1552, %v1950
  %v2087 = vmax.f32 %v1553, %v1955
  %v2088 = vmax.f32 %v1554, %v1958
  %v2089 = vmax.f32 %v1555, %v1963
  %v2090 = vmax.f32 %v1556, %v1966
  %v2091 = vmax.f32 %v1557, %v1971
  %v2092 = vmax.f32 %v1558, %v1974
  %v2093 = vmax.f32 %v1559, %v1979
  %v2094 = vmax.f32 %v1560, %v1982
  %v2095 = vmax.f32 %v1561, %v1987
  %v2096 = vmax.f32 %v1562, %v1990
  %v2097 = vmax.f32 %v1563, %v1995
  %v2098 = vmax.f32 %v1564, %v1998
  %v2099 = vmax.f32 %v1565, %v2003
  %v2100 = vmax.f32 %v1566, %v2006
  %v2101 = vmax.f32 %v1567, %v2011
  %v2102 = vmax.f32 %v1568, %v2014
  %v2103 = vmax.f32 %v1569, %v2019
  %v2104 = vmax.f32 %v1570, %v2022
  %v2105 = vmax.f32 %v1571, %v2027
  %v2106 = vmax.f32 %v1572, %v2030
  %v2107 = vmax.f32 %v1573, %v2035
  %v2108 = vmax.f32 %v1574, %v2038
  %v2109 = vmax.f32 %v1575, %v2043
  %v2110 = vmax.f32 %v1576, %v2046
  %v2111 = vmax.f32 %v1577, %v2051
  %v2112 = vmax.f32 %v1578, %v2054
  %v2113 = vmax.f32 %v1579, %v2059
  %v2114 = vmax.f32 %v1580, %v2062
  %v2115 = vld [vmem:[%s2] sm:$0x1]
  %v2117 = vlaneseq
  %v2118 = vshrl.u32 %v2117, 7
  %v2119 = vsub.s32 0, %v2118
  %v2120 = vrot.slane %v2115, %v2119
  %v2122 = vadd.f32 %v2065, %v2120
  %v2123 = vadd.f32 %v2066, %v2120
  %v2124 = vadd.f32 %v2067, %v2120
  %v2125 = vadd.f32 %v2068, %v2120
  %v2126 = vadd.f32 %v2069, %v2120
  %v2127 = vadd.f32 %v2070, %v2120
  %v2128 = vadd.f32 %v2071, %v2120
  %v2129 = vadd.f32 %v2072, %v2120
  %v2130 = vadd.f32 %v2073, %v2120
  %v2131 = vadd.f32 %v2074, %v2120
  %v2132 = vadd.f32 %v2075, %v2120
  %v2133 = vadd.f32 %v2076, %v2120
  %v2134 = vadd.f32 %v2077, %v2120
  %v2135 = vadd.f32 %v2078, %v2120
  %v2136 = vadd.f32 %v2079, %v2120
  %v2137 = vadd.f32 %v2080, %v2120
  %v2138 = vadd.f32 %v2081, %v2120
  %v2139 = vadd.f32 %v2082, %v2120
  %v2140 = vadd.f32 %v2083, %v2120
  %v2141 = vadd.f32 %v2084, %v2120
  %v2142 = vadd.f32 %v2085, %v2120
  %v2143 = vadd.f32 %v2086, %v2120
  %v2144 = vadd.f32 %v2087, %v2120
  %v2145 = vadd.f32 %v2088, %v2120
  %v2146 = vadd.f32 %v2089, %v2120
  %v2147 = vadd.f32 %v2090, %v2120
  %v2148 = vadd.f32 %v2091, %v2120
  %v2149 = vadd.f32 %v2092, %v2120
  %v2150 = vadd.f32 %v2093, %v2120
  %v2151 = vadd.f32 %v2094, %v2120
  %v2152 = vadd.f32 %v2095, %v2120
  %v2153 = vadd.f32 %v2096, %v2120
  %v2154 = vadd.f32 %v2097, %v2120
  %v2155 = vadd.f32 %v2098, %v2120
  %v2156 = vadd.f32 %v2099, %v2120
  %v2157 = vadd.f32 %v2100, %v2120
  %v2158 = vadd.f32 %v2101, %v2120
  %v2159 = vadd.f32 %v2102, %v2120
  %v2160 = vadd.f32 %v2103, %v2120
  %v2161 = vadd.f32 %v2104, %v2120
  %v2162 = vadd.f32 %v2105, %v2120
  %v2163 = vadd.f32 %v2106, %v2120
  %v2164 = vadd.f32 %v2107, %v2120
  %v2165 = vadd.f32 %v2108, %v2120
  %v2166 = vadd.f32 %v2109, %v2120
  %v2167 = vadd.f32 %v2110, %v2120
  %v2168 = vadd.f32 %v2111, %v2120
  %v2169 = vadd.f32 %v2112, %v2120
  %v2170 = vadd.f32 %v2113, %v2120
  %v2171 = vadd.f32 %v2114, %v2120
  %v2172 = vmax.f32 %v2122, 0.0
  %v2173 = vmax.f32 %v2123, 0.0
  %v2174 = vmax.f32 %v2124, 0.0
  %v2175 = vmax.f32 %v2125, 0.0
  %v2176 = vmax.f32 %v2126, 0.0
  %v2177 = vmax.f32 %v2127, 0.0
  %v2178 = vmax.f32 %v2128, 0.0
  %v2179 = vmax.f32 %v2129, 0.0
  %v2180 = vmax.f32 %v2130, 0.0
  %v2181 = vmax.f32 %v2131, 0.0
  %v2182 = vmax.f32 %v2132, 0.0
  %v2183 = vmax.f32 %v2133, 0.0
  %v2184 = vmax.f32 %v2134, 0.0
  %v2185 = vmax.f32 %v2135, 0.0
  %v2186 = vmax.f32 %v2136, 0.0
  %v2187 = vmax.f32 %v2137, 0.0
  %v2188 = vmax.f32 %v2138, 0.0
  %v2189 = vmax.f32 %v2139, 0.0
  %v2190 = vmax.f32 %v2140, 0.0
  %v2191 = vmax.f32 %v2141, 0.0
  %v2192 = vmax.f32 %v2142, 0.0
  %v2193 = vmax.f32 %v2143, 0.0
  %v2194 = vmax.f32 %v2144, 0.0
  %v2195 = vmax.f32 %v2145, 0.0
  %v2196 = vmax.f32 %v2146, 0.0
  %v2197 = vmax.f32 %v2147, 0.0
  %v2198 = vmax.f32 %v2148, 0.0
  %v2199 = vmax.f32 %v2149, 0.0
  %v2200 = vmax.f32 %v2150, 0.0
  %v2201 = vmax.f32 %v2151, 0.0
  %v2202 = vmax.f32 %v2152, 0.0
  %v2203 = vmax.f32 %v2153, 0.0
  %v2204 = vmax.f32 %v2154, 0.0
  %v2205 = vmax.f32 %v2155, 0.0
  %v2206 = vmax.f32 %v2156, 0.0
  %v2207 = vmax.f32 %v2157, 0.0
  %v2208 = vmax.f32 %v2158, 0.0
  %v2209 = vmax.f32 %v2159, 0.0
  %v2210 = vmax.f32 %v2160, 0.0
  %v2211 = vmax.f32 %v2161, 0.0
  %v2212 = vmax.f32 %v2162, 0.0
  %v2213 = vmax.f32 %v2163, 0.0
  %v2214 = vmax.f32 %v2164, 0.0
  %v2215 = vmax.f32 %v2165, 0.0
  %v2216 = vmax.f32 %v2166, 0.0
  %v2217 = vmax.f32 %v2167, 0.0
  %v2218 = vmax.f32 %v2168, 0.0
  %v2219 = vmax.f32 %v2169, 0.0
  %v2220 = vmax.f32 %v2170, 0.0
  %v2221 = vmax.f32 %v2171, 0.0
  %v2222 = vpack.c.bf16 %v2173, %v2172
  %v2223 = vpack.c.bf16 %v2175, %v2174
  %v2224 = vpack.c.bf16 %v2177, %v2176
  %v2225 = vpack.c.bf16 %v2179, %v2178
  %v2226 = vpack.c.bf16 %v2181, %v2180
  %v2227 = vpack.c.bf16 %v2183, %v2182
  %v2228 = vpack.c.bf16 %v2185, %v2184
  %v2229 = vpack.c.bf16 %v2187, %v2186
  %v2230 = vpack.c.bf16 %v2189, %v2188
  %v2231 = vpack.c.bf16 %v2191, %v2190
  %v2232 = vpack.c.bf16 %v2193, %v2192
  %v2233 = vpack.c.bf16 %v2195, %v2194
  %v2234 = vpack.c.bf16 %v2197, %v2196
  %v2235 = vpack.c.bf16 %v2199, %v2198
  %v2236 = vpack.c.bf16 %v2201, %v2200
  %v2237 = vpack.c.bf16 %v2203, %v2202
  %v2238 = vpack.c.bf16 %v2205, %v2204
  %v2239 = vpack.c.bf16 %v2207, %v2206
  %v2240 = vpack.c.bf16 %v2209, %v2208
  %v2241 = vpack.c.bf16 %v2211, %v2210
  %v2242 = vpack.c.bf16 %v2213, %v2212
  %v2243 = vpack.c.bf16 %v2215, %v2214
  %v2244 = vpack.c.bf16 %v2217, %v2216
  %v2245 = vpack.c.bf16 %v2219, %v2218
  %v2246 = vpack.c.bf16 %v2221, %v2220
  %v2272 = vunpack.c.l.b16 %v2222
  %v2273 = vunpack.c.h.b16 %v2222
  %v2274 = vunpack.c.l.b16 %v2223
  %v2275 = vunpack.c.h.b16 %v2223
  %v2276 = vunpack.c.l.b16 %v2224
  %v2277 = vunpack.c.h.b16 %v2224
  %v2278 = vunpack.c.l.b16 %v2225
  %v2279 = vunpack.c.h.b16 %v2225
  %v2280 = vunpack.c.l.b16 %v2226
  %v2281 = vunpack.c.h.b16 %v2226
  %v2282 = vunpack.c.l.b16 %v2227
  %v2283 = vunpack.c.h.b16 %v2227
  %v2284 = vunpack.c.l.b16 %v2228
  %v2285 = vunpack.c.h.b16 %v2228
  %v2286 = vunpack.c.l.b16 %v2229
  %v2287 = vunpack.c.h.b16 %v2229
  %v2288 = vunpack.c.l.b16 %v2230
  %v2289 = vunpack.c.h.b16 %v2230
  %v2290 = vunpack.c.l.b16 %v2231
  %v2291 = vunpack.c.h.b16 %v2231
  %v2292 = vunpack.c.l.b16 %v2232
  %v2293 = vunpack.c.h.b16 %v2232
  %v2294 = vunpack.c.l.b16 %v2233
  %v2295 = vunpack.c.h.b16 %v2233
  %v2296 = vunpack.c.l.b16 %v2234
  %v2297 = vunpack.c.h.b16 %v2234
  %v2298 = vunpack.c.l.b16 %v2235
  %v2299 = vunpack.c.h.b16 %v2235
  %v2300 = vunpack.c.l.b16 %v2236
  %v2301 = vunpack.c.h.b16 %v2236
  %v2302 = vunpack.c.l.b16 %v2237
  %v2303 = vunpack.c.h.b16 %v2237
  %v2304 = vunpack.c.l.b16 %v2238
  %v2305 = vunpack.c.h.b16 %v2238
  %v2306 = vunpack.c.l.b16 %v2239
  %v2307 = vunpack.c.h.b16 %v2239
  %v2308 = vunpack.c.l.b16 %v2240
  %v2309 = vunpack.c.h.b16 %v2240
  %v2310 = vunpack.c.l.b16 %v2241
  %v2311 = vunpack.c.h.b16 %v2241
  %v2312 = vunpack.c.l.b16 %v2242
  %v2313 = vunpack.c.h.b16 %v2242
  %v2314 = vunpack.c.l.b16 %v2243
  %v2315 = vunpack.c.h.b16 %v2243
  %v2316 = vunpack.c.l.b16 %v2244
  %v2317 = vunpack.c.h.b16 %v2244
  %v2318 = vunpack.c.l.b16 %v2245
  %v2319 = vunpack.c.h.b16 %v2245
  %v2320 = vunpack.c.l.b16 %v2246
  %v2321 = vunpack.c.h.b16 %v2246
  %v2322 = vpack.c.b16 %v2272, %v2272
  %v2323 = vpack.c.b16 %v2273, %v2273
  %v2324 = vpack.c.b16 %v2274, %v2274
  %v2325 = vpack.c.b16 %v2275, %v2275
  %v2326 = vpack.c.b16 %v2276, %v2276
  %v2327 = vpack.c.b16 %v2277, %v2277
  %v2328 = vpack.c.b16 %v2278, %v2278
  %v2329 = vpack.c.b16 %v2279, %v2279
  %v2330 = vpack.c.b16 %v2280, %v2280
  %v2331 = vpack.c.b16 %v2281, %v2281
  %v2332 = vpack.c.b16 %v2282, %v2282
  %v2333 = vpack.c.b16 %v2283, %v2283
  %v2334 = vpack.c.b16 %v2284, %v2284
  %v2335 = vpack.c.b16 %v2285, %v2285
  %v2336 = vpack.c.b16 %v2286, %v2286
  %v2337 = vpack.c.b16 %v2287, %v2287
  %v2338 = vpack.c.b16 %v2288, %v2288
  %v2339 = vpack.c.b16 %v2289, %v2289
  %v2340 = vpack.c.b16 %v2290, %v2290
  %v2341 = vpack.c.b16 %v2291, %v2291
  %v2342 = vpack.c.b16 %v2292, %v2292
  %v2343 = vpack.c.b16 %v2293, %v2293
  %v2344 = vpack.c.b16 %v2294, %v2294
  %v2345 = vpack.c.b16 %v2295, %v2295
  %v2346 = vpack.c.b16 %v2296, %v2296
  %v2347 = vpack.c.b16 %v2297, %v2297
  %v2348 = vpack.c.b16 %v2298, %v2298
  %v2349 = vpack.c.b16 %v2299, %v2299
  %v2350 = vpack.c.b16 %v2300, %v2300
  %v2351 = vpack.c.b16 %v2301, %v2301
  %v2352 = vpack.c.b16 %v2302, %v2302
  %v2353 = vpack.c.b16 %v2303, %v2303
  %v2354 = vpack.c.b16 %v2304, %v2304
  %v2355 = vpack.c.b16 %v2305, %v2305
  %v2356 = vpack.c.b16 %v2306, %v2306
  %v2357 = vpack.c.b16 %v2307, %v2307
  %v2358 = vpack.c.b16 %v2308, %v2308
  %v2359 = vpack.c.b16 %v2309, %v2309
  %v2360 = vpack.c.b16 %v2310, %v2310
  %v2361 = vpack.c.b16 %v2311, %v2311
  %v2362 = vpack.c.b16 %v2312, %v2312
  %v2363 = vpack.c.b16 %v2313, %v2313
  %v2364 = vpack.c.b16 %v2314, %v2314
  %v2365 = vpack.c.b16 %v2315, %v2315
  %v2366 = vpack.c.b16 %v2316, %v2316
  %v2367 = vpack.c.b16 %v2317, %v2317
  %v2368 = vpack.c.b16 %v2318, %v2318
  %v2369 = vpack.c.b16 %v2319, %v2319
  %v2370 = vpack.c.b16 %v2320, %v2320
  %v2371 = vpack.c.b16 %v2321, %v2321
  %vm2422 = vcmask 125952
  %2423 = vst.msk [vmem:[%s3] sm:$0xf] %vm2422, %v2322
  %2424 = vst.msk [vmem:[%s3 + $0x4] sm:$0xf] %vm2422, %v2323
  %2425 = vst.msk [vmem:[%s3 + $0x8] sm:$0xf] %vm2422, %v2324
  %2426 = vst.msk [vmem:[%s3 + $0xc] sm:$0xf] %vm2422, %v2325
  %2427 = vst.msk [vmem:[%s3 + $0x10] sm:$0xf] %vm2422, %v2326
  %2428 = vst.msk [vmem:[%s3 + $0x14] sm:$0xf] %vm2422, %v2327
  %2429 = vst.msk [vmem:[%s3 + $0x18] sm:$0xf] %vm2422, %v2328
  %2430 = vst.msk [vmem:[%s3 + $0x1c] sm:$0xf] %vm2422, %v2329
  %2431 = vst.msk [vmem:[%s3 + $0x20] sm:$0xf] %vm2422, %v2330
  %2432 = vst.msk [vmem:[%s3 + $0x24] sm:$0xf] %vm2422, %v2331
  %2433 = vst.msk [vmem:[%s3 + $0x28] sm:$0xf] %vm2422, %v2332
  %2434 = vst.msk [vmem:[%s3 + $0x2c] sm:$0xf] %vm2422, %v2333
  %2435 = vst.msk [vmem:[%s3 + $0x30] sm:$0xf] %vm2422, %v2334
  %2436 = vst.msk [vmem:[%s3 + $0x34] sm:$0xf] %vm2422, %v2335
  %2437 = vst.msk [vmem:[%s3 + $0x38] sm:$0xf] %vm2422, %v2336
  %2438 = vst.msk [vmem:[%s3 + $0x3c] sm:$0xf] %vm2422, %v2337
  %2439 = vst.msk [vmem:[%s3 + $0x40] sm:$0xf] %vm2422, %v2338
  %2440 = vst.msk [vmem:[%s3 + $0x44] sm:$0xf] %vm2422, %v2339
  %2441 = vst.msk [vmem:[%s3 + $0x48] sm:$0xf] %vm2422, %v2340
  %2442 = vst.msk [vmem:[%s3 + $0x4c] sm:$0xf] %vm2422, %v2341
  %2443 = vst.msk [vmem:[%s3 + $0x50] sm:$0xf] %vm2422, %v2342
  %2444 = vst.msk [vmem:[%s3 + $0x54] sm:$0xf] %vm2422, %v2343
  %2445 = vst.msk [vmem:[%s3 + $0x58] sm:$0xf] %vm2422, %v2344
  %2446 = vst.msk [vmem:[%s3 + $0x5c] sm:$0xf] %vm2422, %v2345
  %2447 = vst.msk [vmem:[%s3 + $0x60] sm:$0xf] %vm2422, %v2346
  %2448 = vst.msk [vmem:[%s3 + $0x64] sm:$0xf] %vm2422, %v2347
  %2449 = vst.msk [vmem:[%s3 + $0x68] sm:$0xf] %vm2422, %v2348
  %2450 = vst.msk [vmem:[%s3 + $0x6c] sm:$0xf] %vm2422, %v2349
  %2451 = vst.msk [vmem:[%s3 + $0x70] sm:$0xf] %vm2422, %v2350
  %2452 = vst.msk [vmem:[%s3 + $0x74] sm:$0xf] %vm2422, %v2351
  %2453 = vst.msk [vmem:[%s3 + $0x78] sm:$0xf] %vm2422, %v2352
  %2454 = vst.msk [vmem:[%s3 + $0x7c] sm:$0xf] %vm2422, %v2353
  %2455 = vst.msk [vmem:[%s3 + $0x80] sm:$0xf] %vm2422, %v2354
  %2456 = vst.msk [vmem:[%s3 + $0x84] sm:$0xf] %vm2422, %v2355
  %2457 = vst.msk [vmem:[%s3 + $0x88] sm:$0xf] %vm2422, %v2356
  %2458 = vst.msk [vmem:[%s3 + $0x8c] sm:$0xf] %vm2422, %v2357
  %2459 = vst.msk [vmem:[%s3 + $0x90] sm:$0xf] %vm2422, %v2358
  %2460 = vst.msk [vmem:[%s3 + $0x94] sm:$0xf] %vm2422, %v2359
  %2461 = vst.msk [vmem:[%s3 + $0x98] sm:$0xf] %vm2422, %v2360
  %2462 = vst.msk [vmem:[%s3 + $0x9c] sm:$0xf] %vm2422, %v2361
  %2463 = vst.msk [vmem:[%s3 + $0xa0] sm:$0xf] %vm2422, %v2362
  %2464 = vst.msk [vmem:[%s3 + $0xa4] sm:$0xf] %vm2422, %v2363
  %2465 = vst.msk [vmem:[%s3 + $0xa8] sm:$0xf] %vm2422, %v2364
  %2466 = vst.msk [vmem:[%s3 + $0xac] sm:$0xf] %vm2422, %v2365
  %2467 = vst.msk [vmem:[%s3 + $0xb0] sm:$0xf] %vm2422, %v2366
  %2468 = vst.msk [vmem:[%s3 + $0xb4] sm:$0xf] %vm2422, %v2367
  %2469 = vst.msk [vmem:[%s3 + $0xb8] sm:$0xf] %vm2422, %v2368
  %2470 = vst.msk [vmem:[%s3 + $0xbc] sm:$0xf] %vm2422, %v2369
  %2471 = vst.msk [vmem:[%s3 + $0xc0] sm:$0xf] %vm2422, %v2370
  %2472 = vst.msk [vmem:[%s3 + $0xc4] sm:$0xf] %vm2422, %v2371
  // Predicated region
  $region14: #{light_cnn_forward.3} parent=0 // pred_check
    _
  $region15: #{light_cnn_forward.3} parent=0 // pred_check_branch
    %2474 = sbr.rel (0) target = $region17
  $region16: #{light_cnn_forward.3} parent=0 // pred_region
    _
  $region17: #{light_cnn_forward.3} parent=0 // pred_fallthru
    _
  // Predicated region
  $region18: #{light_cnn_forward.3} parent=0 // pred_check
    _
  $region19: #{light_cnn_forward.3} parent=0 // pred_check_branch
    %2476 = sbr.rel (0) target = $region21
  $region20: #{light_cnn_forward.3} parent=0 // pred_region
    _
  $region21: #{light_cnn_forward.3} parent=0 // pred_fallthru
    _

// kernel: light_cnn_forward.4
$region0: #{light_cnn_forward.4}
  #allocation0 [shape = 'u32[]', space=smem, size = 0x4, offset = 0x4, fixed_abs, tag = 'smem constant byte address 0x4 - core index']
  #allocation1 [shape = 'u32[144,128]{1,0:T(1,128)}', space=vmem, size = 0x12000, scoped, tag = 'internal scratch']
  %s0 = inlined_call_operand.vmem [shape: bf16[4,112,144], index: 0, kind: input, shape index: {}]
  %s1 = inlined_call_operand.vmem [shape: bf16[144,32], index: 1, kind: input, shape index: {}]
  %s2 = inlined_call_operand.vmem [shape: f32[1,32], index: 2, kind: input, shape index: {}]
  %s3 = inlined_call_operand.vmem [shape: bf16[112,32], index: 3, kind: output, shape index: {}]
  %s4 = sld [smem:[#allocation0]]
  $region22: #{light_cnn_forward.4} parent=0
    _
  %s6 = ssub.s32 1, %s4
  %s7 = scalar_select 0, %s6, %s4
  // Predicated region
  $region2: #{light_cnn_forward.4} parent=0 // pred_check
    _
  $region3: #{light_cnn_forward.4} parent=0 // pred_check_branch
    %9 = sbr.rel (0) target = $region5
  $region4: #{light_cnn_forward.4} parent=0 // pred_region
    _
  $region5: #{light_cnn_forward.4} parent=0 // pred_fallthru
    _
  // Predicated region
  $region6: #{light_cnn_forward.4} parent=0 // pred_check
    _
  $region7: #{light_cnn_forward.4} parent=0 // pred_check_branch
    %11 = sbr.rel (0) target = $region9
  $region8: #{light_cnn_forward.4} parent=0 // pred_region
    _
  $region9: #{light_cnn_forward.4} parent=0 // pred_fallthru
    _
  // Predicated region
  $region10: #{light_cnn_forward.4} parent=0 // pred_check
    _
  $region11: #{light_cnn_forward.4} parent=0 // pred_check_branch
    %13 = sbr.rel (0) target = $region13
  $region12: #{light_cnn_forward.4} parent=0 // pred_region
    _
  $region13: #{light_cnn_forward.4} parent=0 // pred_fallthru
    _
  %v15 = vld [vmem:[%s1] sm:$0xf]
  %v16 = vld [vmem:[%s1 + $0x4] sm:$0xf]
  %v17 = vld [vmem:[%s1 + $0x8] sm:$0xf]
  %v18 = vld [vmem:[%s1 + $0xc] sm:$0xf]
  %v19 = vld [vmem:[%s1 + $0x10] sm:$0xf]
  %v20 = vld [vmem:[%s1 + $0x14] sm:$0xf]
  %v21 = vld [vmem:[%s1 + $0x18] sm:$0xf]
  %v22 = vld [vmem:[%s1 + $0x1c] sm:$0xf]
  %v23 = vld [vmem:[%s1 + $0x20] sm:$0xf]
  %v24 = vld [vmem:[%s1 + $0x24] sm:$0xf]
  %v25 = vld [vmem:[%s1 + $0x28] sm:$0xf]
  %v26 = vld [vmem:[%s1 + $0x2c] sm:$0xf]
  %v27 = vld [vmem:[%s1 + $0x30] sm:$0xf]
  %v28 = vld [vmem:[%s1 + $0x34] sm:$0xf]
  %v29 = vld [vmem:[%s1 + $0x38] sm:$0xf]
  %v30 = vld [vmem:[%s1 + $0x3c] sm:$0xf]
  %v31 = vld [vmem:[%s1 + $0x40] sm:$0xf]
  %v32 = vld [vmem:[%s1 + $0x44] sm:$0xf]
  %v33 = vld [vmem:[%s0] sm:$0xff]
  %v34 = vld [vmem:[%s0 + $0x8] sm:$0xff]
  %v35 = vld [vmem:[%s0 + $0x10] sm:$0xff]
  %v36 = vld [vmem:[%s0 + $0x18] sm:$0xff]
  %v37 = vld [vmem:[%s0 + $0x20] sm:$0xff]
  %v38 = vld [vmem:[%s0 + $0x28] sm:$0xff]
  %v39 = vld [vmem:[%s0 + $0x30] sm:$0xff]
  %v40 = vld [vmem:[%s0 + $0x38] sm:$0xff]
  %v41 = vld [vmem:[%s0 + $0x40] sm:$0xff]
  %v42 = vld [vmem:[%s0 + $0x48] sm:$0xff]
  %v43 = vld [vmem:[%s0 + $0x50] sm:$0xff]
  %v44 = vld [vmem:[%s0 + $0x58] sm:$0xff]
  %v45 = vld [vmem:[%s0 + $0x60] sm:$0xff]
  %v46 = vld [vmem:[%s0 + $0x68] sm:$0xff]
  %v61 = vunpack.c.l.b16 %v33
  %v62 = vunpack.c.h.b16 %v33
  %v63 = vunpack.c.l.b16 %v34
  %v64 = vunpack.c.h.b16 %v34
  %v65 = vunpack.c.l.b16 %v35
  %v66 = vunpack.c.h.b16 %v35
  %v67 = vunpack.c.l.b16 %v36
  %v68 = vunpack.c.h.b16 %v36
  %v69 = vunpack.c.l.b16 %v37
  %v70 = vunpack.c.h.b16 %v37
  %v71 = vunpack.c.l.b16 %v38
  %v72 = vunpack.c.h.b16 %v38
  %v73 = vunpack.c.l.b16 %v39
  %v74 = vunpack.c.h.b16 %v39
  %v75 = vunpack.c.l.b16 %v40
  %v76 = vunpack.c.h.b16 %v40
  %v77 = vunpack.c.l.b16 %v41
  %v78 = vunpack.c.h.b16 %v41
  %v79 = vunpack.c.l.b16 %v42
  %v80 = vunpack.c.h.b16 %v42
  %v81 = vunpack.c.l.b16 %v43
  %v82 = vunpack.c.h.b16 %v43
  %v83 = vunpack.c.l.b16 %v44
  %v84 = vunpack.c.h.b16 %v44
  %v85 = vunpack.c.l.b16 %v45
  %v86 = vunpack.c.h.b16 %v45
  %v87 = vunpack.c.l.b16 %v46
  %v88 = vunpack.c.h.b16 %v46
  %v89 = vpack.c.b16 %v63, %v61
  %v90 = vpack.c.b16 %v64, %v62
  %v91 = vpack.c.b16 %v67, %v65
  %v92 = vpack.c.b16 %v68, %v66
  %v93 = vpack.c.b16 %v71, %v69
  %v94 = vpack.c.b16 %v72, %v70
  %v95 = vpack.c.b16 %v75, %v73
  %v96 = vpack.c.b16 %v76, %v74
  %v97 = vpack.c.b16 %v79, %v77
  %v98 = vpack.c.b16 %v80, %v78
  %v99 = vpack.c.b16 %v83, %v81
  %v100 = vpack.c.b16 %v84, %v82
  %v101 = vpack.c.b16 %v87, %v85
  %v102 = vpack.c.b16 %v88, %v86
  %v128 = vunpack.c.l.b16 %v15
  %v129 = vunpack.c.l.b16 %v16
  %v130 = vunpack.c.l.b16 %v17
  %v131 = vunpack.c.l.b16 %v18
  %v132 = vunpack.c.l.b16 %v19
  %v133 = vunpack.c.l.b16 %v20
  %v134 = vunpack.c.l.b16 %v21
  %v135 = vunpack.c.l.b16 %v22
  %v136 = vunpack.c.l.b16 %v23
  %v137 = vunpack.c.l.b16 %v24
  %v138 = vunpack.c.l.b16 %v25
  %v139 = vunpack.c.l.b16 %v26
  %v140 = vunpack.c.l.b16 %v27
  %v141 = vunpack.c.l.b16 %v28
  %v142 = vunpack.c.l.b16 %v29
  %v143 = vunpack.c.l.b16 %v30
  %v144 = vunpack.c.l.b16 %v31
  %v145 = vunpack.c.l.b16 %v32
  %v146 = vpack.c.b16 %v129, %v128
  %v147 = vpack.c.b16 %v131, %v130
  %v148 = vpack.c.b16 %v133, %v132
  %v149 = vpack.c.b16 %v135, %v134
  %v150 = vpack.c.b16 %v137, %v136
  %v151 = vpack.c.b16 %v139, %v138
  %v152 = vpack.c.b16 %v141, %v140
  %v153 = vpack.c.b16 %v143, %v142
  %v154 = vpack.c.b16 %v145, %v144
  %vm164 = vcmask 130048
  %v166 = vsel %vm164, %v90, 0
  %v169 = vsel %vm164, %v92, 0
  %v172 = vsel %vm164, %v94, 0
  %v175 = vsel %vm164, %v96, 0
  %v178 = vsel %vm164, %v98, 0
  %v181 = vsel %vm164, %v100, 0
  %v184 = vsel %vm164, %v102, 0
  %186 = vmatprep.subr.bf16.mxu0 0
  %187 = vmatpush1.bf16.msra.mxu0 %v146
  %188 = vmatprep.subr.bf16.mxu0 0
  %189 = vmatpush1.bf16.msra.mxu0 %v147
  %190 = vmatprep.subr.bf16.mxu0 0
  %191 = vmatpush1.bf16.msra.mxu0 %v148
  %192 = vmatprep.subr.bf16.mxu0 0
  %193 = vmatpush1.bf16.msra.mxu0 %v149
  %194 = vmatprep.subr.bf16.mxu0 0
  %195 = vmatpush1.bf16.msra.mxu0 %v150
  %196 = vmatprep.subr.bf16.mxu0 0
  %197 = vmatpush1.bf16.msra.mxu0 %v151
  %198 = vmatprep.subr.bf16.mxu0 0
  %199 = vmatpush1.bf16.msra.mxu0 %v152
  %200 = vmatprep.subr.bf16.mxu0 0
  %201 = vmatpush1.bf16.msra.mxu0 %v153
  %202 = vmatprep.subr.bf16.mxu0 0
  %203 = vmatpush1.bf16.msra.mxu0 %v154
  %204 = vmatprep.subr.bf16.mxu0 0
  %205 = vmatpush1.bf16.msra.mxu0 0
  %206 = vmatprep.subr.bf16.mxu0 0
  %207 = vmatpush1.bf16.msra.mxu0 0
  %208 = vmatprep.subr.bf16.mxu0 0
  %209 = vmatpush1.bf16.msra.mxu0 0
  %210 = vmatprep.subr.bf16.mxu0 0
  %211 = vmatpush1.bf16.msra.mxu0 0
  %212 = vmatprep.subr.bf16.mxu0 0
  %213 = vmatpush1.bf16.msra.mxu0 0
  %214 = vmatprep.subr.bf16.mxu0 0
  %215 = vmatpush1.bf16.msra.mxu0 0
  %216 = vmatprep.subr.bf16.mxu0 0
  %217 = vmatpush1.bf16.msra.mxu0 0
  %218 = vmatprep.mubr.bf16.mxu0 %v166
  %219 = vmatmul.mubr.bf16.gmra.mrb[0].mxu0 %v89
  %v220 = vpop.f32.mrb[0].mxu0
  %v221 = vadd.f32 0.0, %v220
  %v222 = vpop.f32.mrb[0].mxu0
  %v223 = vpop.f32.mrb[0].mxu0
  %v224 = vadd.f32 0.0, %v223
  %v225 = vpop.f32.mrb[0].mxu0
  %226 = vmatprep.mubr.bf16.mxu0 %v169
  %227 = vmatmul.mubr.bf16.gmra.mrb[0].mxu0 %v91
  %v228 = vpop.f32.mrb[0].mxu0
  %v229 = vadd.f32 0.0, %v228
  %v230 = vpop.f32.mrb[0].mxu0
  %v231 = vpop.f32.mrb[0].mxu0
  %v232 = vadd.f32 0.0, %v231
  %v233 = vpop.f32.mrb[0].mxu0
  %234 = vmatprep.mubr.bf16.mxu0 %v172
  %235 = vmatmul.mubr.bf16.gmra.mrb[0].mxu0 %v93
  %v236 = vpop.f32.mrb[0].mxu0
  %v237 = vadd.f32 0.0, %v236
  %v238 = vpop.f32.mrb[0].mxu0
  %v239 = vpop.f32.mrb[0].mxu0
  %v240 = vadd.f32 0.0, %v239
  %v241 = vpop.f32.mrb[0].mxu0
  %242 = vmatprep.mubr.bf16.mxu0 %v175
  %243 = vmatmul.mubr.bf16.gmra.mrb[0].mxu0 %v95
  %v244 = vpop.f32.mrb[0].mxu0
  %v245 = vadd.f32 0.0, %v244
  %v246 = vpop.f32.mrb[0].mxu0
  %v247 = vpop.f32.mrb[0].mxu0
  %v248 = vadd.f32 0.0, %v247
  %v249 = vpop.f32.mrb[0].mxu0
  %250 = vmatprep.mubr.bf16.mxu0 %v178
  %251 = vmatmul.mubr.bf16.gmra.mrb[0].mxu0 %v97
  %v252 = vpop.f32.mrb[0].mxu0
  %v253 = vadd.f32 0.0, %v252
  %v254 = vpop.f32.mrb[0].mxu0
  %v255 = vpop.f32.mrb[0].mxu0
  %v256 = vadd.f32 0.0, %v255
  %v257 = vpop.f32.mrb[0].mxu0
  %258 = vmatprep.mubr.bf16.mxu0 %v181
  %259 = vmatmul.mubr.bf16.gmra.mrb[0].mxu0 %v99
  %v260 = vpop.f32.mrb[0].mxu0
  %v261 = vadd.f32 0.0, %v260
  %v262 = vpop.f32.mrb[0].mxu0
  %v263 = vpop.f32.mrb[0].mxu0
  %v264 = vadd.f32 0.0, %v263
  %v265 = vpop.f32.mrb[0].mxu0
  %266 = vmatprep.mubr.bf16.mxu0 %v184
  %267 = vmatmul.mubr.bf16.gmra.mrb[0].mxu0 %v101
  %v268 = vpop.f32.mrb[0].mxu0
  %v269 = vadd.f32 0.0, %v268
  %v270 = vpop.f32.mrb[0].mxu0
  %v271 = vpop.f32.mrb[0].mxu0
  %v272 = vadd.f32 0.0, %v271
  %v273 = vpop.f32.mrb[0].mxu0
  %274 = vdwg.mxu0
  %s275 = scalar_lea.vmem %s0, 112
  %v276 = vld [vmem:[%s275] sm:$0xff]
  %v277 = vld [vmem:[%s275 + $0x8] sm:$0xff]
  %v278 = vld [vmem:[%s275 + $0x10] sm:$0xff]
  %v279 = vld [vmem:[%s275 + $0x18] sm:$0xff]
  %v280 = vld [vmem:[%s275 + $0x20] sm:$0xff]
  %v281 = vld [vmem:[%s275 + $0x28] sm:$0xff]
  %v282 = vld [vmem:[%s275 + $0x30] sm:$0xff]
  %v283 = vld [vmem:[%s275 + $0x38] sm:$0xff]
  %v284 = vld [vmem:[%s275 + $0x40] sm:$0xff]
  %v285 = vld [vmem:[%s275 + $0x48] sm:$0xff]
  %v286 = vld [vmem:[%s275 + $0x50] sm:$0xff]
  %v287 = vld [vmem:[%s275 + $0x58] sm:$0xff]
  %v288 = vld [vmem:[%s275 + $0x60] sm:$0xff]
  %v289 = vld [vmem:[%s275 + $0x68] sm:$0xff]
  %v304 = vunpack.c.l.b16 %v276
  %v305 = vunpack.c.h.b16 %v276
  %v306 = vunpack.c.l.b16 %v277
  %v307 = vunpack.c.h.b16 %v277
  %v308 = vunpack.c.l.b16 %v278
  %v309 = vunpack.c.h.b16 %v278
  %v310 = vunpack.c.l.b16 %v279
  %v311 = vunpack.c.h.b16 %v279
  %v312 = vunpack.c.l.b16 %v280
  %v313 = vunpack.c.h.b16 %v280
  %v314 = vunpack.c.l.b16 %v281
  %v315 = vunpack.c.h.b16 %v281
  %v316 = vunpack.c.l.b16 %v282
  %v317 = vunpack.c.h.b16 %v282
  %v318 = vunpack.c.l.b16 %v283
  %v319 = vunpack.c.h.b16 %v283
  %v320 = vunpack.c.l.b16 %v284
  %v321 = vunpack.c.h.b16 %v284
  %v322 = vunpack.c.l.b16 %v285
  %v323 = vunpack.c.h.b16 %v285
  %v324 = vunpack.c.l.b16 %v286
  %v325 = vunpack.c.h.b16 %v286
  %v326 = vunpack.c.l.b16 %v287
  %v327 = vunpack.c.h.b16 %v287
  %v328 = vunpack.c.l.b16 %v288
  %v329 = vunpack.c.h.b16 %v288
  %v330 = vunpack.c.l.b16 %v289
  %v331 = vunpack.c.h.b16 %v289
  %v332 = vpack.c.b16 %v306, %v304
  %v333 = vpack.c.b16 %v307, %v305
  %v334 = vpack.c.b16 %v310, %v308
  %v335 = vpack.c.b16 %v311, %v309
  %v336 = vpack.c.b16 %v314, %v312
  %v337 = vpack.c.b16 %v315, %v313
  %v338 = vpack.c.b16 %v318, %v316
  %v339 = vpack.c.b16 %v319, %v317
  %v340 = vpack.c.b16 %v322, %v320
  %v341 = vpack.c.b16 %v323, %v321
  %v342 = vpack.c.b16 %v326, %v324
  %v343 = vpack.c.b16 %v327, %v325
  %v344 = vpack.c.b16 %v330, %v328
  %v345 = vpack.c.b16 %v331, %v329
  %v354 = vsel %vm164, %v333, 0
  %v357 = vsel %vm164, %v335, 0
  %v360 = vsel %vm164, %v337, 0
  %v363 = vsel %vm164, %v339, 0
  %v366 = vsel %vm164, %v341, 0
  %v369 = vsel %vm164, %v343, 0
  %v372 = vsel %vm164, %v345, 0
  %374 = vmatprep.subr.bf16.mxu0 0
  %375 = vmatpush1.bf16.msra.mxu0 %v146
  %376 = vmatprep.subr.bf16.mxu0 0
  %377 = vmatpush1.bf16.msra.mxu0 %v147
  %378 = vmatprep.subr.bf16.mxu0 0
  %379 = vmatpush1.bf16.msra.mxu0 %v148
  %380 = vmatprep.subr.bf16.mxu0 0
  %381 = vmatpush1.bf16.msra.mxu0 %v149
  %382 = vmatprep.subr.bf16.mxu0 0
  %383 = vmatpush1.bf16.msra.mxu0 %v150
  %384 = vmatprep.subr.bf16.mxu0 0
  %385 = vmatpush1.bf16.msra.mxu0 %v151
  %386 = vmatprep.subr.bf16.mxu0 0
  %387 = vmatpush1.bf16.msra.mxu0 %v152
  %388 = vmatprep.subr.bf16.mxu0 0
  %389 = vmatpush1.bf16.msra.mxu0 %v153
  %390 = vmatprep.subr.bf16.mxu0 0
  %391 = vmatpush1.bf16.msra.mxu0 %v154
  %392 = vmatprep.subr.bf16.mxu0 0
  %393 = vmatpush1.bf16.msra.mxu0 0
  %394 = vmatprep.subr.bf16.mxu0 0
  %395 = vmatpush1.bf16.msra.mxu0 0
  %396 = vmatprep.subr.bf16.mxu0 0
  %397 = vmatpush1.bf16.msra.mxu0 0
  %398 = vmatprep.subr.bf16.mxu0 0
  %399 = vmatpush1.bf16.msra.mxu0 0
  %400 = vmatprep.subr.bf16.mxu0 0
  %401 = vmatpush1.bf16.msra.mxu0 0
  %402 = vmatprep.subr.bf16.mxu0 0
  %403 = vmatpush1.bf16.msra.mxu0 0
  %404 = vmatprep.subr.bf16.mxu0 0
  %405 = vmatpush1.bf16.msra.mxu0 0
  %406 = vmatprep.mubr.bf16.mxu0 %v354
  %407 = vmatmul.mubr.bf16.gmra.mrb[0].mxu0 %v332
  %v408 = vpop.f32.mrb[0].mxu0
  %v409 = vadd.f32 0.0, %v408
  %v410 = vpop.f32.mrb[0].mxu0
  %v411 = vpop.f32.mrb[0].mxu0
  %v412 = vadd.f32 0.0, %v411
  %v413 = vpop.f32.mrb[0].mxu0
  %414 = vmatprep.mubr.bf16.mxu0 %v357
  %415 = vmatmul.mubr.bf16.gmra.mrb[0].mxu0 %v334
  %v416 = vpop.f32.mrb[0].mxu0
  %v417 = vadd.f32 0.0, %v416
  %v418 = vpop.f32.mrb[0].mxu0
  %v419 = vpop.f32.mrb[0].mxu0
  %v420 = vadd.f32 0.0, %v419
  %v421 = vpop.f32.mrb[0].mxu0
  %422 = vmatprep.mubr.bf16.mxu0 %v360
  %423 = vmatmul.mubr.bf16.gmra.mrb[0].mxu0 %v336
  %v424 = vpop.f32.mrb[0].mxu0
  %v425 = vadd.f32 0.0, %v424
  %v426 = vpop.f32.mrb[0].mxu0
  %v427 = vpop.f32.mrb[0].mxu0
  %v428 = vadd.f32 0.0, %v427
  %v429 = vpop.f32.mrb[0].mxu0
  %430 = vmatprep.mubr.bf16.mxu0 %v363
  %431 = vmatmul.mubr.bf16.gmra.mrb[0].mxu0 %v338
  %v432 = vpop.f32.mrb[0].mxu0
  %v433 = vadd.f32 0.0, %v432
  %v434 = vpop.f32.mrb[0].mxu0
  %v435 = vpop.f32.mrb[0].mxu0
  %v436 = vadd.f32 0.0, %v435
  %v437 = vpop.f32.mrb[0].mxu0
  %438 = vmatprep.mubr.bf16.mxu0 %v366
  %439 = vmatmul.mubr.bf16.gmra.mrb[0].mxu0 %v340
  %v440 = vpop.f32.mrb[0].mxu0
  %v441 = vadd.f32 0.0, %v440
  %v442 = vpop.f32.mrb[0].mxu0
  %v443 = vpop.f32.mrb[0].mxu0
  %v444 = vadd.f32 0.0, %v443
  %v445 = vpop.f32.mrb[0].mxu0
  %446 = vmatprep.mubr.bf16.mxu0 %v369
  %447 = vmatmul.mubr.bf16.gmra.mrb[0].mxu0 %v342
  %v448 = vpop.f32.mrb[0].mxu0
  %v449 = vadd.f32 0.0, %v448
  %v450 = vpop.f32.mrb[0].mxu0
  %v451 = vpop.f32.mrb[0].mxu0
  %v452 = vadd.f32 0.0, %v451
  %v453 = vpop.f32.mrb[0].mxu0
  %454 = vmatprep.mubr.bf16.mxu0 %v372
  %455 = vmatmul.mubr.bf16.gmra.mrb[0].mxu0 %v344
  %v456 = vpop.f32.mrb[0].mxu0
  %v457 = vadd.f32 0.0, %v456
  %v458 = vpop.f32.mrb[0].mxu0
  %v459 = vpop.f32.mrb[0].mxu0
  %v460 = vadd.f32 0.0, %v459
  %v461 = vpop.f32.mrb[0].mxu0
  %462 = vdwg.mxu0
  %v463 = vmax.f32 %v221, %v409
  %v464 = vmax.f32 %v224, %v412
  %v465 = vmax.f32 %v229, %v417
  %v466 = vmax.f32 %v232, %v420
  %v467 = vmax.f32 %v237, %v425
  %v468 = vmax.f32 %v240, %v428
  %v469 = vmax.f32 %v245, %v433
  %v470 = vmax.f32 %v248, %v436
  %v471 = vmax.f32 %v253, %v441
  %v472 = vmax.f32 %v256, %v444
  %v473 = vmax.f32 %v261, %v449
  %v474 = vmax.f32 %v264, %v452
  %v475 = vmax.f32 %v269, %v457
  %v476 = vmax.f32 %v272, %v460
  %s477 = scalar_lea.vmem %s0, 224
  %v478 = vld [vmem:[%s477] sm:$0xff]
  %v479 = vld [vmem:[%s477 + $0x8] sm:$0xff]
  %v480 = vld [vmem:[%s477 + $0x10] sm:$0xff]
  %v481 = vld [vmem:[%s477 + $0x18] sm:$0xff]
  %v482 = vld [vmem:[%s477 + $0x20] sm:$0xff]
  %v483 = vld [vmem:[%s477 + $0x28] sm:$0xff]
  %v484 = vld [vmem:[%s477 + $0x30] sm:$0xff]
  %v485 = vld [vmem:[%s477 + $0x38] sm:$0xff]
  %v486 = vld [vmem:[%s477 + $0x40] sm:$0xff]
  %v487 = vld [vmem:[%s477 + $0x48] sm:$0xff]
  %v488 = vld [vmem:[%s477 + $0x50] sm:$0xff]
  %v489 = vld [vmem:[%s477 + $0x58] sm:$0xff]
  %v490 = vld [vmem:[%s477 + $0x60] sm:$0xff]
  %v491 = vld [vmem:[%s477 + $0x68] sm:$0xff]
  %v506 = vunpack.c.l.b16 %v478
  %v507 = vunpack.c.h.b16 %v478
  %v508 = vunpack.c.l.b16 %v479
  %v509 = vunpack.c.h.b16 %v479
  %v510 = vunpack.c.l.b16 %v480
  %v511 = vunpack.c.h.b16 %v480
  %v512 = vunpack.c.l.b16 %v481
  %v513 = vunpack.c.h.b16 %v481
  %v514 = vunpack.c.l.b16 %v482
  %v515 = vunpack.c.h.b16 %v482
  %v516 = vunpack.c.l.b16 %v483
  %v517 = vunpack.c.h.b16 %v483
  %v518 = vunpack.c.l.b16 %v484
  %v519 = vunpack.c.h.b16 %v484
  %v520 = vunpack.c.l.b16 %v485
  %v521 = vunpack.c.h.b16 %v485
  %v522 = vunpack.c.l.b16 %v486
  %v523 = vunpack.c.h.b16 %v486
  %v524 = vunpack.c.l.b16 %v487
  %v525 = vunpack.c.h.b16 %v487
  %v526 = vunpack.c.l.b16 %v488
  %v527 = vunpack.c.h.b16 %v488
  %v528 = vunpack.c.l.b16 %v489
  %v529 = vunpack.c.h.b16 %v489
  %v530 = vunpack.c.l.b16 %v490
  %v531 = vunpack.c.h.b16 %v490
  %v532 = vunpack.c.l.b16 %v491
  %v533 = vunpack.c.h.b16 %v491
  %v534 = vpack.c.b16 %v508, %v506
  %v535 = vpack.c.b16 %v509, %v507
  %v536 = vpack.c.b16 %v512, %v510
  %v537 = vpack.c.b16 %v513, %v511
  %v538 = vpack.c.b16 %v516, %v514
  %v539 = vpack.c.b16 %v517, %v515
  %v540 = vpack.c.b16 %v520, %v518
  %v541 = vpack.c.b16 %v521, %v519
  %v542 = vpack.c.b16 %v524, %v522
  %v543 = vpack.c.b16 %v525, %v523
  %v544 = vpack.c.b16 %v528, %v526
  %v545 = vpack.c.b16 %v529, %v527
  %v546 = vpack.c.b16 %v532, %v530
  %v547 = vpack.c.b16 %v533, %v531
  %v556 = vsel %vm164, %v535, 0
  %v559 = vsel %vm164, %v537, 0
  %v562 = vsel %vm164, %v539, 0
  %v565 = vsel %vm164, %v541, 0
  %v568 = vsel %vm164, %v543, 0
  %v571 = vsel %vm164, %v545, 0
  %v574 = vsel %vm164, %v547, 0
  %576 = vmatprep.subr.bf16.mxu0 0
  %577 = vmatpush1.bf16.msra.mxu0 %v146
  %578 = vmatprep.subr.bf16.mxu0 0
  %579 = vmatpush1.bf16.msra.mxu0 %v147
  %580 = vmatprep.subr.bf16.mxu0 0
  %581 = vmatpush1.bf16.msra.mxu0 %v148
  %582 = vmatprep.subr.bf16.mxu0 0
  %583 = vmatpush1.bf16.msra.mxu0 %v149
  %584 = vmatprep.subr.bf16.mxu0 0
  %585 = vmatpush1.bf16.msra.mxu0 %v150
  %586 = vmatprep.subr.bf16.mxu0 0
  %587 = vmatpush1.bf16.msra.mxu0 %v151
  %588 = vmatprep.subr.bf16.mxu0 0
  %589 = vmatpush1.bf16.msra.mxu0 %v152
  %590 = vmatprep.subr.bf16.mxu0 0
  %591 = vmatpush1.bf16.msra.mxu0 %v153
  %592 = vmatprep.subr.bf16.mxu0 0
  %593 = vmatpush1.bf16.msra.mxu0 %v154
  %594 = vmatprep.subr.bf16.mxu0 0
  %595 = vmatpush1.bf16.msra.mxu0 0
  %596 = vmatprep.subr.bf16.mxu0 0
  %597 = vmatpush1.bf16.msra.mxu0 0
  %598 = vmatprep.subr.bf16.mxu0 0
  %599 = vmatpush1.bf16.msra.mxu0 0
  %600 = vmatprep.subr.bf16.mxu0 0
  %601 = vmatpush1.bf16.msra.mxu0 0
  %602 = vmatprep.subr.bf16.mxu0 0
  %603 = vmatpush1.bf16.msra.mxu0 0
  %604 = vmatprep.subr.bf16.mxu0 0
  %605 = vmatpush1.bf16.msra.mxu0 0
  %606 = vmatprep.subr.bf16.mxu0 0
  %607 = vmatpush1.bf16.msra.mxu0 0
  %608 = vmatprep.mubr.bf16.mxu0 %v556
  %609 = vmatmul.mubr.bf16.gmra.mrb[0].mxu0 %v534
  %v610 = vpop.f32.mrb[0].mxu0
  %v611 = vadd.f32 0.0, %v610
  %v612 = vpop.f32.mrb[0].mxu0
  %v613 = vpop.f32.mrb[0].mxu0
  %v614 = vadd.f32 0.0, %v613
  %v615 = vpop.f32.mrb[0].mxu0
  %616 = vmatprep.mubr.bf16.mxu0 %v559
  %617 = vmatmul.mubr.bf16.gmra.mrb[0].mxu0 %v536
  %v618 = vpop.f32.mrb[0].mxu0
  %v619 = vadd.f32 0.0, %v618
  %v620 = vpop.f32.mrb[0].mxu0
  %v621 = vpop.f32.mrb[0].mxu0
  %v622 = vadd.f32 0.0, %v621
  %v623 = vpop.f32.mrb[0].mxu0
  %624 = vmatprep.mubr.bf16.mxu0 %v562
  %625 = vmatmul.mubr.bf16.gmra.mrb[0].mxu0 %v538
  %v626 = vpop.f32.mrb[0].mxu0
  %v627 = vadd.f32 0.0, %v626
  %v628 = vpop.f32.mrb[0].mxu0
  %v629 = vpop.f32.mrb[0].mxu0
  %v630 = vadd.f32 0.0, %v629
  %v631 = vpop.f32.mrb[0].mxu0
  %632 = vmatprep.mubr.bf16.mxu0 %v565
  %633 = vmatmul.mubr.bf16.gmra.mrb[0].mxu0 %v540
  %v634 = vpop.f32.mrb[0].mxu0
  %v635 = vadd.f32 0.0, %v634
  %v636 = vpop.f32.mrb[0].mxu0
  %v637 = vpop.f32.mrb[0].mxu0
  %v638 = vadd.f32 0.0, %v637
  %v639 = vpop.f32.mrb[0].mxu0
  %640 = vmatprep.mubr.bf16.mxu0 %v568
  %641 = vmatmul.mubr.bf16.gmra.mrb[0].mxu0 %v542
  %v642 = vpop.f32.mrb[0].mxu0
  %v643 = vadd.f32 0.0, %v642
  %v644 = vpop.f32.mrb[0].mxu0
  %v645 = vpop.f32.mrb[0].mxu0
  %v646 = vadd.f32 0.0, %v645
  %v647 = vpop.f32.mrb[0].mxu0
  %648 = vmatprep.mubr.bf16.mxu0 %v571
  %649 = vmatmul.mubr.bf16.gmra.mrb[0].mxu0 %v544
  %v650 = vpop.f32.mrb[0].mxu0
  %v651 = vadd.f32 0.0, %v650
  %v652 = vpop.f32.mrb[0].mxu0
  %v653 = vpop.f32.mrb[0].mxu0
  %v654 = vadd.f32 0.0, %v653
  %v655 = vpop.f32.mrb[0].mxu0
  %656 = vmatprep.mubr.bf16.mxu0 %v574
  %657 = vmatmul.mubr.bf16.gmra.mrb[0].mxu0 %v546
  %v658 = vpop.f32.mrb[0].mxu0
  %v659 = vadd.f32 0.0, %v658
  %v660 = vpop.f32.mrb[0].mxu0
  %v661 = vpop.f32.mrb[0].mxu0
  %v662 = vadd.f32 0.0, %v661
  %v663 = vpop.f32.mrb[0].mxu0
  %664 = vdwg.mxu0
  %v665 = vmax.f32 %v463, %v611
  %v666 = vmax.f32 %v464, %v614
  %v667 = vmax.f32 %v465, %v619
  %v668 = vmax.f32 %v466, %v622
  %v669 = vmax.f32 %v467, %v627
  %v670 = vmax.f32 %v468, %v630
  %v671 = vmax.f32 %v469, %v635
  %v672 = vmax.f32 %v470, %v638
  %v673 = vmax.f32 %v471, %v643
  %v674 = vmax.f32 %v472, %v646
  %v675 = vmax.f32 %v473, %v651
  %v676 = vmax.f32 %v474, %v654
  %v677 = vmax.f32 %v475, %v659
  %v678 = vmax.f32 %v476, %v662
  %s679 = scalar_lea.vmem %s0, 336
  %v680 = vld [vmem:[%s679] sm:$0xff]
  %v681 = vld [vmem:[%s679 + $0x8] sm:$0xff]
  %v682 = vld [vmem:[%s679 + $0x10] sm:$0xff]
  %v683 = vld [vmem:[%s679 + $0x18] sm:$0xff]
  %v684 = vld [vmem:[%s679 + $0x20] sm:$0xff]
  %v685 = vld [vmem:[%s679 + $0x28] sm:$0xff]
  %v686 = vld [vmem:[%s679 + $0x30] sm:$0xff]
  %v687 = vld [vmem:[%s679 + $0x38] sm:$0xff]
  %v688 = vld [vmem:[%s679 + $0x40] sm:$0xff]
  %v689 = vld [vmem:[%s679 + $0x48] sm:$0xff]
  %v690 = vld [vmem:[%s679 + $0x50] sm:$0xff]
  %v691 = vld [vmem:[%s679 + $0x58] sm:$0xff]
  %v692 = vld [vmem:[%s679 + $0x60] sm:$0xff]
  %v693 = vld [vmem:[%s679 + $0x68] sm:$0xff]
  %v708 = vunpack.c.l.b16 %v680
  %v709 = vunpack.c.h.b16 %v680
  %v710 = vunpack.c.l.b16 %v681
  %v711 = vunpack.c.h.b16 %v681
  %v712 = vunpack.c.l.b16 %v682
  %v713 = vunpack.c.h.b16 %v682
  %v714 = vunpack.c.l.b16 %v683
  %v715 = vunpack.c.h.b16 %v683
  %v716 = vunpack.c.l.b16 %v684
  %v717 = vunpack.c.h.b16 %v684
  %v718 = vunpack.c.l.b16 %v685
  %v719 = vunpack.c.h.b16 %v685
  %v720 = vunpack.c.l.b16 %v686
  %v721 = vunpack.c.h.b16 %v686
  %v722 = vunpack.c.l.b16 %v687
  %v723 = vunpack.c.h.b16 %v687
  %v724 = vunpack.c.l.b16 %v688
  %v725 = vunpack.c.h.b16 %v688
  %v726 = vunpack.c.l.b16 %v689
  %v727 = vunpack.c.h.b16 %v689
  %v728 = vunpack.c.l.b16 %v690
  %v729 = vunpack.c.h.b16 %v690
  %v730 = vunpack.c.l.b16 %v691
  %v731 = vunpack.c.h.b16 %v691
  %v732 = vunpack.c.l.b16 %v692
  %v733 = vunpack.c.h.b16 %v692
  %v734 = vunpack.c.l.b16 %v693
  %v735 = vunpack.c.h.b16 %v693
  %v736 = vpack.c.b16 %v710, %v708
  %v737 = vpack.c.b16 %v711, %v709
  %v738 = vpack.c.b16 %v714, %v712
  %v739 = vpack.c.b16 %v715, %v713
  %v740 = vpack.c.b16 %v718, %v716
  %v741 = vpack.c.b16 %v719, %v717
  %v742 = vpack.c.b16 %v722, %v720
  %v743 = vpack.c.b16 %v723, %v721
  %v744 = vpack.c.b16 %v726, %v724
  %v745 = vpack.c.b16 %v727, %v725
  %v746 = vpack.c.b16 %v730, %v728
  %v747 = vpack.c.b16 %v731, %v729
  %v748 = vpack.c.b16 %v734, %v732
  %v749 = vpack.c.b16 %v735, %v733
  %v758 = vsel %vm164, %v737, 0
  %v761 = vsel %vm164, %v739, 0
  %v764 = vsel %vm164, %v741, 0
  %v767 = vsel %vm164, %v743, 0
  %v770 = vsel %vm164, %v745, 0
  %v773 = vsel %vm164, %v747, 0
  %v776 = vsel %vm164, %v749, 0
  %778 = vmatprep.subr.bf16.mxu0 0
  %779 = vmatpush1.bf16.msra.mxu0 %v146
  %780 = vmatprep.subr.bf16.mxu0 0
  %781 = vmatpush1.bf16.msra.mxu0 %v147
  %782 = vmatprep.subr.bf16.mxu0 0
  %783 = vmatpush1.bf16.msra.mxu0 %v148
  %784 = vmatprep.subr.bf16.mxu0 0
  %785 = vmatpush1.bf16.msra.mxu0 %v149
  %786 = vmatprep.subr.bf16.mxu0 0
  %787 = vmatpush1.bf16.msra.mxu0 %v150
  %788 = vmatprep.subr.bf16.mxu0 0
  %789 = vmatpush1.bf16.msra.mxu0 %v151
  %790 = vmatprep.subr.bf16.mxu0 0
  %791 = vmatpush1.bf16.msra.mxu0 %v152
  %792 = vmatprep.subr.bf16.mxu0 0
  %793 = vmatpush1.bf16.msra.mxu0 %v153
  %794 = vmatprep.subr.bf16.mxu0 0
  %795 = vmatpush1.bf16.msra.mxu0 %v154
  %796 = vmatprep.subr.bf16.mxu0 0
  %797 = vmatpush1.bf16.msra.mxu0 0
  %798 = vmatprep.subr.bf16.mxu0 0
  %799 = vmatpush1.bf16.msra.mxu0 0
  %800 = vmatprep.subr.bf16.mxu0 0
  %801 = vmatpush1.bf16.msra.mxu0 0
  %802 = vmatprep.subr.bf16.mxu0 0
  %803 = vmatpush1.bf16.msra.mxu0 0
  %804 = vmatprep.subr.bf16.mxu0 0
  %805 = vmatpush1.bf16.msra.mxu0 0
  %806 = vmatprep.subr.bf16.mxu0 0
  %807 = vmatpush1.bf16.msra.mxu0 0
  %808 = vmatprep.subr.bf16.mxu0 0
  %809 = vmatpush1.bf16.msra.mxu0 0
  %810 = vmatprep.mubr.bf16.mxu0 %v758
  %811 = vmatmul.mubr.bf16.gmra.mrb[0].mxu0 %v736
  %v812 = vpop.f32.mrb[0].mxu0
  %v813 = vadd.f32 0.0, %v812
  %v814 = vpop.f32.mrb[0].mxu0
  %v815 = vpop.f32.mrb[0].mxu0
  %v816 = vadd.f32 0.0, %v815
  %v817 = vpop.f32.mrb[0].mxu0
  %818 = vmatprep.mubr.bf16.mxu0 %v761
  %819 = vmatmul.mubr.bf16.gmra.mrb[0].mxu0 %v738
  %v820 = vpop.f32.mrb[0].mxu0
  %v821 = vadd.f32 0.0, %v820
  %v822 = vpop.f32.mrb[0].mxu0
  %v823 = vpop.f32.mrb[0].mxu0
  %v824 = vadd.f32 0.0, %v823
  %v825 = vpop.f32.mrb[0].mxu0
  %826 = vmatprep.mubr.bf16.mxu0 %v764
  %827 = vmatmul.mubr.bf16.gmra.mrb[0].mxu0 %v740
  %v828 = vpop.f32.mrb[0].mxu0
  %v829 = vadd.f32 0.0, %v828
  %v830 = vpop.f32.mrb[0].mxu0
  %v831 = vpop.f32.mrb[0].mxu0
  %v832 = vadd.f32 0.0, %v831
  %v833 = vpop.f32.mrb[0].mxu0
  %834 = vmatprep.mubr.bf16.mxu0 %v767
  %835 = vmatmul.mubr.bf16.gmra.mrb[0].mxu0 %v742
  %v836 = vpop.f32.mrb[0].mxu0
  %v837 = vadd.f32 0.0, %v836
  %v838 = vpop.f32.mrb[0].mxu0
  %v839 = vpop.f32.mrb[0].mxu0
  %v840 = vadd.f32 0.0, %v839
  %v841 = vpop.f32.mrb[0].mxu0
  %842 = vmatprep.mubr.bf16.mxu0 %v770
  %843 = vmatmul.mubr.bf16.gmra.mrb[0].mxu0 %v744
  %v844 = vpop.f32.mrb[0].mxu0
  %v845 = vadd.f32 0.0, %v844
  %v846 = vpop.f32.mrb[0].mxu0
  %v847 = vpop.f32.mrb[0].mxu0
  %v848 = vadd.f32 0.0, %v847
  %v849 = vpop.f32.mrb[0].mxu0
  %850 = vmatprep.mubr.bf16.mxu0 %v773
  %851 = vmatmul.mubr.bf16.gmra.mrb[0].mxu0 %v746
  %v852 = vpop.f32.mrb[0].mxu0
  %v853 = vadd.f32 0.0, %v852
  %v854 = vpop.f32.mrb[0].mxu0
  %v855 = vpop.f32.mrb[0].mxu0
  %v856 = vadd.f32 0.0, %v855
  %v857 = vpop.f32.mrb[0].mxu0
  %858 = vmatprep.mubr.bf16.mxu0 %v776
  %859 = vmatmul.mubr.bf16.gmra.mrb[0].mxu0 %v748
  %v860 = vpop.f32.mrb[0].mxu0
  %v861 = vadd.f32 0.0, %v860
  %v862 = vpop.f32.mrb[0].mxu0
  %v863 = vpop.f32.mrb[0].mxu0
  %v864 = vadd.f32 0.0, %v863
  %v865 = vpop.f32.mrb[0].mxu0
  %866 = vdwg.mxu0
  %v867 = vmax.f32 %v665, %v813
  %v868 = vmax.f32 %v666, %v816
  %v869 = vmax.f32 %v667, %v821
  %v870 = vmax.f32 %v668, %v824
  %v871 = vmax.f32 %v669, %v829
  %v872 = vmax.f32 %v670, %v832
  %v873 = vmax.f32 %v671, %v837
  %v874 = vmax.f32 %v672, %v840
  %v875 = vmax.f32 %v673, %v845
  %v876 = vmax.f32 %v674, %v848
  %v877 = vmax.f32 %v675, %v853
  %v878 = vmax.f32 %v676, %v856
  %v879 = vmax.f32 %v677, %v861
  %v880 = vmax.f32 %v678, %v864
  %v881 = vld [vmem:[%s2] sm:$0x1]
  %v883 = vlaneseq
  %v884 = vshrl.u32 %v883, 7
  %v885 = vsub.s32 0, %v884
  %v886 = vrot.slane %v881, %v885
  %v888 = vadd.f32 %v867, %v886
  %v889 = vadd.f32 %v868, %v886
  %v890 = vadd.f32 %v869, %v886
  %v891 = vadd.f32 %v870, %v886
  %v892 = vadd.f32 %v871, %v886
  %v893 = vadd.f32 %v872, %v886
  %v894 = vadd.f32 %v873, %v886
  %v895 = vadd.f32 %v874, %v886
  %v896 = vadd.f32 %v875, %v886
  %v897 = vadd.f32 %v876, %v886
  %v898 = vadd.f32 %v877, %v886
  %v899 = vadd.f32 %v878, %v886
  %v900 = vadd.f32 %v879, %v886
  %v901 = vadd.f32 %v880, %v886
  %v902 = vmax.f32 %v888, 0.0
  %v903 = vmax.f32 %v889, 0.0
  %v904 = vmax.f32 %v890, 0.0
  %v905 = vmax.f32 %v891, 0.0
  %v906 = vmax.f32 %v892, 0.0
  %v907 = vmax.f32 %v893, 0.0
  %v908 = vmax.f32 %v894, 0.0
  %v909 = vmax.f32 %v895, 0.0
  %v910 = vmax.f32 %v896, 0.0
  %v911 = vmax.f32 %v897, 0.0
  %v912 = vmax.f32 %v898, 0.0
  %v913 = vmax.f32 %v899, 0.0
  %v914 = vmax.f32 %v900, 0.0
  %v915 = vmax.f32 %v901, 0.0
  %v916 = vpack.c.bf16 %v903, %v902
  %v917 = vpack.c.bf16 %v905, %v904
  %v918 = vpack.c.bf16 %v907, %v906
  %v919 = vpack.c.bf16 %v909, %v908
  %v920 = vpack.c.bf16 %v911, %v910
  %v921 = vpack.c.bf16 %v913, %v912
  %v922 = vpack.c.bf16 %v915, %v914
  %v930 = vunpack.c.l.b16 %v916
  %v931 = vunpack.c.h.b16 %v916
  %v932 = vunpack.c.l.b16 %v917
  %v933 = vunpack.c.h.b16 %v917
  %v934 = vunpack.c.l.b16 %v918
  %v935 = vunpack.c.h.b16 %v918
  %v936 = vunpack.c.l.b16 %v919
  %v937 = vunpack.c.h.b16 %v919
  %v938 = vunpack.c.l.b16 %v920
  %v939 = vunpack.c.h.b16 %v920
  %v940 = vunpack.c.l.b16 %v921
  %v941 = vunpack.c.h.b16 %v921
  %v942 = vunpack.c.l.b16 %v922
  %v943 = vunpack.c.h.b16 %v922
  %v944 = vpack.c.b16 %v930, %v930
  %v945 = vpack.c.b16 %v931, %v931
  %v946 = vpack.c.b16 %v932, %v932
  %v947 = vpack.c.b16 %v933, %v933
  %v948 = vpack.c.b16 %v934, %v934
  %v949 = vpack.c.b16 %v935, %v935
  %v950 = vpack.c.b16 %v936, %v936
  %v951 = vpack.c.b16 %v937, %v937
  %v952 = vpack.c.b16 %v938, %v938
  %v953 = vpack.c.b16 %v939, %v939
  %v954 = vpack.c.b16 %v940, %v940
  %v955 = vpack.c.b16 %v941, %v941
  %v956 = vpack.c.b16 %v942, %v942
  %v957 = vpack.c.b16 %v943, %v943
  %vm972 = vcmask 257024
  %973 = vst.msk [vmem:[%s3] sm:$0xf] %vm972, %v944
  %974 = vst.msk [vmem:[%s3 + $0x4] sm:$0xf] %vm972, %v945
  %975 = vst.msk [vmem:[%s3 + $0x8] sm:$0xf] %vm972, %v946
  %976 = vst.msk [vmem:[%s3 + $0xc] sm:$0xf] %vm972, %v947
  %977 = vst.msk [vmem:[%s3 + $0x10] sm:$0xf] %vm972, %v948
  %978 = vst.msk [vmem:[%s3 + $0x14] sm:$0xf] %vm972, %v949
  %979 = vst.msk [vmem:[%s3 + $0x18] sm:$0xf] %vm972, %v950
  %980 = vst.msk [vmem:[%s3 + $0x1c] sm:$0xf] %vm972, %v951
  %981 = vst.msk [vmem:[%s3 + $0x20] sm:$0xf] %vm972, %v952
  %982 = vst.msk [vmem:[%s3 + $0x24] sm:$0xf] %vm972, %v953
  %983 = vst.msk [vmem:[%s3 + $0x28] sm:$0xf] %vm972, %v954
  %984 = vst.msk [vmem:[%s3 + $0x2c] sm:$0xf] %vm972, %v955
  %985 = vst.msk [vmem:[%s3 + $0x30] sm:$0xf] %vm972, %v956
  %986 = vst.msk [vmem:[%s3 + $0x34] sm:$0xf] %vm972, %v957
  // Predicated region
  $region14: #{light_cnn_forward.4} parent=0 // pred_check
    _
  $region15: #{light_cnn_forward.4} parent=0 // pred_check_branch
    %988 = sbr.rel (0) target = $region17
  $region16: #{light_cnn_forward.4} parent=0 // pred_region
    _
  $region17: #{light_cnn_forward.4} parent=0 // pred_fallthru
    _
  // Predicated region
  $region18: #{light_cnn_forward.4} parent=0 // pred_check
    _
  $region19: #{light_cnn_forward.4} parent=0 // pred_check_branch
    %990 = sbr.rel (0) target = $region21
  $region20: #{light_cnn_forward.4} parent=0 // pred_region
    _
  $region21: #{light_cnn_forward.4} parent=0 // pred_fallthru
    _

// kernel: light_cnn_forward.5
$region0: #{light_cnn_forward.5}
  #allocation0 [shape = 'u32[]', space=smem, size = 0x4, offset = 0x4, fixed_abs, tag = 'smem constant byte address 0x4 - core index']
  #allocation1 [shape = 'u32[144,128]{1,0:T(1,128)}', space=vmem, size = 0x12000, scoped, tag = 'internal scratch']
  %s0 = inlined_call_operand.vmem [shape: bf16[16,1568], index: 0, kind: input, shape index: {}]
  %s1 = inlined_call_operand.vmem [shape: bf16[1568,128], index: 1, kind: input, shape index: {}]
  %s2 = inlined_call_operand.vmem [shape: f32[1,128], index: 2, kind: input, shape index: {}]
  %s3 = inlined_call_operand.vmem [shape: bf16[128,10], index: 3, kind: input, shape index: {}]
  %s4 = inlined_call_operand.vmem [shape: f32[1,10], index: 4, kind: input, shape index: {}]
  %s5 = inlined_call_operand.vmem [shape: f32[16,10], index: 5, kind: output, shape index: {}]
  %s6 = sld [smem:[#allocation0]]
  $region30: #{light_cnn_forward.5} parent=0
    _
  %s8 = ssub.s32 1, %s6
  %s9 = scalar_select 0, %s8, %s6
  // Predicated region
  $region2: #{light_cnn_forward.5} parent=0 // pred_check
    _
  $region3: #{light_cnn_forward.5} parent=0 // pred_check_branch
    %11 = sbr.rel (0) target = $region5
  $region4: #{light_cnn_forward.5} parent=0 // pred_region
    _
  $region5: #{light_cnn_forward.5} parent=0 // pred_fallthru
    _
  // Predicated region
  $region6: #{light_cnn_forward.5} parent=0 // pred_check
    _
  $region7: #{light_cnn_forward.5} parent=0 // pred_check_branch
    %13 = sbr.rel (0) target = $region9
  $region8: #{light_cnn_forward.5} parent=0 // pred_region
    _
  $region9: #{light_cnn_forward.5} parent=0 // pred_fallthru
    _
  // Predicated region
  $region10: #{light_cnn_forward.5} parent=0 // pred_check
    _
  $region11: #{light_cnn_forward.5} parent=0 // pred_check_branch
    %15 = sbr.rel (0) target = $region13
  $region12: #{light_cnn_forward.5} parent=0 // pred_region
    _
  $region13: #{light_cnn_forward.5} parent=0 // pred_fallthru
    _
  // Predicated region
  $region14: #{light_cnn_forward.5} parent=0 // pred_check
    _
  $region15: #{light_cnn_forward.5} parent=0 // pred_check_branch
    %17 = sbr.rel (0) target = $region17
  $region16: #{light_cnn_forward.5} parent=0 // pred_region
    _
  $region17: #{light_cnn_forward.5} parent=0 // pred_fallthru
    _
  // Predicated region
  $region18: #{light_cnn_forward.5} parent=0 // pred_check
    _
  $region19: #{light_cnn_forward.5} parent=0 // pred_check_branch
    %19 = sbr.rel (0) target = $region21
  $region20: #{light_cnn_forward.5} parent=0 // pred_region
    _
  $region21: #{light_cnn_forward.5} parent=0 // pred_fallthru
    _
  %v21 = vld [vmem:[%s0] sm:$0xff]
  %v22 = vld [vmem:[%s0 + $0x8] sm:$0xff]
  %v23 = vld [vmem:[%s0 + $0x10] sm:$0xff]
  %v24 = vld [vmem:[%s0 + $0x18] sm:$0xff]
  %v25 = vld [vmem:[%s0 + $0x20] sm:$0xff]
  %v26 = vld [vmem:[%s0 + $0x28] sm:$0xff]
  %v27 = vld [vmem:[%s0 + $0x30] sm:$0xf]
  %v28 = vld [vmem:[%s0 + $0x34] sm:$0xff]
  %v29 = vld [vmem:[%s0 + $0x3c] sm:$0xff]
  %v30 = vld [vmem:[%s0 + $0x44] sm:$0xff]
  %v31 = vld [vmem:[%s0 + $0x4c] sm:$0xff]
  %v32 = vld [vmem:[%s0 + $0x54] sm:$0xff]
  %v33 = vld [vmem:[%s0 + $0x5c] sm:$0xff]
  %v34 = vld [vmem:[%s0 + $0x64] sm:$0xf]
  %v35 = vld [vmem:[%s1] sm:$0xf]
  %v36 = vld [vmem:[%s1 + $0x4] sm:$0xf]
  %v37 = vld [vmem:[%s1 + $0x8] sm:$0xf]
  %v38 = vld [vmem:[%s1 + $0xc] sm:$0xf]
  %v39 = vld [vmem:[%s1 + $0x10] sm:$0xf]
  %v40 = vld [vmem:[%s1 + $0x14] sm:$0xf]
  %v41 = vld [vmem:[%s1 + $0x18] sm:$0xf]
  %v42 = vld [vmem:[%s1 + $0x1c] sm:$0xf]
  %v43 = vld [vmem:[%s1 + $0x20] sm:$0xf]
  %v44 = vld [vmem:[%s1 + $0x24] sm:$0xf]
  %v45 = vld [vmem:[%s1 + $0x28] sm:$0xf]
  %v46 = vld [vmem:[%s1 + $0x2c] sm:$0xf]
  %v47 = vld [vmem:[%s1 + $0x30] sm:$0xf]
  %v48 = vld [vmem:[%s1 + $0x34] sm:$0xf]
  %v49 = vld [vmem:[%s1 + $0x38] sm:$0xf]
  %v50 = vld [vmem:[%s1 + $0x3c] sm:$0xf]
  %v51 = vld [vmem:[%s1 + $0x40] sm:$0xf]
  %v52 = vld [vmem:[%s1 + $0x44] sm:$0xf]
  %v53 = vld [vmem:[%s1 + $0x48] sm:$0xf]
  %v54 = vld [vmem:[%s1 + $0x4c] sm:$0xf]
  %v55 = vld [vmem:[%s1 + $0x50] sm:$0xf]
  %v56 = vld [vmem:[%s1 + $0x54] sm:$0xf]
  %v57 = vld [vmem:[%s1 + $0x58] sm:$0xf]
  %v58 = vld [vmem:[%s1 + $0x5c] sm:$0xf]
  %v59 = vld [vmem:[%s1 + $0x60] sm:$0xf]
  %v60 = vld [vmem:[%s1 + $0x64] sm:$0xf]
  %v61 = vld [vmem:[%s1 + $0x68] sm:$0xf]
  %v62 = vld [vmem:[%s1 + $0x6c] sm:$0xf]
  %v63 = vld [vmem:[%s1 + $0x70] sm:$0xf]
  %v64 = vld [vmem:[%s1 + $0x74] sm:$0xf]
  %v65 = vld [vmem:[%s1 + $0x78] sm:$0xf]
  %v66 = vld [vmem:[%s1 + $0x7c] sm:$0xf]
  %v67 = vld [vmem:[%s1 + $0x80] sm:$0xf]
  %v68 = vld [vmem:[%s1 + $0x84] sm:$0xf]
  %v69 = vld [vmem:[%s1 + $0x88] sm:$0xf]
  %v70 = vld [vmem:[%s1 + $0x8c] sm:$0xf]
  %v71 = vld [vmem:[%s1 + $0x90] sm:$0xf]
  %v72 = vld [vmem:[%s1 + $0x94] sm:$0xf]
  %v73 = vld [vmem:[%s1 + $0x98] sm:$0xf]
  %v74 = vld [vmem:[%s1 + $0x9c] sm:$0xf]
  %v75 = vld [vmem:[%s1 + $0xa0] sm:$0xf]
  %v76 = vld [vmem:[%s1 + $0xa4] sm:$0xf]
  %v77 = vld [vmem:[%s1 + $0xa8] sm:$0xf]
  %v78 = vld [vmem:[%s1 + $0xac] sm:$0xf]
  %v79 = vld [vmem:[%s1 + $0xb0] sm:$0xf]
  %v80 = vld [vmem:[%s1 + $0xb4] sm:$0xf]
  %v81 = vld [vmem:[%s1 + $0xb8] sm:$0xf]
  %v82 = vld [vmem:[%s1 + $0xbc] sm:$0xf]
  %v83 = vld [vmem:[%s1 + $0xc0] sm:$0xf]
  %v84 = vld [vmem:[%s1 + $0xc4] sm:$0xf]
  %v85 = vld [vmem:[%s1 + $0xc8] sm:$0xf]
  %v86 = vld [vmem:[%s1 + $0xcc] sm:$0xf]
  %v87 = vld [vmem:[%s1 + $0xd0] sm:$0xf]
  %v88 = vld [vmem:[%s1 + $0xd4] sm:$0xf]
  %v89 = vld [vmem:[%s1 + $0xd8] sm:$0xf]
  %v90 = vld [vmem:[%s1 + $0xdc] sm:$0xf]
  %v91 = vld [vmem:[%s1 + $0xe0] sm:$0xf]
  %v92 = vld [vmem:[%s1 + $0xe4] sm:$0xf]
  %v93 = vld [vmem:[%s1 + $0xe8] sm:$0xf]
  %v94 = vld [vmem:[%s1 + $0xec] sm:$0xf]
  %v95 = vld [vmem:[%s1 + $0xf0] sm:$0xf]
  %v96 = vld [vmem:[%s1 + $0xf4] sm:$0xf]
  %v97 = vld [vmem:[%s1 + $0xf8] sm:$0xf]
  %v98 = vld [vmem:[%s1 + $0xfc] sm:$0xf]
  %v99 = vld [vmem:[%s1 + $0x100] sm:$0xf]
  %v100 = vld [vmem:[%s1 + $0x104] sm:$0xf]
  %v101 = vld [vmem:[%s1 + $0x108] sm:$0xf]
  %v102 = vld [vmem:[%s1 + $0x10c] sm:$0xf]
  %v103 = vld [vmem:[%s1 + $0x110] sm:$0xf]
  %v104 = vld [vmem:[%s1 + $0x114] sm:$0xf]
  %v105 = vld [vmem:[%s1 + $0x118] sm:$0xf]
  %v106 = vld [vmem:[%s1 + $0x11c] sm:$0xf]
  %v107 = vld [vmem:[%s1 + $0x120] sm:$0xf]
  %v108 = vld [vmem:[%s1 + $0x124] sm:$0xf]
  %v109 = vld [vmem:[%s1 + $0x128] sm:$0xf]
  %v110 = vld [vmem:[%s1 + $0x12c] sm:$0xf]
  %v111 = vld [vmem:[%s1 + $0x130] sm:$0xf]
  %v112 = vld [vmem:[%s1 + $0x134] sm:$0xf]
  %v113 = vld [vmem:[%s1 + $0x138] sm:$0xf]
  %v114 = vld [vmem:[%s1 + $0x13c] sm:$0xf]
  %v115 = vld [vmem:[%s1 + $0x140] sm:$0xf]
  %v116 = vld [vmem:[%s1 + $0x144] sm:$0xf]
  %v117 = vld [vmem:[%s1 + $0x148] sm:$0xf]
  %v118 = vld [vmem:[%s1 + $0x14c] sm:$0xf]
  %v119 = vld [vmem:[%s1 + $0x150] sm:$0xf]
  %v120 = vld [vmem:[%s1 + $0x154] sm:$0xf]
  %v121 = vld [vmem:[%s1 + $0x158] sm:$0xf]
  %v122 = vld [vmem:[%s1 + $0x15c] sm:$0xf]
  %v123 = vld [vmem:[%s1 + $0x160] sm:$0xf]
  %v124 = vld [vmem:[%s1 + $0x164] sm:$0xf]
  %v125 = vld [vmem:[%s1 + $0x168] sm:$0xf]
  %v126 = vld [vmem:[%s1 + $0x16c] sm:$0xf]
  %v127 = vld [vmem:[%s1 + $0x170] sm:$0xf]
  %v128 = vld [vmem:[%s1 + $0x174] sm:$0xf]
  %v129 = vld [vmem:[%s1 + $0x178] sm:$0xf]
  %v130 = vld [vmem:[%s1 + $0x17c] sm:$0xf]
  %v131 = vld [vmem:[%s1 + $0x180] sm:$0xf]
  %v132 = vld [vmem:[%s1 + $0x184] sm:$0xf]
  %v133 = vld [vmem:[%s1 + $0x188] sm:$0xf]
  %v134 = vld [vmem:[%s1 + $0x18c] sm:$0xf]
  %v135 = vld [vmem:[%s1 + $0x190] sm:$0xf]
  %v136 = vld [vmem:[%s1 + $0x194] sm:$0xf]
  %v137 = vld [vmem:[%s1 + $0x198] sm:$0xf]
  %v138 = vld [vmem:[%s1 + $0x19c] sm:$0xf]
  %v139 = vld [vmem:[%s1 + $0x1a0] sm:$0xf]
  %v140 = vld [vmem:[%s1 + $0x1a4] sm:$0xf]
  %v141 = vld [vmem:[%s1 + $0x1a8] sm:$0xf]
  %v142 = vld [vmem:[%s1 + $0x1ac] sm:$0xf]
  %v143 = vld [vmem:[%s1 + $0x1b0] sm:$0xf]
  %v144 = vld [vmem:[%s1 + $0x1b4] sm:$0xf]
  %v145 = vld [vmem:[%s1 + $0x1b8] sm:$0xf]
  %v146 = vld [vmem:[%s1 + $0x1bc] sm:$0xf]
  %v147 = vld [vmem:[%s1 + $0x1c0] sm:$0xf]
  %v148 = vld [vmem:[%s1 + $0x1c4] sm:$0xf]
  %v149 = vld [vmem:[%s1 + $0x1c8] sm:$0xf]
  %v150 = vld [vmem:[%s1 + $0x1cc] sm:$0xf]
  %v151 = vld [vmem:[%s1 + $0x1d0] sm:$0xf]
  %v152 = vld [vmem:[%s1 + $0x1d4] sm:$0xf]
  %v153 = vld [vmem:[%s1 + $0x1d8] sm:$0xf]
  %v154 = vld [vmem:[%s1 + $0x1dc] sm:$0xf]
  %v155 = vld [vmem:[%s1 + $0x1e0] sm:$0xf]
  %v156 = vld [vmem:[%s1 + $0x1e4] sm:$0xf]
  %v157 = vld [vmem:[%s1 + $0x1e8] sm:$0xf]
  %v158 = vld [vmem:[%s1 + $0x1ec] sm:$0xf]
  %v159 = vld [vmem:[%s1 + $0x1f0] sm:$0xf]
  %v160 = vld [vmem:[%s1 + $0x1f4] sm:$0xf]
  %v161 = vld [vmem:[%s1 + $0x1f8] sm:$0xf]
  %v162 = vld [vmem:[%s1 + $0x1fc] sm:$0xf]
  %v163 = vld [vmem:[%s1 + $0x200] sm:$0xf]
  %v164 = vld [vmem:[%s1 + $0x204] sm:$0xf]
  %v165 = vld [vmem:[%s1 + $0x208] sm:$0xf]
  %v166 = vld [vmem:[%s1 + $0x20c] sm:$0xf]
  %v167 = vld [vmem:[%s1 + $0x210] sm:$0xf]
  %v168 = vld [vmem:[%s1 + $0x214] sm:$0xf]
  %v169 = vld [vmem:[%s1 + $0x218] sm:$0xf]
  %v170 = vld [vmem:[%s1 + $0x21c] sm:$0xf]
  %v171 = vld [vmem:[%s1 + $0x220] sm:$0xf]
  %v172 = vld [vmem:[%s1 + $0x224] sm:$0xf]
  %v173 = vld [vmem:[%s1 + $0x228] sm:$0xf]
  %v174 = vld [vmem:[%s1 + $0x22c] sm:$0xf]
  %v175 = vld [vmem:[%s1 + $0x230] sm:$0xf]
  %v176 = vld [vmem:[%s1 + $0x234] sm:$0xf]
  %v177 = vld [vmem:[%s1 + $0x238] sm:$0xf]
  %v178 = vld [vmem:[%s1 + $0x23c] sm:$0xf]
  %v179 = vld [vmem:[%s1 + $0x240] sm:$0xf]
  %v180 = vld [vmem:[%s1 + $0x244] sm:$0xf]
  %v181 = vld [vmem:[%s1 + $0x248] sm:$0xf]
  %v182 = vld [vmem:[%s1 + $0x24c] sm:$0xf]
  %v183 = vld [vmem:[%s1 + $0x250] sm:$0xf]
  %v184 = vld [vmem:[%s1 + $0x254] sm:$0xf]
  %v185 = vld [vmem:[%s1 + $0x258] sm:$0xf]
  %v186 = vld [vmem:[%s1 + $0x25c] sm:$0xf]
  %v187 = vld [vmem:[%s1 + $0x260] sm:$0xf]
  %v188 = vld [vmem:[%s1 + $0x264] sm:$0xf]
  %v189 = vld [vmem:[%s1 + $0x268] sm:$0xf]
  %v190 = vld [vmem:[%s1 + $0x26c] sm:$0xf]
  %v191 = vld [vmem:[%s1 + $0x270] sm:$0xf]
  %v192 = vld [vmem:[%s1 + $0x274] sm:$0xf]
  %v193 = vld [vmem:[%s1 + $0x278] sm:$0xf]
  %v194 = vld [vmem:[%s1 + $0x27c] sm:$0xf]
  %v195 = vld [vmem:[%s1 + $0x280] sm:$0xf]
  %v196 = vld [vmem:[%s1 + $0x284] sm:$0xf]
  %v197 = vld [vmem:[%s1 + $0x288] sm:$0xf]
  %v198 = vld [vmem:[%s1 + $0x28c] sm:$0xf]
  %v199 = vld [vmem:[%s1 + $0x290] sm:$0xf]
  %v200 = vld [vmem:[%s1 + $0x294] sm:$0xf]
  %v201 = vld [vmem:[%s1 + $0x298] sm:$0xf]
  %v202 = vld [vmem:[%s1 + $0x29c] sm:$0xf]
  %v203 = vld [vmem:[%s1 + $0x2a0] sm:$0xf]
  %v204 = vld [vmem:[%s1 + $0x2a4] sm:$0xf]
  %v205 = vld [vmem:[%s1 + $0x2a8] sm:$0xf]
  %v206 = vld [vmem:[%s1 + $0x2ac] sm:$0xf]
  %v207 = vld [vmem:[%s1 + $0x2b0] sm:$0xf]
  %v208 = vld [vmem:[%s1 + $0x2b4] sm:$0xf]
  %v209 = vld [vmem:[%s1 + $0x2b8] sm:$0xf]
  %v210 = vld [vmem:[%s1 + $0x2bc] sm:$0xf]
  %v211 = vld [vmem:[%s1 + $0x2c0] sm:$0xf]
  %v212 = vld [vmem:[%s1 + $0x2c4] sm:$0xf]
  %v213 = vld [vmem:[%s1 + $0x2c8] sm:$0xf]
  %v214 = vld [vmem:[%s1 + $0x2cc] sm:$0xf]
  %v215 = vld [vmem:[%s1 + $0x2d0] sm:$0xf]
  %v216 = vld [vmem:[%s1 + $0x2d4] sm:$0xf]
  %v217 = vld [vmem:[%s1 + $0x2d8] sm:$0xf]
  %v218 = vld [vmem:[%s1 + $0x2dc] sm:$0xf]
  %v219 = vld [vmem:[%s1 + $0x2e0] sm:$0xf]
  %v220 = vld [vmem:[%s1 + $0x2e4] sm:$0xf]
  %v221 = vld [vmem:[%s1 + $0x2e8] sm:$0xf]
  %v222 = vld [vmem:[%s1 + $0x2ec] sm:$0xf]
  %v223 = vld [vmem:[%s1 + $0x2f0] sm:$0xf]
  %v224 = vld [vmem:[%s1 + $0x2f4] sm:$0xf]
  %v225 = vld [vmem:[%s1 + $0x2f8] sm:$0xf]
  %v226 = vld [vmem:[%s1 + $0x2fc] sm:$0xf]
  %v227 = vld [vmem:[%s1 + $0x300] sm:$0xf]
  %v228 = vld [vmem:[%s1 + $0x304] sm:$0xf]
  %v229 = vld [vmem:[%s1 + $0x308] sm:$0xf]
  %v230 = vld [vmem:[%s1 + $0x30c] sm:$0xf]
  %v231 = vld [vmem:[%s2] sm:$0x1]
  %v233 = vlaneseq
  %v234 = vshrl.u32 %v233, 7
  %v235 = vsub.s32 0, %v234
  %v236 = vrot.slane %v231, %v235
  %v252 = vunpack.c.l.b16 %v21
  %v253 = vunpack.c.h.b16 %v21
  %v254 = vunpack.c.l.b16 %v22
  %v255 = vunpack.c.h.b16 %v22
  %v256 = vunpack.c.l.b16 %v23
  %v257 = vunpack.c.h.b16 %v23
  %v258 = vunpack.c.l.b16 %v24
  %v259 = vunpack.c.h.b16 %v24
  %v260 = vunpack.c.l.b16 %v25
  %v261 = vunpack.c.h.b16 %v25
  %v262 = vunpack.c.l.b16 %v26
  %v263 = vunpack.c.h.b16 %v26
  %v264 = vunpack.c.l.b16 %v27
  %v265 = vunpack.c.l.b16 %v28
  %v266 = vunpack.c.h.b16 %v28
  %v267 = vunpack.c.l.b16 %v29
  %v268 = vunpack.c.h.b16 %v29
  %v269 = vunpack.c.l.b16 %v30
  %v270 = vunpack.c.h.b16 %v30
  %v271 = vunpack.c.l.b16 %v31
  %v272 = vunpack.c.h.b16 %v31
  %v273 = vunpack.c.l.b16 %v32
  %v274 = vunpack.c.h.b16 %v32
  %v275 = vunpack.c.l.b16 %v33
  %v276 = vunpack.c.h.b16 %v33
  %v277 = vunpack.c.l.b16 %v34
  %v278 = vpack.c.b16 %v265, %v252
  %v279 = vpack.c.b16 %v266, %v253
  %v280 = vpack.c.b16 %v267, %v254
  %v281 = vpack.c.b16 %v268, %v255
  %v282 = vpack.c.b16 %v269, %v256
  %v283 = vpack.c.b16 %v270, %v257
  %v284 = vpack.c.b16 %v271, %v258
  %v285 = vpack.c.b16 %v272, %v259
  %v286 = vpack.c.b16 %v273, %v260
  %v287 = vpack.c.b16 %v274, %v261
  %v288 = vpack.c.b16 %v275, %v262
  %v289 = vpack.c.b16 %v276, %v263
  %v290 = vpack.c.b16 %v277, %v264
  %v499 = vunpack.c.l.b16 %v35
  %v500 = vunpack.c.l.b16 %v36
  %v501 = vunpack.c.l.b16 %v37
  %v502 = vunpack.c.l.b16 %v38
  %v503 = vunpack.c.l.b16 %v39
  %v504 = vunpack.c.l.b16 %v40
  %v505 = vunpack.c.l.b16 %v41
  %v506 = vunpack.c.l.b16 %v42
  %v507 = vunpack.c.l.b16 %v43
  %v508 = vunpack.c.l.b16 %v44
  %v509 = vunpack.c.l.b16 %v45
  %v510 = vunpack.c.l.b16 %v46
  %v511 = vunpack.c.l.b16 %v47
  %v512 = vunpack.c.l.b16 %v48
  %v513 = vunpack.c.l.b16 %v49
  %v514 = vunpack.c.l.b16 %v50
  %v515 = vunpack.c.l.b16 %v51
  %v516 = vunpack.c.l.b16 %v52
  %v517 = vunpack.c.l.b16 %v53
  %v518 = vunpack.c.l.b16 %v54
  %v519 = vunpack.c.l.b16 %v55
  %v520 = vunpack.c.l.b16 %v56
  %v521 = vunpack.c.l.b16 %v57
  %v522 = vunpack.c.l.b16 %v58
  %v523 = vunpack.c.l.b16 %v59
  %v524 = vunpack.c.l.b16 %v60
  %v525 = vunpack.c.l.b16 %v61
  %v526 = vunpack.c.l.b16 %v62
  %v527 = vunpack.c.l.b16 %v63
  %v528 = vunpack.c.l.b16 %v64
  %v529 = vunpack.c.l.b16 %v65
  %v530 = vunpack.c.l.b16 %v66
  %v531 = vunpack.c.l.b16 %v67
  %v532 = vunpack.c.l.b16 %v68
  %v533 = vunpack.c.l.b16 %v69
  %v534 = vunpack.c.l.b16 %v70
  %v535 = vunpack.c.l.b16 %v71
  %v536 = vunpack.c.l.b16 %v72
  %v537 = vunpack.c.l.b16 %v73
  %v538 = vunpack.c.l.b16 %v74
  %v539 = vunpack.c.l.b16 %v75
  %v540 = vunpack.c.l.b16 %v76
  %v541 = vunpack.c.l.b16 %v77
  %v542 = vunpack.c.l.b16 %v78
  %v543 = vunpack.c.l.b16 %v79
  %v544 = vunpack.c.l.b16 %v80
  %v545 = vunpack.c.l.b16 %v81
  %v546 = vunpack.c.l.b16 %v82
  %v547 = vunpack.c.l.b16 %v83
  %v548 = vunpack.c.l.b16 %v84
  %v549 = vunpack.c.l.b16 %v85
  %v550 = vunpack.c.l.b16 %v86
  %v551 = vunpack.c.l.b16 %v87
  %v552 = vunpack.c.l.b16 %v88
  %v553 = vunpack.c.l.b16 %v89
  %v554 = vunpack.c.l.b16 %v90
  %v555 = vunpack.c.l.b16 %v91
  %v556 = vunpack.c.l.b16 %v92
  %v557 = vunpack.c.l.b16 %v93
  %v558 = vunpack.c.l.b16 %v94
  %v559 = vunpack.c.l.b16 %v95
  %v560 = vunpack.c.l.b16 %v96
  %v561 = vunpack.c.l.b16 %v97
  %v562 = vunpack.c.l.b16 %v98
  %v563 = vunpack.c.l.b16 %v99
  %v564 = vunpack.c.l.b16 %v100
  %v565 = vunpack.c.l.b16 %v101
  %v566 = vunpack.c.l.b16 %v102
  %v567 = vunpack.c.l.b16 %v103
  %v568 = vunpack.c.l.b16 %v104
  %v569 = vunpack.c.l.b16 %v105
  %v570 = vunpack.c.l.b16 %v106
  %v571 = vunpack.c.l.b16 %v107
  %v572 = vunpack.c.l.b16 %v108
  %v573 = vunpack.c.l.b16 %v109
  %v574 = vunpack.c.l.b16 %v110
  %v575 = vunpack.c.l.b16 %v111
  %v576 = vunpack.c.l.b16 %v112
  %v577 = vunpack.c.l.b16 %v113
  %v578 = vunpack.c.l.b16 %v114
  %v579 = vunpack.c.l.b16 %v115
  %v580 = vunpack.c.l.b16 %v116
  %v581 = vunpack.c.l.b16 %v117
  %v582 = vunpack.c.l.b16 %v118
  %v583 = vunpack.c.l.b16 %v119
  %v584 = vunpack.c.l.b16 %v120
  %v585 = vunpack.c.l.b16 %v121
  %v586 = vunpack.c.l.b16 %v122
  %v587 = vunpack.c.l.b16 %v123
  %v588 = vunpack.c.l.b16 %v124
  %v589 = vunpack.c.l.b16 %v125
  %v590 = vunpack.c.l.b16 %v126
  %v591 = vunpack.c.l.b16 %v127
  %v592 = vunpack.c.l.b16 %v128
  %v593 = vunpack.c.l.b16 %v129
  %v594 = vunpack.c.l.b16 %v130
  %v595 = vunpack.c.l.b16 %v131
  %v596 = vunpack.c.l.b16 %v132
  %v597 = vunpack.c.l.b16 %v133
  %v598 = vunpack.c.l.b16 %v134
  %v599 = vunpack.c.l.b16 %v135
  %v600 = vunpack.c.l.b16 %v136
  %v601 = vunpack.c.l.b16 %v137
  %v602 = vunpack.c.l.b16 %v138
  %v603 = vunpack.c.l.b16 %v139
  %v604 = vunpack.c.l.b16 %v140
  %v605 = vunpack.c.l.b16 %v141
  %v606 = vunpack.c.l.b16 %v142
  %v607 = vunpack.c.l.b16 %v143
  %v608 = vunpack.c.l.b16 %v144
  %v609 = vunpack.c.l.b16 %v145
  %v610 = vunpack.c.l.b16 %v146
  %v611 = vunpack.c.l.b16 %v147
  %v612 = vunpack.c.l.b16 %v148
  %v613 = vunpack.c.l.b16 %v149
  %v614 = vunpack.c.l.b16 %v150
  %v615 = vunpack.c.l.b16 %v151
  %v616 = vunpack.c.l.b16 %v152
  %v617 = vunpack.c.l.b16 %v153
  %v618 = vunpack.c.l.b16 %v154
  %v619 = vunpack.c.l.b16 %v155
  %v620 = vunpack.c.l.b16 %v156
  %v621 = vunpack.c.l.b16 %v157
  %v622 = vunpack.c.l.b16 %v158
  %v623 = vunpack.c.l.b16 %v159
  %v624 = vunpack.c.l.b16 %v160
  %v625 = vunpack.c.l.b16 %v161
  %v626 = vunpack.c.l.b16 %v162
  %v627 = vunpack.c.l.b16 %v163
  %v628 = vunpack.c.l.b16 %v164
  %v629 = vunpack.c.l.b16 %v165
  %v630 = vunpack.c.l.b16 %v166
  %v631 = vunpack.c.l.b16 %v167
  %v632 = vunpack.c.l.b16 %v168
  %v633 = vunpack.c.l.b16 %v169
  %v634 = vunpack.c.l.b16 %v170
  %v635 = vunpack.c.l.b16 %v171
  %v636 = vunpack.c.l.b16 %v172
  %v637 = vunpack.c.l.b16 %v173
  %v638 = vunpack.c.l.b16 %v174
  %v639 = vunpack.c.l.b16 %v175
  %v640 = vunpack.c.l.b16 %v176
  %v641 = vunpack.c.l.b16 %v177
  %v642 = vunpack.c.l.b16 %v178
  %v643 = vunpack.c.l.b16 %v179
  %v644 = vunpack.c.l.b16 %v180
  %v645 = vunpack.c.l.b16 %v181
  %v646 = vunpack.c.l.b16 %v182
  %v647 = vunpack.c.l.b16 %v183
  %v648 = vunpack.c.l.b16 %v184
  %v649 = vunpack.c.l.b16 %v185
  %v650 = vunpack.c.l.b16 %v186
  %v651 = vunpack.c.l.b16 %v187
  %v652 = vunpack.c.l.b16 %v188
  %v653 = vunpack.c.l.b16 %v189
  %v654 = vunpack.c.l.b16 %v190
  %v655 = vunpack.c.l.b16 %v191
  %v656 = vunpack.c.l.b16 %v192
  %v657 = vunpack.c.l.b16 %v193
  %v658 = vunpack.c.l.b16 %v194
  %v659 = vunpack.c.l.b16 %v195
  %v660 = vunpack.c.l.b16 %v196
  %v661 = vunpack.c.l.b16 %v197
  %v662 = vunpack.c.l.b16 %v198
  %v663 = vunpack.c.l.b16 %v199
  %v664 = vunpack.c.l.b16 %v200
  %v665 = vunpack.c.l.b16 %v201
  %v666 = vunpack.c.l.b16 %v202
  %v667 = vunpack.c.l.b16 %v203
  %v668 = vunpack.c.l.b16 %v204
  %v669 = vunpack.c.l.b16 %v205
  %v670 = vunpack.c.l.b16 %v206
  %v671 = vunpack.c.l.b16 %v207
  %v672 = vunpack.c.l.b16 %v208
  %v673 = vunpack.c.l.b16 %v209
  %v674 = vunpack.c.l.b16 %v210
  %v675 = vunpack.c.l.b16 %v211
  %v676 = vunpack.c.l.b16 %v212
  %v677 = vunpack.c.l.b16 %v213
  %v678 = vunpack.c.l.b16 %v214
  %v679 = vunpack.c.l.b16 %v215
  %v680 = vunpack.c.l.b16 %v216
  %v681 = vunpack.c.l.b16 %v217
  %v682 = vunpack.c.l.b16 %v218
  %v683 = vunpack.c.l.b16 %v219
  %v684 = vunpack.c.l.b16 %v220
  %v685 = vunpack.c.l.b16 %v221
  %v686 = vunpack.c.l.b16 %v222
  %v687 = vunpack.c.l.b16 %v223
  %v688 = vunpack.c.l.b16 %v224
  %v689 = vunpack.c.l.b16 %v225
  %v690 = vunpack.c.l.b16 %v226
  %v691 = vunpack.c.l.b16 %v227
  %v692 = vunpack.c.l.b16 %v228
  %v693 = vunpack.c.l.b16 %v229
  %v694 = vunpack.c.l.b16 %v230
  %v695 = vpack.c.b16 %v500, %v499
  %v696 = vpack.c.b16 %v502, %v501
  %v697 = vpack.c.b16 %v504, %v503
  %v698 = vpack.c.b16 %v506, %v505
  %v699 = vpack.c.b16 %v508, %v507
  %v700 = vpack.c.b16 %v510, %v509
  %v701 = vpack.c.b16 %v512, %v511
  %v702 = vpack.c.b16 %v514, %v513
  %v703 = vpack.c.b16 %v516, %v515
  %v704 = vpack.c.b16 %v518, %v517
  %v705 = vpack.c.b16 %v520, %v519
  %v706 = vpack.c.b16 %v522, %v521
  %v707 = vpack.c.b16 %v524, %v523
  %v708 = vpack.c.b16 %v526, %v525
  %v709 = vpack.c.b16 %v528, %v527
  %v710 = vpack.c.b16 %v530, %v529
  %v711 = vpack.c.b16 %v532, %v531
  %v712 = vpack.c.b16 %v534, %v533
  %v713 = vpack.c.b16 %v536, %v535
  %v714 = vpack.c.b16 %v538, %v537
  %v715 = vpack.c.b16 %v540, %v539
  %v716 = vpack.c.b16 %v542, %v541
  %v717 = vpack.c.b16 %v544, %v543
  %v718 = vpack.c.b16 %v546, %v545
  %v719 = vpack.c.b16 %v548, %v547
  %v720 = vpack.c.b16 %v550, %v549
  %v721 = vpack.c.b16 %v552, %v551
  %v722 = vpack.c.b16 %v554, %v553
  %v723 = vpack.c.b16 %v556, %v555
  %v724 = vpack.c.b16 %v558, %v557
  %v725 = vpack.c.b16 %v560, %v559
  %v726 = vpack.c.b16 %v562, %v561
  %v727 = vpack.c.b16 %v564, %v563
  %v728 = vpack.c.b16 %v566, %v565
  %v729 = vpack.c.b16 %v568, %v567
  %v730 = vpack.c.b16 %v570, %v569
  %v731 = vpack.c.b16 %v572, %v571
  %v732 = vpack.c.b16 %v574, %v573
  %v733 = vpack.c.b16 %v576, %v575
  %v734 = vpack.c.b16 %v578, %v577
  %v735 = vpack.c.b16 %v580, %v579
  %v736 = vpack.c.b16 %v582, %v581
  %v737 = vpack.c.b16 %v584, %v583
  %v738 = vpack.c.b16 %v586, %v585
  %v739 = vpack.c.b16 %v588, %v587
  %v740 = vpack.c.b16 %v590, %v589
  %v741 = vpack.c.b16 %v592, %v591
  %v742 = vpack.c.b16 %v594, %v593
  %v743 = vpack.c.b16 %v596, %v595
  %v744 = vpack.c.b16 %v598, %v597
  %v745 = vpack.c.b16 %v600, %v599
  %v746 = vpack.c.b16 %v602, %v601
  %v747 = vpack.c.b16 %v604, %v603
  %v748 = vpack.c.b16 %v606, %v605
  %v749 = vpack.c.b16 %v608, %v607
  %v750 = vpack.c.b16 %v610, %v609
  %v751 = vpack.c.b16 %v612, %v611
  %v752 = vpack.c.b16 %v614, %v613
  %v753 = vpack.c.b16 %v616, %v615
  %v754 = vpack.c.b16 %v618, %v617
  %v755 = vpack.c.b16 %v620, %v619
  %v756 = vpack.c.b16 %v622, %v621
  %v757 = vpack.c.b16 %v624, %v623
  %v758 = vpack.c.b16 %v626, %v625
  %v759 = vpack.c.b16 %v628, %v627
  %v760 = vpack.c.b16 %v630, %v629
  %v761 = vpack.c.b16 %v632, %v631
  %v762 = vpack.c.b16 %v634, %v633
  %v763 = vpack.c.b16 %v636, %v635
  %v764 = vpack.c.b16 %v638, %v637
  %v765 = vpack.c.b16 %v640, %v639
  %v766 = vpack.c.b16 %v642, %v641
  %v767 = vpack.c.b16 %v644, %v643
  %v768 = vpack.c.b16 %v646, %v645
  %v769 = vpack.c.b16 %v648, %v647
  %v770 = vpack.c.b16 %v650, %v649
  %v771 = vpack.c.b16 %v652, %v651
  %v772 = vpack.c.b16 %v654, %v653
  %v773 = vpack.c.b16 %v656, %v655
  %v774 = vpack.c.b16 %v658, %v657
  %v775 = vpack.c.b16 %v660, %v659
  %v776 = vpack.c.b16 %v662, %v661
  %v777 = vpack.c.b16 %v664, %v663
  %v778 = vpack.c.b16 %v666, %v665
  %v779 = vpack.c.b16 %v668, %v667
  %v780 = vpack.c.b16 %v670, %v669
  %v781 = vpack.c.b16 %v672, %v671
  %v782 = vpack.c.b16 %v674, %v673
  %v783 = vpack.c.b16 %v676, %v675
  %v784 = vpack.c.b16 %v678, %v677
  %v785 = vpack.c.b16 %v680, %v679
  %v786 = vpack.c.b16 %v682, %v681
  %v787 = vpack.c.b16 %v684, %v683
  %v788 = vpack.c.b16 %v686, %v685
  %v789 = vpack.c.b16 %v688, %v687
  %v790 = vpack.c.b16 %v690, %v689
  %v791 = vpack.c.b16 %v692, %v691
  %v792 = vpack.c.b16 %v694, %v693
  %vm891 = vcmask 261120
  %v893 = vsel %vm891, %v290, 0
  %895 = vmatprep.subr.bf16.mxu0 0
  %896 = vmatpush1.bf16.msra.mxu0 %v695
  %897 = vmatprep.subr.bf16.mxu0 0
  %898 = vmatpush1.bf16.msra.mxu0 %v696
  %899 = vmatprep.subr.bf16.mxu0 0
  %900 = vmatpush1.bf16.msra.mxu0 %v697
  %901 = vmatprep.subr.bf16.mxu0 0
  %902 = vmatpush1.bf16.msra.mxu0 %v698
  %903 = vmatprep.subr.bf16.mxu0 0
  %904 = vmatpush1.bf16.msra.mxu0 %v699
  %905 = vmatprep.subr.bf16.mxu0 0
  %906 = vmatpush1.bf16.msra.mxu0 %v700
  %907 = vmatprep.subr.bf16.mxu0 0
  %908 = vmatpush1.bf16.msra.mxu0 %v701
  %909 = vmatprep.subr.bf16.mxu0 0
  %910 = vmatpush1.bf16.msra.mxu0 %v702
  %911 = vmatprep.subr.bf16.mxu0 0
  %912 = vmatpush1.bf16.msra.mxu0 %v703
  %913 = vmatprep.subr.bf16.mxu0 0
  %914 = vmatpush1.bf16.msra.mxu0 %v704
  %915 = vmatprep.subr.bf16.mxu0 0
  %916 = vmatpush1.bf16.msra.mxu0 %v705
  %917 = vmatprep.subr.bf16.mxu0 0
  %918 = vmatpush1.bf16.msra.mxu0 %v706
  %919 = vmatprep.subr.bf16.mxu0 0
  %920 = vmatpush1.bf16.msra.mxu0 %v707
  %921 = vmatprep.subr.bf16.mxu0 0
  %922 = vmatpush1.bf16.msra.mxu0 %v708
  %923 = vmatprep.subr.bf16.mxu0 0
  %924 = vmatpush1.bf16.msra.mxu0 %v709
  %925 = vmatprep.subr.bf16.mxu0 0
  %926 = vmatpush1.bf16.msra.mxu0 %v710
  %927 = vmatprep.mubr.bf16.mxu0 %v279
  %928 = vmatmul.mubr.bf16.gmra.mrb[0].mxu0 %v278
  %v929 = vpop.f32.mrb[0].mxu0
  %v930 = vadd.f32 %v236, %v929
  %v931 = vpop.f32.mrb[0].mxu0
  %v932 = vpop.f32.mrb[0].mxu0
  %v933 = vadd.f32 %v236, %v932
  %v934 = vpop.f32.mrb[0].mxu0
  %935 = vdwg.mxu0
  %936 = vmatprep.subr.bf16.mxu0 0
  %937 = vmatpush1.bf16.msra.mxu0 %v711
  %938 = vmatprep.subr.bf16.mxu0 0
  %939 = vmatpush1.bf16.msra.mxu0 %v712
  %940 = vmatprep.subr.bf16.mxu0 0
  %941 = vmatpush1.bf16.msra.mxu0 %v713
  %942 = vmatprep.subr.bf16.mxu0 0
  %943 = vmatpush1.bf16.msra.mxu0 %v714
  %944 = vmatprep.subr.bf16.mxu0 0
  %945 = vmatpush1.bf16.msra.mxu0 %v715
  %946 = vmatprep.subr.bf16.mxu0 0
  %947 = vmatpush1.bf16.msra.mxu0 %v716
  %948 = vmatprep.subr.bf16.mxu0 0
  %949 = vmatpush1.bf16.msra.mxu0 %v717
  %950 = vmatprep.subr.bf16.mxu0 0
  %951 = vmatpush1.bf16.msra.mxu0 %v718
  %952 = vmatprep.subr.bf16.mxu0 0
  %953 = vmatpush1.bf16.msra.mxu0 %v719
  %954 = vmatprep.subr.bf16.mxu0 0
  %955 = vmatpush1.bf16.msra.mxu0 %v720
  %956 = vmatprep.subr.bf16.mxu0 0
  %957 = vmatpush1.bf16.msra.mxu0 %v721
  %958 = vmatprep.subr.bf16.mxu0 0
  %959 = vmatpush1.bf16.msra.mxu0 %v722
  %960 = vmatprep.subr.bf16.mxu0 0
  %961 = vmatpush1.bf16.msra.mxu0 %v723
  %962 = vmatprep.subr.bf16.mxu0 0
  %963 = vmatpush1.bf16.msra.mxu0 %v724
  %964 = vmatprep.subr.bf16.mxu0 0
  %965 = vmatpush1.bf16.msra.mxu0 %v725
  %966 = vmatprep.subr.bf16.mxu0 0
  %967 = vmatpush1.bf16.msra.mxu0 %v726
  %968 = vmatprep.mubr.bf16.mxu0 %v281
  %969 = vmatmul.mubr.bf16.gmra.mrb[0].mxu0 %v280
  %v970 = vpop.f32.mrb[0].mxu0
  %v971 = vadd.f32 %v930, %v970
  %v972 = vpop.f32.mrb[0].mxu0
  %v973 = vpop.f32.mrb[0].mxu0
  %v974 = vadd.f32 %v933, %v973
  %v975 = vpop.f32.mrb[0].mxu0
  %976 = vdwg.mxu0
  %977 = vmatprep.subr.bf16.mxu0 0
  %978 = vmatpush1.bf16.msra.mxu0 %v727
  %979 = vmatprep.subr.bf16.mxu0 0
  %980 = vmatpush1.bf16.msra.mxu0 %v728
  %981 = vmatprep.subr.bf16.mxu0 0
  %982 = vmatpush1.bf16.msra.mxu0 %v729
  %983 = vmatprep.subr.bf16.mxu0 0
  %984 = vmatpush1.bf16.msra.mxu0 %v730
  %985 = vmatprep.subr.bf16.mxu0 0
  %986 = vmatpush1.bf16.msra.mxu0 %v731
  %987 = vmatprep.subr.bf16.mxu0 0
  %988 = vmatpush1.bf16.msra.mxu0 %v732
  %989 = vmatprep.subr.bf16.mxu0 0
  %990 = vmatpush1.bf16.msra.mxu0 %v733
  %991 = vmatprep.subr.bf16.mxu0 0
  %992 = vmatpush1.bf16.msra.mxu0 %v734
  %993 = vmatprep.subr.bf16.mxu0 0
  %994 = vmatpush1.bf16.msra.mxu0 %v735
  %995 = vmatprep.subr.bf16.mxu0 0
  %996 = vmatpush1.bf16.msra.mxu0 %v736
  %997 = vmatprep.subr.bf16.mxu0 0
  %998 = vmatpush1.bf16.msra.mxu0 %v737
  %999 = vmatprep.subr.bf16.mxu0 0
  %1000 = vmatpush1.bf16.msra.mxu0 %v738
  %1001 = vmatprep.subr.bf16.mxu0 0
  %1002 = vmatpush1.bf16.msra.mxu0 %v739
  %1003 = vmatprep.subr.bf16.mxu0 0
  %1004 = vmatpush1.bf16.msra.mxu0 %v740
  %1005 = vmatprep.subr.bf16.mxu0 0
  %1006 = vmatpush1.bf16.msra.mxu0 %v741
  %1007 = vmatprep.subr.bf16.mxu0 0
  %1008 = vmatpush1.bf16.msra.mxu0 %v742
  %1009 = vmatprep.mubr.bf16.mxu0 %v283
  %1010 = vmatmul.mubr.bf16.gmra.mrb[0].mxu0 %v282
  %v1011 = vpop.f32.mrb[0].mxu0
  %v1012 = vadd.f32 %v971, %v1011
  %v1013 = vpop.f32.mrb[0].mxu0
  %v1014 = vpop.f32.mrb[0].mxu0
  %v1015 = vadd.f32 %v974, %v1014
  %v1016 = vpop.f32.mrb[0].mxu0
  %1017 = vdwg.mxu0
  %1018 = vmatprep.subr.bf16.mxu0 0
  %1019 = vmatpush1.bf16.msra.mxu0 %v743
  %1020 = vmatprep.subr.bf16.mxu0 0
  %1021 = vmatpush1.bf16.msra.mxu0 %v744
  %1022 = vmatprep.subr.bf16.mxu0 0
  %1023 = vmatpush1.bf16.msra.mxu0 %v745
  %1024 = vmatprep.subr.bf16.mxu0 0
  %1025 = vmatpush1.bf16.msra.mxu0 %v746
  %1026 = vmatprep.subr.bf16.mxu0 0
  %1027 = vmatpush1.bf16.msra.mxu0 %v747
  %1028 = vmatprep.subr.bf16.mxu0 0
  %1029 = vmatpush1.bf16.msra.mxu0 %v748
  %1030 = vmatprep.subr.bf16.mxu0 0
  %1031 = vmatpush1.bf16.msra.mxu0 %v749
  %1032 = vmatprep.subr.bf16.mxu0 0
  %1033 = vmatpush1.bf16.msra.mxu0 %v750
  %1034 = vmatprep.subr.bf16.mxu0 0
  %1035 = vmatpush1.bf16.msra.mxu0 %v751
  %1036 = vmatprep.subr.bf16.mxu0 0
  %1037 = vmatpush1.bf16.msra.mxu0 %v752
  %1038 = vmatprep.subr.bf16.mxu0 0
  %1039 = vmatpush1.bf16.msra.mxu0 %v753
  %1040 = vmatprep.subr.bf16.mxu0 0
  %1041 = vmatpush1.bf16.msra.mxu0 %v754
  %1042 = vmatprep.subr.bf16.mxu0 0
  %1043 = vmatpush1.bf16.msra.mxu0 %v755
  %1044 = vmatprep.subr.bf16.mxu0 0
  %1045 = vmatpush1.bf16.msra.mxu0 %v756
  %1046 = vmatprep.subr.bf16.mxu0 0
  %1047 = vmatpush1.bf16.msra.mxu0 %v757
  %1048 = vmatprep.subr.bf16.mxu0 0
  %1049 = vmatpush1.bf16.msra.mxu0 %v758
  %1050 = vmatprep.mubr.bf16.mxu0 %v285
  %1051 = vmatmul.mubr.bf16.gmra.mrb[0].mxu0 %v284
  %v1052 = vpop.f32.mrb[0].mxu0
  %v1053 = vadd.f32 %v1012, %v1052
  %v1054 = vpop.f32.mrb[0].mxu0
  %v1055 = vpop.f32.mrb[0].mxu0
  %v1056 = vadd.f32 %v1015, %v1055
  %v1057 = vpop.f32.mrb[0].mxu0
  %1058 = vdwg.mxu0
  %1059 = vmatprep.subr.bf16.mxu0 0
  %1060 = vmatpush1.bf16.msra.mxu0 %v759
  %1061 = vmatprep.subr.bf16.mxu0 0
  %1062 = vmatpush1.bf16.msra.mxu0 %v760
  %1063 = vmatprep.subr.bf16.mxu0 0
  %1064 = vmatpush1.bf16.msra.mxu0 %v761
  %1065 = vmatprep.subr.bf16.mxu0 0
  %1066 = vmatpush1.bf16.msra.mxu0 %v762
  %1067 = vmatprep.subr.bf16.mxu0 0
  %1068 = vmatpush1.bf16.msra.mxu0 %v763
  %1069 = vmatprep.subr.bf16.mxu0 0
  %1070 = vmatpush1.bf16.msra.mxu0 %v764
  %1071 = vmatprep.subr.bf16.mxu0 0
  %1072 = vmatpush1.bf16.msra.mxu0 %v765
  %1073 = vmatprep.subr.bf16.mxu0 0
  %1074 = vmatpush1.bf16.msra.mxu0 %v766
  %1075 = vmatprep.subr.bf16.mxu0 0
  %1076 = vmatpush1.bf16.msra.mxu0 %v767
  %1077 = vmatprep.subr.bf16.mxu0 0
  %1078 = vmatpush1.bf16.msra.mxu0 %v768
  %1079 = vmatprep.subr.bf16.mxu0 0
  %1080 = vmatpush1.bf16.msra.mxu0 %v769
  %1081 = vmatprep.subr.bf16.mxu0 0
  %1082 = vmatpush1.bf16.msra.mxu0 %v770
  %1083 = vmatprep.subr.bf16.mxu0 0
  %1084 = vmatpush1.bf16.msra.mxu0 %v771
  %1085 = vmatprep.subr.bf16.mxu0 0
  %1086 = vmatpush1.bf16.msra.mxu0 %v772
  %1087 = vmatprep.subr.bf16.mxu0 0
  %1088 = vmatpush1.bf16.msra.mxu0 %v773
  %1089 = vmatprep.subr.bf16.mxu0 0
  %1090 = vmatpush1.bf16.msra.mxu0 %v774
  %1091 = vmatprep.mubr.bf16.mxu0 %v287
  %1092 = vmatmul.mubr.bf16.gmra.mrb[0].mxu0 %v286
  %v1093 = vpop.f32.mrb[0].mxu0
  %v1094 = vadd.f32 %v1053, %v1093
  %v1095 = vpop.f32.mrb[0].mxu0
  %v1096 = vpop.f32.mrb[0].mxu0
  %v1097 = vadd.f32 %v1056, %v1096
  %v1098 = vpop.f32.mrb[0].mxu0
  %1099 = vdwg.mxu0
  %1100 = vmatprep.subr.bf16.mxu0 0
  %1101 = vmatpush1.bf16.msra.mxu0 %v775
  %1102 = vmatprep.subr.bf16.mxu0 0
  %1103 = vmatpush1.bf16.msra.mxu0 %v776
  %1104 = vmatprep.subr.bf16.mxu0 0
  %1105 = vmatpush1.bf16.msra.mxu0 %v777
  %1106 = vmatprep.subr.bf16.mxu0 0
  %1107 = vmatpush1.bf16.msra.mxu0 %v778
  %1108 = vmatprep.subr.bf16.mxu0 0
  %1109 = vmatpush1.bf16.msra.mxu0 %v779
  %1110 = vmatprep.subr.bf16.mxu0 0
  %1111 = vmatpush1.bf16.msra.mxu0 %v780
  %1112 = vmatprep.subr.bf16.mxu0 0
  %1113 = vmatpush1.bf16.msra.mxu0 %v781
  %1114 = vmatprep.subr.bf16.mxu0 0
  %1115 = vmatpush1.bf16.msra.mxu0 %v782
  %1116 = vmatprep.subr.bf16.mxu0 0
  %1117 = vmatpush1.bf16.msra.mxu0 %v783
  %1118 = vmatprep.subr.bf16.mxu0 0
  %1119 = vmatpush1.bf16.msra.mxu0 %v784
  %1120 = vmatprep.subr.bf16.mxu0 0
  %1121 = vmatpush1.bf16.msra.mxu0 %v785
  %1122 = vmatprep.subr.bf16.mxu0 0
  %1123 = vmatpush1.bf16.msra.mxu0 %v786
  %1124 = vmatprep.subr.bf16.mxu0 0
  %1125 = vmatpush1.bf16.msra.mxu0 %v787
  %1126 = vmatprep.subr.bf16.mxu0 0
  %1127 = vmatpush1.bf16.msra.mxu0 %v788
  %1128 = vmatprep.subr.bf16.mxu0 0
  %1129 = vmatpush1.bf16.msra.mxu0 %v789
  %1130 = vmatprep.subr.bf16.mxu0 0
  %1131 = vmatpush1.bf16.msra.mxu0 %v790
  %1132 = vmatprep.mubr.bf16.mxu0 %v289
  %1133 = vmatmul.mubr.bf16.gmra.mrb[0].mxu0 %v288
  %v1134 = vpop.f32.mrb[0].mxu0
  %v1135 = vadd.f32 %v1094, %v1134
  %v1136 = vpop.f32.mrb[0].mxu0
  %v1137 = vpop.f32.mrb[0].mxu0
  %v1138 = vadd.f32 %v1097, %v1137
  %v1139 = vpop.f32.mrb[0].mxu0
  %1140 = vdwg.mxu0
  %1141 = vmatprep.subr.bf16.mxu0 0
  %1142 = vmatpush1.bf16.msra.mxu0 %v791
  %1143 = vmatprep.subr.bf16.mxu0 0
  %1144 = vmatpush1.bf16.msra.mxu0 %v792
  %1145 = vmatprep.subr.bf16.mxu0 0
  %1146 = vmatpush1.bf16.msra.mxu0 0
  %1147 = vmatprep.subr.bf16.mxu0 0
  %1148 = vmatpush1.bf16.msra.mxu0 0
  %1149 = vmatprep.subr.bf16.mxu0 0
  %1150 = vmatpush1.bf16.msra.mxu0 0
  %1151 = vmatprep.subr.bf16.mxu0 0
  %1152 = vmatpush1.bf16.msra.mxu0 0
  %1153 = vmatprep.subr.bf16.mxu0 0
  %1154 = vmatpush1.bf16.msra.mxu0 0
  %1155 = vmatprep.subr.bf16.mxu0 0
  %1156 = vmatpush1.bf16.msra.mxu0 0
  %1157 = vmatprep.subr.bf16.mxu0 0
  %1158 = vmatpush1.bf16.msra.mxu0 0
  %1159 = vmatprep.subr.bf16.mxu0 0
  %1160 = vmatpush1.bf16.msra.mxu0 0
  %1161 = vmatprep.subr.bf16.mxu0 0
  %1162 = vmatpush1.bf16.msra.mxu0 0
  %1163 = vmatprep.subr.bf16.mxu0 0
  %1164 = vmatpush1.bf16.msra.mxu0 0
  %1165 = vmatprep.subr.bf16.mxu0 0
  %1166 = vmatpush1.bf16.msra.mxu0 0
  %1167 = vmatprep.subr.bf16.mxu0 0
  %1168 = vmatpush1.bf16.msra.mxu0 0
  %1169 = vmatprep.subr.bf16.mxu0 0
  %1170 = vmatpush1.bf16.msra.mxu0 0
  %1171 = vmatprep.subr.bf16.mxu0 0
  %1172 = vmatpush1.bf16.msra.mxu0 0
  %1173 = vmatprep.mubr.bf16.mxu0 0
  %1174 = vmatmul.mubr.bf16.gmra.mrb[0].mxu0 %v893
  %v1175 = vpop.f32.mrb[0].mxu0
  %v1176 = vadd.f32 %v1135, %v1175
  %v1177 = vpop.f32.mrb[0].mxu0
  %v1178 = vpop.f32.mrb[0].mxu0
  %v1179 = vadd.f32 %v1138, %v1178
  %v1180 = vpop.f32.mrb[0].mxu0
  %1181 = vdwg.mxu0
  %v1182 = vmax.f32 %v1176, 0.0
  %v1183 = vmax.f32 %v1179, 0.0
  %v1184 = vpack.c.bf16 %v1183, %v1182
  %v1185 = vld [vmem:[%s3] sm:$0xf]
  %v1186 = vld [vmem:[%s3 + $0x4] sm:$0xf]
  %v1187 = vld [vmem:[%s3 + $0x8] sm:$0xf]
  %v1188 = vld [vmem:[%s3 + $0xc] sm:$0xf]
  %v1189 = vld [vmem:[%s3 + $0x10] sm:$0xf]
  %v1190 = vld [vmem:[%s3 + $0x14] sm:$0xf]
  %v1191 = vld [vmem:[%s3 + $0x18] sm:$0xf]
  %v1192 = vld [vmem:[%s3 + $0x1c] sm:$0xf]
  %v1193 = vld [vmem:[%s3 + $0x20] sm:$0xf]
  %v1194 = vld [vmem:[%s3 + $0x24] sm:$0xf]
  %v1195 = vld [vmem:[%s3 + $0x28] sm:$0xf]
  %v1196 = vld [vmem:[%s3 + $0x2c] sm:$0xf]
  %v1197 = vld [vmem:[%s3 + $0x30] sm:$0xf]
  %v1198 = vld [vmem:[%s3 + $0x34] sm:$0xf]
  %v1199 = vld [vmem:[%s3 + $0x38] sm:$0xf]
  %v1200 = vld [vmem:[%s3 + $0x3c] sm:$0xf]
  %v1201 = vld [vmem:[%s4] sm:$0x1]
  %v1203 = vlaneseq
  %v1204 = vshrl.u32 %v1203, 7
  %v1205 = vsub.s32 0, %v1204
  %v1206 = vrot.slane %v1201, %v1205
  %v1224 = vunpack.c.l.b16 %v1185
  %v1225 = vunpack.c.l.b16 %v1186
  %v1226 = vunpack.c.l.b16 %v1187
  %v1227 = vunpack.c.l.b16 %v1188
  %v1228 = vunpack.c.l.b16 %v1189
  %v1229 = vunpack.c.l.b16 %v1190
  %v1230 = vunpack.c.l.b16 %v1191
  %v1231 = vunpack.c.l.b16 %v1192
  %v1232 = vunpack.c.l.b16 %v1193
  %v1233 = vunpack.c.l.b16 %v1194
  %v1234 = vunpack.c.l.b16 %v1195
  %v1235 = vunpack.c.l.b16 %v1196
  %v1236 = vunpack.c.l.b16 %v1197
  %v1237 = vunpack.c.l.b16 %v1198
  %v1238 = vunpack.c.l.b16 %v1199
  %v1239 = vunpack.c.l.b16 %v1200
  %v1240 = vpack.c.b16 %v1225, %v1224
  %v1241 = vpack.c.b16 %v1227, %v1226
  %v1242 = vpack.c.b16 %v1229, %v1228
  %v1243 = vpack.c.b16 %v1231, %v1230
  %v1244 = vpack.c.b16 %v1233, %v1232
  %v1245 = vpack.c.b16 %v1235, %v1234
  %v1246 = vpack.c.b16 %v1237, %v1236
  %v1247 = vpack.c.b16 %v1239, %v1238
  %1256 = vmatprep.subr.bf16.mxu0 0
  %1257 = vmatpush1.bf16.msra.mxu0 %v1240
  %1258 = vmatprep.subr.bf16.mxu0 0
  %1259 = vmatpush1.bf16.msra.mxu0 %v1241
  %1260 = vmatprep.subr.bf16.mxu0 0
  %1261 = vmatpush1.bf16.msra.mxu0 %v1242
  %1262 = vmatprep.subr.bf16.mxu0 0
  %1263 = vmatpush1.bf16.msra.mxu0 %v1243
  %1264 = vmatprep.subr.bf16.mxu0 0
  %1265 = vmatpush1.bf16.msra.mxu0 %v1244
  %1266 = vmatprep.subr.bf16.mxu0 0
  %1267 = vmatpush1.bf16.msra.mxu0 %v1245
  %1268 = vmatprep.subr.bf16.mxu0 0
  %1269 = vmatpush1.bf16.msra.mxu0 %v1246
  %1270 = vmatprep.subr.bf16.mxu0 0
  %1271 = vmatpush1.bf16.msra.mxu0 %v1247
  %1272 = vmatprep.subr.bf16.mxu0 0
  %1273 = vmatpush1.bf16.msra.mxu0 0
  %1274 = vmatprep.subr.bf16.mxu0 0
  %1275 = vmatpush1.bf16.msra.mxu0 0
  %1276 = vmatprep.subr.bf16.mxu0 0
  %1277 = vmatpush1.bf16.msra.mxu0 0
  %1278 = vmatprep.subr.bf16.mxu0 0
  %1279 = vmatpush1.bf16.msra.mxu0 0
  %1280 = vmatprep.subr.bf16.mxu0 0
  %1281 = vmatpush1.bf16.msra.mxu0 0
  %1282 = vmatprep.subr.bf16.mxu0 0
  %1283 = vmatpush1.bf16.msra.mxu0 0
  %1284 = vmatprep.subr.bf16.mxu0 0
  %1285 = vmatpush1.bf16.msra.mxu0 0
  %1286 = vmatprep.subr.bf16.mxu0 0
  %1287 = vmatpush1.bf16.msra.mxu0 0
  %1288 = vmatprep.mubr.bf16.mxu0 0
  %1289 = vmatmul.mubr.bf16.gmra.mrb[0].mxu0 %v1184
  %v1290 = vpop.f32.mrb[0].mxu0
  %v1291 = vadd.f32 %v1206, %v1290
  %v1292 = vpop.f32.mrb[0].mxu0
  %v1293 = vpop.f32.mrb[0].mxu0
  %v1294 = vadd.f32 %v1206, %v1293
  %v1295 = vpop.f32.mrb[0].mxu0
  %1296 = vdwg.mxu0
  %vm1297 = vcmask 80896
  %1298 = vst.msk [vmem:[%s5] sm:$0xff] %vm1297, %v1291
  %1299 = vst.msk [vmem:[%s5 + $0x8] sm:$0xff] %vm1297, %v1294
  // Predicated region
  $region22: #{light_cnn_forward.5} parent=0 // pred_check
    _
  $region23: #{light_cnn_forward.5} parent=0 // pred_check_branch
    %1301 = sbr.rel (0) target = $region25
  $region24: #{light_cnn_forward.5} parent=0 // pred_region
    _
  $region25: #{light_cnn_forward.5} parent=0 // pred_fallthru
    _
  // Predicated region
  $region26: #{light_cnn_forward.5} parent=0 // pred_check
    _
  $region27: #{light_cnn_forward.5} parent=0 // pred_check_branch
    %1303 = sbr.rel (0) target = $region29
  $region28: #{light_cnn_forward.5} parent=0 // pred_region
    _
  $region29: #{light_cnn_forward.5} parent=0 // pred_fallthru
    _

</llo_original>
